<compile_context>
chip_gen: v6e
topology: v6e:2x2x1
jax: 0.10.0
libtpu: 0.0.40
codegen_flags: <defaults>
</compile_context>

<pallas_src>
import functools
import math

import jax
import jax.numpy as jnp
from jax import lax
from jax.experimental import pallas as pl
from jax.experimental.pallas import tpu as pltpu


# ---------------------------------------------------------------------------
# Pallas kernel: one (batch, q-row-tile) step of the full self-attention layer.
# ---------------------------------------------------------------------------
def _self_attn_kernel(*refs, nhead, head_dim, n_pad, tq, ln_eps,
                      has_pe, has_key_bias, has_attn_bias):
    it = iter(refs)
    xbf_ref = next(it)                               # (n_pad, C) bf16  K/V & Q source
    pebf_ref = next(it) if has_pe else None          # (n_pad, C) bf16  positional emb
    xres_ref = next(it)                              # (tq, C)   f32   residual / LN input
    kb_ref = next(it) if has_key_bias else None      # (1, n_pad) f32  key-padding bias
    ab_ref = next(it) if has_attn_bias else None     # (tq, n_pad) f32 attn-mask bias
    wq_ref, wk_ref, wv_ref = next(it), next(it), next(it)   # (C, C) bf16 (pre-transposed)
    bq_ref, bk_ref, bv_ref = next(it), next(it), next(it)   # (1, C) f32
    wo_ref, bo_ref = next(it), next(it)                      # (C, C) bf16, (1, C) f32
    gamma_ref, beta_ref = next(it), next(it)                 # (1, C) f32
    out_ref = next(it)                                       # (tq, C) f32
    k_cache, v_cache, ctx_scr = next(it), next(it), next(it) # scratch

    bf = jnp.bfloat16
    f32 = jnp.float32

    # ---- K/V projections hoisted out of the q-tile axis: once per batch ----
    @pl.when(pl.program_id(1) == 0)
    def _build_kv_cache():
        x_full = xbf_ref[...]                                     # (n_pad, C) bf16
        qk_full = x_full + pebf_ref[...] if has_pe else x_full
        k = jnp.dot(qk_full, wk_ref[...], preferred_element_type=f32) + bk_ref[...]
        v = jnp.dot(x_full, wv_ref[...], preferred_element_type=f32) + bv_ref[...]
        k16 = k.astype(bf)
        v16 = v.astype(bf)
        for h in range(nhead):                                    # split once per batch
            lo = h * head_dim
            k_cache[h] = k16[:, lo:lo + head_dim]                 # (n_pad, Dh)
            v_cache[h] = v16[:, lo:lo + head_dim]

    # ---- Q projection for this q-tile (scale folded in once) ----
    if tq == n_pad:
        x_t = xbf_ref[...]
        q_in = x_t + pebf_ref[...] if has_pe else x_t
    else:
        r0 = pl.multiple_of(pl.program_id(1) * tq, tq)
        x_t = xbf_ref[pl.ds(r0, tq), :]
        q_in = x_t + pebf_ref[pl.ds(r0, tq), :] if has_pe else x_t
    scale = 1.0 / math.sqrt(head_dim)
    q = (jnp.dot(q_in, wq_ref[...], preferred_element_type=f32)
         + bq_ref[...]) * scale                                   # (tq, C) f32

    # ---- additive biases combined once per tile ----
    bias = None
    if has_key_bias:
        bias = kb_ref[...]                                        # (1, n_pad)
    if has_attn_bias:
        ab = ab_ref[...]                                          # (tq, n_pad)
        bias = ab if bias is None else ab + bias

    # ---- per-head attention; heads written into a (tq, C) ctx scratch ----
    # exp stays f32 for v5e portability.  TODO(synk): bf16 exp on v6e/v7x.
    for h in range(nhead):
        lo = h * head_dim
        qh = q[:, lo:lo + head_dim].astype(bf)                    # (tq, Dh)
        kh = k_cache[h]                                           # (n_pad, Dh) bf16
        vh = v_cache[h]                                           # (n_pad, Dh) bf16
        s = lax.dot_general(qh, kh, (((1,), (1,)), ((), ())),
                            preferred_element_type=f32)           # (tq, n_pad)
        if bias is not None:
            s = s + bias
        m = jnp.max(s, axis=-1, keepdims=True)
        p = jnp.exp(s - m)                                        # unnormalized
        l = jnp.sum(p, axis=-1, keepdims=True)
        ctx_h = jnp.dot(p.astype(bf), vh, preferred_element_type=f32)   # (tq, Dh)
        ctx_h = ctx_h * pl.reciprocal(l, approx=True)             # deferred normalization
        ctx_scr[:, lo:lo + head_dim] = ctx_h.astype(bf)

    # ---- single K=256 out-projection + residual (dropout p=0) + LayerNorm ----
    o = jnp.dot(ctx_scr[...], wo_ref[...], preferred_element_type=f32)
    o = o + bo_ref[...] + xres_ref[...]
    mu = jnp.mean(o, axis=-1, keepdims=True)
    var = jnp.mean((o - mu) * (o - mu), axis=-1, keepdims=True)
    y = (o - mu) * lax.rsqrt(var + ln_eps)
    out_ref[...] = (y * gamma_ref[...] + beta_ref[...]).astype(out_ref.dtype)


# ---------------------------------------------------------------------------
# Wrapper: padding / tiling decisions, tiny mask biases, BlockSpecs / grid.
# ---------------------------------------------------------------------------
def _vmem_limit_bytes():
    # 75% of physical VMEM: 96 MiB on v5e/v6e (128 MiB), 48 MiB on v7x (64 MiB).
    try:
        cap = getattr(pltpu.get_tpu_info(), "vmem_capacity_bytes", None)
        if cap:
            return min(int(cap) * 3 // 4, 96 * 1024 * 1024)
    except Exception:
        pass
    return 48 * 1024 * 1024


def self_attention_layer(x, params, x_mask=None, attn_mask=None, pe=None):
    """x: (B, N, C) f32.  x_mask: (B, N) bool (True = padded key).
    attn_mask: (B, N, N) bool (True = disallowed) or float additive.  pe: (B, N, C)."""
    B, N, C = x.shape
    nhead = params["nhead"]
    assert C % nhead == 0
    head_dim = C // nhead

    # q-row tiling; ragged N > 128 is padded to a multiple of 128 and masked.
    if N <= 128:
        tq, n_pad = N, N
    else:
        tq = 128
        n_pad = ((N + 127) // 128) * 128
    nq = n_pad // tq
    pad = n_pad - N

    bf = jnp.bfloat16

    def pad_seq(a):
        return a if pad == 0 else jnp.pad(a, ((0, 0), (0, pad), (0, 0)))

    has_pe = pe is not None
    has_key_bias = (x_mask is not None) or (pad > 0)
    has_attn_bias = attn_mask is not None

    inputs = [pad_seq(x).astype(bf)]                  # bf16 full-sequence x (K/V, Q)
    in_specs = [pl.BlockSpec((None, n_pad, C), lambda b, i: (b, 0, 0))]
    if has_pe:
        inputs.append(pad_seq(pe).astype(bf))         # bf16 full-sequence pe
        in_specs.append(pl.BlockSpec((None, n_pad, C), lambda b, i: (b, 0, 0)))
    inputs.append(pad_seq(x))                         # f32 residual / LayerNorm tiles
    in_specs.append(pl.BlockSpec((None, tq, C), lambda b, i: (b, i, 0)))
    if has_key_bias:
        # tiny (B, 1, n_pad) additive bias; also masks the padded key columns
        kb = (jnp.zeros((B, N), jnp.float32) if x_mask is None
              else jnp.where(x_mask, -1e9, 0.0).astype(jnp.float32))
        if pad > 0:
            kb = jnp.pad(kb, ((0, 0), (0, pad)), constant_values=-1e9)
        inputs.append(kb.reshape(B, 1, n_pad))
        in_specs.append(pl.BlockSpec((None, 1, n_pad), lambda b, i: (b, 0, 0)))
    if has_attn_bias:
        if attn_mask.dtype == jnp.bool_:
            ab = jnp.where(attn_mask, -1e9, 0.0).astype(jnp.float32)
        else:
            ab = attn_mask.astype(jnp.float32)
        if pad > 0:
            ab = jnp.pad(ab, ((0, 0), (0, pad), (0, pad)))
        inputs.append(ab)
        in_specs.append(pl.BlockSpec((None, tq, n_pad), lambda b, i: (b, i, 0)))

    wmat = lambda: pl.BlockSpec((C, C), lambda b, i: (0, 0))
    vrow = lambda: pl.BlockSpec((1, C), lambda b, i: (0, 0))
    inputs += [
        params["wqT"].astype(bf), params["wkT"].astype(bf), params["wvT"].astype(bf),
        params["bq"], params["bk"], params["bv"],
        params["woT"].astype(bf), params["bo"],
        params["gamma"], params["beta"],
    ]
    in_specs += [wmat(), wmat(), wmat(), vrow(), vrow(), vrow(),
                 wmat(), vrow(), vrow(), vrow()]

    kernel = functools.partial(
        _self_attn_kernel, nhead=nhead, head_dim=head_dim, n_pad=n_pad, tq=tq,
        ln_eps=1e-5, has_pe=has_pe, has_key_bias=has_key_bias,
        has_attn_bias=has_attn_bias)

    grid_spec = pltpu.PrefetchScalarGridSpec(
        num_scalar_prefetch=0,
        grid=(B, nq),
        in_specs=in_specs,
        out_specs=pl.BlockSpec((None, tq, C), lambda b, i: (b, i, 0)),
        scratch_shapes=[
            pltpu.VMEM((nhead, n_pad, head_dim), bf),   # K cache (persists per batch)
            pltpu.VMEM((nhead, n_pad, head_dim), bf),   # V cache
            pltpu.VMEM((tq, C), bf),                    # per-tile ctx before out-proj
        ])

    out = pl.pallas_call(
        kernel,
        out_shape=jax.ShapeDtypeStruct((B, n_pad, C), jnp.float32),
        grid_spec=grid_spec,
        compiler_params=pltpu.CompilerParams(
            # axis 1 must be sequential: the K/V caches persist across q tiles.
            dimension_semantics=("parallel", "arbitrary"),
            vmem_limit_bytes=_vmem_limit_bytes()),
    )(*inputs)
    return out if pad == 0 else out[:, :N, :]


# ---------------------------------------------------------------------------
# Pure-JAX f32 reference (mirrors torch.nn.MultiheadAttention + residual + LN).
# ---------------------------------------------------------------------------
def _reference(x, params, x_mask=None, attn_mask=None, pe=None):
    B, N, C = x.shape
    nhead = params["nhead"]
    dh = C // nhead
    qk = x if pe is None else x + pe
    q = qk @ params["wqT"] + params["bq"]
    k = qk @ params["wkT"] + params["bk"]
    v = x @ params["wvT"] + params["bv"]
    q = q.reshape(B, N, nhead, dh).transpose(0, 2, 1, 3)
    k = k.reshape(B, N, nhead, dh).transpose(0, 2, 1, 3)
    v = v.reshape(B, N, nhead, dh).transpose(0, 2, 1, 3)
    s = jnp.einsum("bhnd,bhmd->bhnm", q, k) / math.sqrt(dh)
    if x_mask is not None:
        s = s + jnp.where(x_mask, -1e9, 0.0)[:, None, None, :]
    if attn_mask is not None:
        am = jnp.where(attn_mask, -1e9, 0.0) if attn_mask.dtype == jnp.bool_ else attn_mask
        s = s + am[:, None, :, :]
    p = jax.nn.softmax(s, axis=-1)
    ctx = jnp.einsum("bhnm,bhmd->bhnd", p, v).transpose(0, 2, 1, 3).reshape(B, N, C)
    o = ctx @ params["woT"] + params["bo"]
    o = o + x
    mu = o.mean(-1, keepdims=True)
    var = ((o - mu) ** 2).mean(-1, keepdims=True)
    return (o - mu) / jnp.sqrt(var + 1e-5) * params["gamma"] + params["beta"]


# ---------------------------------------------------------------------------
def make_params(key, d_model, nhead):
    k1, k2, k3, k4 = jax.random.split(key, 4)
    scale = 1.0 / math.sqrt(d_model)
    in_proj_w = jax.random.uniform(k1, (3 * d_model, d_model), jnp.float32, -scale, scale)
    in_proj_b = jax.random.uniform(k2, (3 * d_model,), jnp.float32, -scale, scale)
    out_w = jax.random.uniform(k3, (d_model, d_model), jnp.float32, -scale, scale)
    out_b = jax.random.uniform(k4, (d_model,), jnp.float32, -scale, scale)
    C = d_model
    return {
        "nhead": nhead,
        "wqT": in_proj_w[0 * C:1 * C].T,
        "wkT": in_proj_w[1 * C:2 * C].T,
        "wvT": in_proj_w[2 * C:3 * C].T,
        "bq": in_proj_b[0 * C:1 * C].reshape(1, C),
        "bk": in_proj_b[1 * C:2 * C].reshape(1, C),
        "bv": in_proj_b[2 * C:3 * C].reshape(1, C),
        "woT": out_w.T,
        "bo": out_b.reshape(1, C),
        "gamma": jnp.ones((1, C), jnp.float32),   # nn.LayerNorm defaults
        "beta": jnp.zeros((1, C), jnp.float32),
    }


if __name__ == "__main__":
    key = jax.random.PRNGKey(0)
    kx, kp, kparam, kx2, kp2 = jax.random.split(key, 5)

    # Module defaults: d_model=256, nhead=8 (lane-dense C).
    C, H = 256, 8
    params = make_params(kparam, C, H)

    # Tolerance reflects bf16 matmul operands (f32 accumulation) + approx recip.
    TOL = 4e-2

    # --- Test 1: small batch/seq, pe + key-padding mask (single q tile) ---
    B, N = 2, 8
    x = jax.random.normal(kx, (B, N, C), jnp.float32)
    pe = jax.random.normal(kp, (B, N, C), jnp.float32)
    x_mask = jnp.zeros((B, N), jnp.bool_).at[1, N - 2:].set(True)
    out = jax.block_until_ready(
        self_attention_layer(x, params, x_mask=x_mask, attn_mask=None, pe=pe))
    ref = _reference(x, params, x_mask=x_mask, attn_mask=None, pe=pe)
    assert jnp.allclose(out, ref, atol=TOL, rtol=TOL), \
        f"test1 max abs err {jnp.abs(out - ref).max()}"

    # --- Test 2: ragged N=160 (padded to 256, 2 q tiles, K/V cache reuse),
    #             pe + key-padding mask + causal attn mask ---
    B2, N2 = 1, 160
    x2 = jax.random.normal(kx2, (B2, N2, C), jnp.float32)
    pe2 = jax.random.normal(kp2, (B2, N2, C), jnp.float32)
    x_mask2 = jnp.zeros((B2, N2), jnp.bool_).at[0, N2 - 5:].set(True)
    causal = ~jnp.tril(jnp.ones((N2, N2), jnp.bool_))
    attn_mask2 = jnp.broadcast_to(causal, (B2, N2, N2))
    out2 = jax.block_until_ready(
        self_attention_layer(x2, params, x_mask=x_mask2, attn_mask=attn_mask2, pe=pe2))
    ref2 = _reference(x2, params, x_mask=x_mask2, attn_mask=attn_mask2, pe=pe2)
    assert jnp.allclose(out2, ref2, atol=TOL, rtol=TOL), \
        f"test2 max abs err {jnp.abs(out2 - ref2).max()}"

    print("KERNEL_OK")
</pallas_src>

<mosaic_0001>
module attributes {stable_mosaic.version = 11 : i64} {
  func.func @_self_attn_kernel(%arg0: i32, %arg1: i32, %arg2: memref<1x8x256xbf16, #tpu.memory_space<vmem>>, %arg3: memref<1x8x256xbf16, #tpu.memory_space<vmem>>, %arg4: memref<1x8x256xf32, #tpu.memory_space<vmem>>, %arg5: memref<1x1x8xf32, #tpu.memory_space<vmem>>, %arg6: memref<256x256xbf16, #tpu.memory_space<vmem>>, %arg7: memref<256x256xbf16, #tpu.memory_space<vmem>>, %arg8: memref<256x256xbf16, #tpu.memory_space<vmem>>, %arg9: memref<1x256xf32, #tpu.memory_space<vmem>>, %arg10: memref<1x256xf32, #tpu.memory_space<vmem>>, %arg11: memref<1x256xf32, #tpu.memory_space<vmem>>, %arg12: memref<256x256xbf16, #tpu.memory_space<vmem>>, %arg13: memref<1x256xf32, #tpu.memory_space<vmem>>, %arg14: memref<1x256xf32, #tpu.memory_space<vmem>>, %arg15: memref<1x256xf32, #tpu.memory_space<vmem>>, %arg16: memref<1x8x256xf32, #tpu.memory_space<vmem>>, %arg17: memref<8x8x32xbf16, #tpu.memory_space<vmem>>, %arg18: memref<8x8x32xbf16, #tpu.memory_space<vmem>>, %arg19: memref<8x256xbf16, #tpu.memory_space<vmem>>) attributes {dimension_semantics = [#tpu.dimension_semantics<parallel>, #tpu.dimension_semantics<arbitrary>], iteration_bounds = array<i64: 2, 1>, scalar_prefetch = 0 : i64, scratch_operands = 3 : i64, tpu.core_type = #tpu.core_type<tc>, window_params = [{transform_indices = @transform_0, window_bounds = array<i64: 1, 8, 256>}, {transform_indices = @transform_1, window_bounds = array<i64: 1, 8, 256>}, {transform_indices = @transform_2, window_bounds = array<i64: 1, 8, 256>}, {transform_indices = @transform_3, window_bounds = array<i64: 1, 1, 8>}, {pipeline_mode = #tpu.pipeline_mode<synchronous>, transform_indices = @transform_4, window_bounds = array<i64: 256, 256>}, {pipeline_mode = #tpu.pipeline_mode<synchronous>, transform_indices = @transform_5, window_bounds = array<i64: 256, 256>}, {pipeline_mode = #tpu.pipeline_mode<synchronous>, transform_indices = @transform_6, window_bounds = array<i64: 256, 256>}, {pipeline_mode = #tpu.pipeline_mode<synchronous>, transform_indices = @transform_7, window_bounds = array<i64: 1, 256>}, {pipeline_mode = #tpu.pipeline_mode<synchronous>, transform_indices = @transform_8, window_bounds = array<i64: 1, 256>}, {pipeline_mode = #tpu.pipeline_mode<synchronous>, transform_indices = @transform_9, window_bounds = array<i64: 1, 256>}, {pipeline_mode = #tpu.pipeline_mode<synchronous>, transform_indices = @transform_10, window_bounds = array<i64: 256, 256>}, {pipeline_mode = #tpu.pipeline_mode<synchronous>, transform_indices = @transform_11, window_bounds = array<i64: 1, 256>}, {pipeline_mode = #tpu.pipeline_mode<synchronous>, transform_indices = @transform_12, window_bounds = array<i64: 1, 256>}, {pipeline_mode = #tpu.pipeline_mode<synchronous>, transform_indices = @transform_13, window_bounds = array<i64: 1, 256>}, {transform_indices = @transform_14, window_bounds = array<i64: 1, 8, 256>}]} {
    %c0_i32 = arith.constant 0 : i32
    %0 = arith.cmpi eq, %arg1, %c0_i32 : i32
    %1 = arith.extui %0 : i1 to i32
    %c0_i32_0 = arith.constant 0 : i32
    %2 = arith.cmpi ne, %1, %c0_i32_0 : i32
    scf.if %2 {
      %c0_118 = arith.constant 0 : index
      %c0_119 = arith.constant 0 : index
      %c0_120 = arith.constant 0 : index
      %239 = vector.load %arg2[%c0_118, %c0_119, %c0_120] : memref<1x8x256xbf16, #tpu.memory_space<vmem>>, vector<1x8x256xbf16>
      %240 = vector.shape_cast %239 : vector<1x8x256xbf16> to vector<8x256xbf16>
      %c0_121 = arith.constant 0 : index
      %c0_122 = arith.constant 0 : index
      %c0_123 = arith.constant 0 : index
      %241 = vector.load %arg3[%c0_121, %c0_122, %c0_123] : memref<1x8x256xbf16, #tpu.memory_space<vmem>>, vector<1x8x256xbf16>
      %242 = vector.shape_cast %241 : vector<1x8x256xbf16> to vector<8x256xbf16>
      %243 = arith.addf %240, %242 : vector<8x256xbf16>
      %c0_124 = arith.constant 0 : index
      %c0_125 = arith.constant 0 : index
      %244 = vector.load %arg7[%c0_124, %c0_125] : memref<256x256xbf16, #tpu.memory_space<vmem>>, vector<256x256xbf16>
      %cst_126 = arith.constant dense<0.000000e+00> : vector<8x256xf32>
      %245 = tpu.matmul %243, %244, %cst_126 {dimension_numbers = #tpu.dot_dimension_numbers<[1], [0], [0], [1], [0, 0, 1, 1], [], []>} : vector<8x256xbf16>, vector<256x256xbf16>, vector<8x256xf32> -> vector<8x256xf32>
      %c0_127 = arith.constant 0 : index
      %c0_128 = arith.constant 0 : index
      %246 = vector.load %arg10[%c0_127, %c0_128] : memref<1x256xf32, #tpu.memory_space<vmem>>, vector<1x256xf32>
      %247 = vector.broadcast %246 : vector<1x256xf32> to vector<8x256xf32>
      %248 = arith.addf %245, %247 : vector<8x256xf32>
      %c0_129 = arith.constant 0 : index
      %c0_130 = arith.constant 0 : index
      %249 = vector.load %arg8[%c0_129, %c0_130] : memref<256x256xbf16, #tpu.memory_space<vmem>>, vector<256x256xbf16>
      %cst_131 = arith.constant dense<0.000000e+00> : vector<8x256xf32>
      %250 = tpu.matmul %240, %249, %cst_131 {dimension_numbers = #tpu.dot_dimension_numbers<[1], [0], [0], [1], [0, 0, 1, 1], [], []>} : vector<8x256xbf16>, vector<256x256xbf16>, vector<8x256xf32> -> vector<8x256xf32>
      %c0_132 = arith.constant 0 : index
      %c0_133 = arith.constant 0 : index
      %251 = vector.load %arg11[%c0_132, %c0_133] : memref<1x256xf32, #tpu.memory_space<vmem>>, vector<1x256xf32>
      %252 = vector.broadcast %251 : vector<1x256xf32> to vector<8x256xf32>
      %253 = arith.addf %250, %252 : vector<8x256xf32>
      %254 = arith.truncf %248 : vector<8x256xf32> to vector<8x256xbf16>
      %255 = arith.truncf %253 : vector<8x256xf32> to vector<8x256xbf16>
      %256 = vector.extract_strided_slice %254 {offsets = [0, 0], sizes = [8, 32], strides = [1, 1]} : vector<8x256xbf16> to vector<8x32xbf16>
      %c0_134 = arith.constant 0 : index
      %c0_135 = arith.constant 0 : index
      %c0_136 = arith.constant 0 : index
      %257 = vector.load %arg17[%c0_134, %c0_135, %c0_136] : memref<8x8x32xbf16, #tpu.memory_space<vmem>>, vector<1x8x32xbf16>
      %258 = vector.shape_cast %257 : vector<1x8x32xbf16> to vector<8x32xbf16>
      %259 = vector.shape_cast %256 : vector<8x32xbf16> to vector<1x8x32xbf16>
      tpu.vector_store %arg17[%c0_134, %c0_135, %c0_136], %259 {strides = array<i32>} : memref<8x8x32xbf16, #tpu.memory_space<vmem>>, vector<1x8x32xbf16>,
      %260 = vector.extract_strided_slice %255 {offsets = [0, 0], sizes = [8, 32], strides = [1, 1]} : vector<8x256xbf16> to vector<8x32xbf16>
      %c0_137 = arith.constant 0 : index
      %c0_138 = arith.constant 0 : index
      %c0_139 = arith.constant 0 : index
      %261 = vector.load %arg18[%c0_137, %c0_138, %c0_139] : memref<8x8x32xbf16, #tpu.memory_space<vmem>>, vector<1x8x32xbf16>
      %262 = vector.shape_cast %261 : vector<1x8x32xbf16> to vector<8x32xbf16>
      %263 = vector.shape_cast %260 : vector<8x32xbf16> to vector<1x8x32xbf16>
      tpu.vector_store %arg18[%c0_137, %c0_138, %c0_139], %263 {strides = array<i32>} : memref<8x8x32xbf16, #tpu.memory_space<vmem>>, vector<1x8x32xbf16>,
      %264 = vector.extract_strided_slice %254 {offsets = [0, 32], sizes = [8, 32], strides = [1, 1]} : vector<8x256xbf16> to vector<8x32xbf16>
      %c1_140 = arith.constant 1 : index
      %c0_141 = arith.constant 0 : index
      %c0_142 = arith.constant 0 : index
      %265 = vector.load %arg17[%c1_140, %c0_141, %c0_142] : memref<8x8x32xbf16, #tpu.memory_space<vmem>>, vector<1x8x32xbf16>
      %266 = vector.shape_cast %265 : vector<1x8x32xbf16> to vector<8x32xbf16>
      %267 = vector.shape_cast %264 : vector<8x32xbf16> to vector<1x8x32xbf16>
      tpu.vector_store %arg17[%c1_140, %c0_141, %c0_142], %267 {strides = array<i32>} : memref<8x8x32xbf16, #tpu.memory_space<vmem>>, vector<1x8x32xbf16>,
      %268 = vector.extract_strided_slice %255 {offsets = [0, 32], sizes = [8, 32], strides = [1, 1]} : vector<8x256xbf16> to vector<8x32xbf16>
      %c1_143 = arith.constant 1 : index
      %c0_144 = arith.constant 0 : index
      %c0_145 = arith.constant 0 : index
      %269 = vector.load %arg18[%c1_143, %c0_144, %c0_145] : memref<8x8x32xbf16, #tpu.memory_space<vmem>>, vector<1x8x32xbf16>
      %270 = vector.shape_cast %269 : vector<1x8x32xbf16> to vector<8x32xbf16>
      %271 = vector.shape_cast %268 : vector<8x32xbf16> to vector<1x8x32xbf16>
      tpu.vector_store %arg18[%c1_143, %c0_144, %c0_145], %271 {strides = array<i32>} : memref<8x8x32xbf16, #tpu.memory_space<vmem>>, vector<1x8x32xbf16>,
      %272 = vector.extract_strided_slice %254 {offsets = [0, 64], sizes = [8, 32], strides = [1, 1]} : vector<8x256xbf16> to vector<8x32xbf16>
      %c2_146 = arith.constant 2 : index
      %c0_147 = arith.constant 0 : index
      %c0_148 = arith.constant 0 : index
      %273 = vector.load %arg17[%c2_146, %c0_147, %c0_148] : memref<8x8x32xbf16, #tpu.memory_space<vmem>>, vector<1x8x32xbf16>
      %274 = vector.shape_cast %273 : vector<1x8x32xbf16> to vector<8x32xbf16>
      %275 = vector.shape_cast %272 : vector<8x32xbf16> to vector<1x8x32xbf16>
      tpu.vector_store %arg17[%c2_146, %c0_147, %c0_148], %275 {strides = array<i32>} : memref<8x8x32xbf16, #tpu.memory_space<vmem>>, vector<1x8x32xbf16>,
      %276 = vector.extract_strided_slice %255 {offsets = [0, 64], sizes = [8, 32], strides = [1, 1]} : vector<8x256xbf16> to vector<8x32xbf16>
      %c2_149 = arith.constant 2 : index
      %c0_150 = arith.constant 0 : index
      %c0_151 = arith.constant 0 : index
      %277 = vector.load %arg18[%c2_149, %c0_150, %c0_151] : memref<8x8x32xbf16, #tpu.memory_space<vmem>>, vector<1x8x32xbf16>
      %278 = vector.shape_cast %277 : vector<1x8x32xbf16> to vector<8x32xbf16>
      %279 = vector.shape_cast %276 : vector<8x32xbf16> to vector<1x8x32xbf16>
      tpu.vector_store %arg18[%c2_149, %c0_150, %c0_151], %279 {strides = array<i32>} : memref<8x8x32xbf16, #tpu.memory_space<vmem>>, vector<1x8x32xbf16>,
      %280 = vector.extract_strided_slice %254 {offsets = [0, 96], sizes = [8, 32], strides = [1, 1]} : vector<8x256xbf16> to vector<8x32xbf16>
      %c3_152 = arith.constant 3 : index
      %c0_153 = arith.constant 0 : index
      %c0_154 = arith.constant 0 : index
      %281 = vector.load %arg17[%c3_152, %c0_153, %c0_154] : memref<8x8x32xbf16, #tpu.memory_space<vmem>>, vector<1x8x32xbf16>
      %282 = vector.shape_cast %281 : vector<1x8x32xbf16> to vector<8x32xbf16>
      %283 = vector.shape_cast %280 : vector<8x32xbf16> to vector<1x8x32xbf16>
      tpu.vector_store %arg17[%c3_152, %c0_153, %c0_154], %283 {strides = array<i32>} : memref<8x8x32xbf16, #tpu.memory_space<vmem>>, vector<1x8x32xbf16>,
      %284 = vector.extract_strided_slice %255 {offsets = [0, 96], sizes = [8, 32], strides = [1, 1]} : vector<8x256xbf16> to vector<8x32xbf16>
      %c3_155 = arith.constant 3 : index
      %c0_156 = arith.constant 0 : index
      %c0_157 = arith.constant 0 : index
      %285 = vector.load %arg18[%c3_155, %c0_156, %c0_157] : memref<8x8x32xbf16, #tpu.memory_space<vmem>>, vector<1x8x32xbf16>
      %286 = vector.shape_cast %285 : vector<1x8x32xbf16> to vector<8x32xbf16>
      %287 = vector.shape_cast %284 : vector<8x32xbf16> to vector<1x8x32xbf16>
      tpu.vector_store %arg18[%c3_155, %c0_156, %c0_157], %287 {strides = array<i32>} : memref<8x8x32xbf16, #tpu.memory_space<vmem>>, vector<1x8x32xbf16>,
      %288 = vector.extract_strided_slice %254 {offsets = [0, 128], sizes = [8, 32], strides = [1, 1]} : vector<8x256xbf16> to vector<8x32xbf16>
      %c4_158 = arith.constant 4 : index
      %c0_159 = arith.constant 0 : index
      %c0_160 = arith.constant 0 : index
      %289 = vector.load %arg17[%c4_158, %c0_159, %c0_160] : memref<8x8x32xbf16, #tpu.memory_space<vmem>>, vector<1x8x32xbf16>
      %290 = vector.shape_cast %289 : vector<1x8x32xbf16> to vector<8x32xbf16>
      %291 = vector.shape_cast %288 : vector<8x32xbf16> to vector<1x8x32xbf16>
      tpu.vector_store %arg17[%c4_158, %c0_159, %c0_160], %291 {strides = array<i32>} : memref<8x8x32xbf16, #tpu.memory_space<vmem>>, vector<1x8x32xbf16>,
      %292 = vector.extract_strided_slice %255 {offsets = [0, 128], sizes = [8, 32], strides = [1, 1]} : vector<8x256xbf16> to vector<8x32xbf16>
      %c4_161 = arith.constant 4 : index
      %c0_162 = arith.constant 0 : index
      %c0_163 = arith.constant 0 : index
      %293 = vector.load %arg18[%c4_161, %c0_162, %c0_163] : memref<8x8x32xbf16, #tpu.memory_space<vmem>>, vector<1x8x32xbf16>
      %294 = vector.shape_cast %293 : vector<1x8x32xbf16> to vector<8x32xbf16>
      %295 = vector.shape_cast %292 : vector<8x32xbf16> to vector<1x8x32xbf16>
      tpu.vector_store %arg18[%c4_161, %c0_162, %c0_163], %295 {strides = array<i32>} : memref<8x8x32xbf16, #tpu.memory_space<vmem>>, vector<1x8x32xbf16>,
      %296 = vector.extract_strided_slice %254 {offsets = [0, 160], sizes = [8, 32], strides = [1, 1]} : vector<8x256xbf16> to vector<8x32xbf16>
      %c5_164 = arith.constant 5 : index
      %c0_165 = arith.constant 0 : index
      %c0_166 = arith.constant 0 : index
      %297 = vector.load %arg17[%c5_164, %c0_165, %c0_166] : memref<8x8x32xbf16, #tpu.memory_space<vmem>>, vector<1x8x32xbf16>
      %298 = vector.shape_cast %297 : vector<1x8x32xbf16> to vector<8x32xbf16>
      %299 = vector.shape_cast %296 : vector<8x32xbf16> to vector<1x8x32xbf16>
      tpu.vector_store %arg17[%c5_164, %c0_165, %c0_166], %299 {strides = array<i32>} : memref<8x8x32xbf16, #tpu.memory_space<vmem>>, vector<1x8x32xbf16>,
      %300 = vector.extract_strided_slice %255 {offsets = [0, 160], sizes = [8, 32], strides = [1, 1]} : vector<8x256xbf16> to vector<8x32xbf16>
      %c5_167 = arith.constant 5 : index
      %c0_168 = arith.constant 0 : index
      %c0_169 = arith.constant 0 : index
      %301 = vector.load %arg18[%c5_167, %c0_168, %c0_169] : memref<8x8x32xbf16, #tpu.memory_space<vmem>>, vector<1x8x32xbf16>
      %302 = vector.shape_cast %301 : vector<1x8x32xbf16> to vector<8x32xbf16>
      %303 = vector.shape_cast %300 : vector<8x32xbf16> to vector<1x8x32xbf16>
      tpu.vector_store %arg18[%c5_167, %c0_168, %c0_169], %303 {strides = array<i32>} : memref<8x8x32xbf16, #tpu.memory_space<vmem>>, vector<1x8x32xbf16>,
      %304 = vector.extract_strided_slice %254 {offsets = [0, 192], sizes = [8, 32], strides = [1, 1]} : vector<8x256xbf16> to vector<8x32xbf16>
      %c6_170 = arith.constant 6 : index
      %c0_171 = arith.constant 0 : index
      %c0_172 = arith.constant 0 : index
      %305 = vector.load %arg17[%c6_170, %c0_171, %c0_172] : memref<8x8x32xbf16, #tpu.memory_space<vmem>>, vector<1x8x32xbf16>
      %306 = vector.shape_cast %305 : vector<1x8x32xbf16> to vector<8x32xbf16>
      %307 = vector.shape_cast %304 : vector<8x32xbf16> to vector<1x8x32xbf16>
      tpu.vector_store %arg17[%c6_170, %c0_171, %c0_172], %307 {strides = array<i32>} : memref<8x8x32xbf16, #tpu.memory_space<vmem>>, vector<1x8x32xbf16>,
      %308 = vector.extract_strided_slice %255 {offsets = [0, 192], sizes = [8, 32], strides = [1, 1]} : vector<8x256xbf16> to vector<8x32xbf16>
      %c6_173 = arith.constant 6 : index
      %c0_174 = arith.constant 0 : index
      %c0_175 = arith.constant 0 : index
      %309 = vector.load %arg18[%c6_173, %c0_174, %c0_175] : memref<8x8x32xbf16, #tpu.memory_space<vmem>>, vector<1x8x32xbf16>
      %310 = vector.shape_cast %309 : vector<1x8x32xbf16> to vector<8x32xbf16>
      %311 = vector.shape_cast %308 : vector<8x32xbf16> to vector<1x8x32xbf16>
      tpu.vector_store %arg18[%c6_173, %c0_174, %c0_175], %311 {strides = array<i32>} : memref<8x8x32xbf16, #tpu.memory_space<vmem>>, vector<1x8x32xbf16>,
      %312 = vector.extract_strided_slice %254 {offsets = [0, 224], sizes = [8, 32], strides = [1, 1]} : vector<8x256xbf16> to vector<8x32xbf16>
      %c7_176 = arith.constant 7 : index
      %c0_177 = arith.constant 0 : index
      %c0_178 = arith.constant 0 : index
      %313 = vector.load %arg17[%c7_176, %c0_177, %c0_178] : memref<8x8x32xbf16, #tpu.memory_space<vmem>>, vector<1x8x32xbf16>
      %314 = vector.shape_cast %313 : vector<1x8x32xbf16> to vector<8x32xbf16>
      %315 = vector.shape_cast %312 : vector<8x32xbf16> to vector<1x8x32xbf16>
      tpu.vector_store %arg17[%c7_176, %c0_177, %c0_178], %315 {strides = array<i32>} : memref<8x8x32xbf16, #tpu.memory_space<vmem>>, vector<1x8x32xbf16>,
      %316 = vector.extract_strided_slice %255 {offsets = [0, 224], sizes = [8, 32], strides = [1, 1]} : vector<8x256xbf16> to vector<8x32xbf16>
      %c7_179 = arith.constant 7 : index
      %c0_180 = arith.constant 0 : index
      %c0_181 = arith.constant 0 : index
      %317 = vector.load %arg18[%c7_179, %c0_180, %c0_181] : memref<8x8x32xbf16, #tpu.memory_space<vmem>>, vector<1x8x32xbf16>
      %318 = vector.shape_cast %317 : vector<1x8x32xbf16> to vector<8x32xbf16>
      %319 = vector.shape_cast %316 : vector<8x32xbf16> to vector<1x8x32xbf16>
      tpu.vector_store %arg18[%c7_179, %c0_180, %c0_181], %319 {strides = array<i32>} : memref<8x8x32xbf16, #tpu.memory_space<vmem>>, vector<1x8x32xbf16>,
    } else {
    }
    %c0 = arith.constant 0 : index
    %c0_1 = arith.constant 0 : index
    %c0_2 = arith.constant 0 : index
    %3 = vector.load %arg2[%c0, %c0_1, %c0_2] : memref<1x8x256xbf16, #tpu.memory_space<vmem>>, vector<1x8x256xbf16>
    %4 = vector.shape_cast %3 : vector<1x8x256xbf16> to vector<8x256xbf16>
    %c0_3 = arith.constant 0 : index
    %c0_4 = arith.constant 0 : index
    %c0_5 = arith.constant 0 : index
    %5 = vector.load %arg3[%c0_3, %c0_4, %c0_5] : memref<1x8x256xbf16, #tpu.memory_space<vmem>>, vector<1x8x256xbf16>
    %6 = vector.shape_cast %5 : vector<1x8x256xbf16> to vector<8x256xbf16>
    %7 = arith.addf %4, %6 : vector<8x256xbf16>
    %c0_6 = arith.constant 0 : index
    %c0_7 = arith.constant 0 : index
    %8 = vector.load %arg6[%c0_6, %c0_7] : memref<256x256xbf16, #tpu.memory_space<vmem>>, vector<256x256xbf16>
    %cst = arith.constant dense<0.000000e+00> : vector<8x256xf32>
    %9 = tpu.matmul %7, %8, %cst {dimension_numbers = #tpu.dot_dimension_numbers<[1], [0], [0], [1], [0, 0, 1, 1], [], []>} : vector<8x256xbf16>, vector<256x256xbf16>, vector<8x256xf32> -> vector<8x256xf32>
    %c0_8 = arith.constant 0 : index
    %c0_9 = arith.constant 0 : index
    %10 = vector.load %arg9[%c0_8, %c0_9] : memref<1x256xf32, #tpu.memory_space<vmem>>, vector<1x256xf32>
    %11 = vector.broadcast %10 : vector<1x256xf32> to vector<8x256xf32>
    %12 = arith.addf %9, %11 : vector<8x256xf32>
    %cst_10 = arith.constant 0.176776692 : f32
    %13 = vector.broadcast %cst_10 : f32 to vector<8x256xf32>
    %14 = arith.mulf %12, %13 : vector<8x256xf32>
    %c0_11 = arith.constant 0 : index
    %c0_12 = arith.constant 0 : index
    %c0_13 = arith.constant 0 : index
    %15 = vector.load %arg5[%c0_11, %c0_12, %c0_13] : memref<1x1x8xf32, #tpu.memory_space<vmem>>, vector<1x1x8xf32>
    %16 = vector.shape_cast %15 : vector<1x1x8xf32> to vector<1x8xf32>
    %17 = vector.extract_strided_slice %14 {offsets = [0, 0], sizes = [8, 32], strides = [1, 1]} : vector<8x256xf32> to vector<8x32xf32>
    %18 = arith.truncf %17 : vector<8x32xf32> to vector<8x32xbf16>
    %c0_14 = arith.constant 0 : index
    %c0_15 = arith.constant 0 : index
    %c0_16 = arith.constant 0 : index
    %19 = vector.load %arg17[%c0_14, %c0_15, %c0_16] : memref<8x8x32xbf16, #tpu.memory_space<vmem>>, vector<1x8x32xbf16>
    %20 = vector.shape_cast %19 : vector<1x8x32xbf16> to vector<8x32xbf16>
    %c0_17 = arith.constant 0 : index
    %c0_18 = arith.constant 0 : index
    %c0_19 = arith.constant 0 : index
    %21 = vector.load %arg18[%c0_17, %c0_18, %c0_19] : memref<8x8x32xbf16, #tpu.memory_space<vmem>>, vector<1x8x32xbf16>
    %22 = vector.shape_cast %21 : vector<1x8x32xbf16> to vector<8x32xbf16>
    %cst_20 = arith.constant dense<0.000000e+00> : vector<8x8xf32>
    %23 = tpu.matmul %18, %20, %cst_20 {dimension_numbers = #tpu.dot_dimension_numbers<[1], [1], [0], [0], [0, 0, 1, 0], [], []>} : vector<8x32xbf16>, vector<8x32xbf16>, vector<8x8xf32> -> vector<8x8xf32>
    %24 = vector.broadcast %16 : vector<1x8xf32> to vector<8x8xf32>
    %25 = arith.addf %23, %24 : vector<8x8xf32>
    %cst_21 = arith.constant dense<0xFF800000> : vector<8xf32>
    %26 = vector.multi_reduction <maximumf>, %25, %cst_21 [1] : vector<8x8xf32> to vector<8xf32>
    %27 = vector.shape_cast %26 : vector<8xf32> to vector<8x1xf32>
    %28 = vector.broadcast %27 : vector<8x1xf32> to vector<8x8xf32>
    %29 = arith.subf %25, %28 : vector<8x8xf32>
    %30 = math.exp %29 : vector<8x8xf32>
    %cst_22 = arith.constant dense<0.000000e+00> : vector<8xf32>
    %31 = vector.multi_reduction <add>, %30, %cst_22 [1] : vector<8x8xf32> to vector<8xf32>
    %32 = vector.shape_cast %31 : vector<8xf32> to vector<8x1xf32>
    %33 = arith.truncf %30 : vector<8x8xf32> to vector<8x8xbf16>
    %cst_23 = arith.constant dense<0.000000e+00> : vector<8x32xf32>
    %34 = tpu.matmul %33, %22, %cst_23 {dimension_numbers = #tpu.dot_dimension_numbers<[1], [0], [0], [1], [0, 0, 1, 1], [], []>} : vector<8x8xbf16>, vector<8x32xbf16>, vector<8x32xf32> -> vector<8x32xf32>
    %35 = tpu.reciprocal %32 {approx = true} : vector<8x1xf32> -> vector<8x1xf32>
    %36 = vector.broadcast %35 : vector<8x1xf32> to vector<8x32xf32>
    %37 = arith.mulf %34, %36 : vector<8x32xf32>
    %38 = arith.truncf %37 : vector<8x32xf32> to vector<8x32xbf16>
    %c0_24 = arith.constant 0 : index
    %c0_25 = arith.constant 0 : index
    %39 = vector.load %arg19[%c0_24, %c0_25] : memref<8x256xbf16, #tpu.memory_space<vmem>>, vector<8x32xbf16>
    tpu.vector_store %arg19[%c0_24, %c0_25], %38 {strides = array<i32>} : memref<8x256xbf16, #tpu.memory_space<vmem>>, vector<8x32xbf16>,
    %40 = vector.extract_strided_slice %14 {offsets = [0, 32], sizes = [8, 32], strides = [1, 1]} : vector<8x256xf32> to vector<8x32xf32>
    %41 = arith.truncf %40 : vector<8x32xf32> to vector<8x32xbf16>
    %c1 = arith.constant 1 : index
    %c0_26 = arith.constant 0 : index
    %c0_27 = arith.constant 0 : index
    %42 = vector.load %arg17[%c1, %c0_26, %c0_27] : memref<8x8x32xbf16, #tpu.memory_space<vmem>>, vector<1x8x32xbf16>
    %43 = vector.shape_cast %42 : vector<1x8x32xbf16> to vector<8x32xbf16>
    %c1_28 = arith.constant 1 : index
    %c0_29 = arith.constant 0 : index
    %c0_30 = arith.constant 0 : index
    %44 = vector.load %arg18[%c1_28, %c0_29, %c0_30] : memref<8x8x32xbf16, #tpu.memory_space<vmem>>, vector<1x8x32xbf16>
    %45 = vector.shape_cast %44 : vector<1x8x32xbf16> to vector<8x32xbf16>
    %cst_31 = arith.constant dense<0.000000e+00> : vector<8x8xf32>
    %46 = tpu.matmul %41, %43, %cst_31 {dimension_numbers = #tpu.dot_dimension_numbers<[1], [1], [0], [0], [0, 0, 1, 0], [], []>} : vector<8x32xbf16>, vector<8x32xbf16>, vector<8x8xf32> -> vector<8x8xf32>
    %47 = vector.broadcast %16 : vector<1x8xf32> to vector<8x8xf32>
    %48 = arith.addf %46, %47 : vector<8x8xf32>
    %cst_32 = arith.constant dense<0xFF800000> : vector<8xf32>
    %49 = vector.multi_reduction <maximumf>, %48, %cst_32 [1] : vector<8x8xf32> to vector<8xf32>
    %50 = vector.shape_cast %49 : vector<8xf32> to vector<8x1xf32>
    %51 = vector.broadcast %50 : vector<8x1xf32> to vector<8x8xf32>
    %52 = arith.subf %48, %51 : vector<8x8xf32>
    %53 = math.exp %52 : vector<8x8xf32>
    %cst_33 = arith.constant dense<0.000000e+00> : vector<8xf32>
    %54 = vector.multi_reduction <add>, %53, %cst_33 [1] : vector<8x8xf32> to vector<8xf32>
    %55 = vector.shape_cast %54 : vector<8xf32> to vector<8x1xf32>
    %56 = arith.truncf %53 : vector<8x8xf32> to vector<8x8xbf16>
    %cst_34 = arith.constant dense<0.000000e+00> : vector<8x32xf32>
    %57 = tpu.matmul %56, %45, %cst_34 {dimension_numbers = #tpu.dot_dimension_numbers<[1], [0], [0], [1], [0, 0, 1, 1], [], []>} : vector<8x8xbf16>, vector<8x32xbf16>, vector<8x32xf32> -> vector<8x32xf32>
    %58 = tpu.reciprocal %55 {approx = true} : vector<8x1xf32> -> vector<8x1xf32>
    %59 = vector.broadcast %58 : vector<8x1xf32> to vector<8x32xf32>
    %60 = arith.mulf %57, %59 : vector<8x32xf32>
    %61 = arith.truncf %60 : vector<8x32xf32> to vector<8x32xbf16>
    %c0_35 = arith.constant 0 : index
    %c32 = arith.constant 32 : index
    %62 = vector.load %arg19[%c0_35, %c32] : memref<8x256xbf16, #tpu.memory_space<vmem>>, vector<8x32xbf16>
    tpu.vector_store %arg19[%c0_35, %c32], %61 {strides = array<i32>} : memref<8x256xbf16, #tpu.memory_space<vmem>>, vector<8x32xbf16>,
    %63 = vector.extract_strided_slice %14 {offsets = [0, 64], sizes = [8, 32], strides = [1, 1]} : vector<8x256xf32> to vector<8x32xf32>
    %64 = arith.truncf %63 : vector<8x32xf32> to vector<8x32xbf16>
    %c2 = arith.constant 2 : index
    %c0_36 = arith.constant 0 : index
    %c0_37 = arith.constant 0 : index
    %65 = vector.load %arg17[%c2, %c0_36, %c0_37] : memref<8x8x32xbf16, #tpu.memory_space<vmem>>, vector<1x8x32xbf16>
    %66 = vector.shape_cast %65 : vector<1x8x32xbf16> to vector<8x32xbf16>
    %c2_38 = arith.constant 2 : index
    %c0_39 = arith.constant 0 : index
    %c0_40 = arith.constant 0 : index
    %67 = vector.load %arg18[%c2_38, %c0_39, %c0_40] : memref<8x8x32xbf16, #tpu.memory_space<vmem>>, vector<1x8x32xbf16>
    %68 = vector.shape_cast %67 : vector<1x8x32xbf16> to vector<8x32xbf16>
    %cst_41 = arith.constant dense<0.000000e+00> : vector<8x8xf32>
    %69 = tpu.matmul %64, %66, %cst_41 {dimension_numbers = #tpu.dot_dimension_numbers<[1], [1], [0], [0], [0, 0, 1, 0], [], []>} : vector<8x32xbf16>, vector<8x32xbf16>, vector<8x8xf32> -> vector<8x8xf32>
    %70 = vector.broadcast %16 : vector<1x8xf32> to vector<8x8xf32>
    %71 = arith.addf %69, %70 : vector<8x8xf32>
    %cst_42 = arith.constant dense<0xFF800000> : vector<8xf32>
    %72 = vector.multi_reduction <maximumf>, %71, %cst_42 [1] : vector<8x8xf32> to vector<8xf32>
    %73 = vector.shape_cast %72 : vector<8xf32> to vector<8x1xf32>
    %74 = vector.broadcast %73 : vector<8x1xf32> to vector<8x8xf32>
    %75 = arith.subf %71, %74 : vector<8x8xf32>
    %76 = math.exp %75 : vector<8x8xf32>
    %cst_43 = arith.constant dense<0.000000e+00> : vector<8xf32>
    %77 = vector.multi_reduction <add>, %76, %cst_43 [1] : vector<8x8xf32> to vector<8xf32>
    %78 = vector.shape_cast %77 : vector<8xf32> to vector<8x1xf32>
    %79 = arith.truncf %76 : vector<8x8xf32> to vector<8x8xbf16>
    %cst_44 = arith.constant dense<0.000000e+00> : vector<8x32xf32>
    %80 = tpu.matmul %79, %68, %cst_44 {dimension_numbers = #tpu.dot_dimension_numbers<[1], [0], [0], [1], [0, 0, 1, 1], [], []>} : vector<8x8xbf16>, vector<8x32xbf16>, vector<8x32xf32> -> vector<8x32xf32>
    %81 = tpu.reciprocal %78 {approx = true} : vector<8x1xf32> -> vector<8x1xf32>
    %82 = vector.broadcast %81 : vector<8x1xf32> to vector<8x32xf32>
    %83 = arith.mulf %80, %82 : vector<8x32xf32>
    %84 = arith.truncf %83 : vector<8x32xf32> to vector<8x32xbf16>
    %c0_45 = arith.constant 0 : index
    %c64 = arith.constant 64 : index
    %85 = vector.load %arg19[%c0_45, %c64] : memref<8x256xbf16, #tpu.memory_space<vmem>>, vector<8x32xbf16>
    tpu.vector_store %arg19[%c0_45, %c64], %84 {strides = array<i32>} : memref<8x256xbf16, #tpu.memory_space<vmem>>, vector<8x32xbf16>,
    %86 = vector.extract_strided_slice %14 {offsets = [0, 96], sizes = [8, 32], strides = [1, 1]} : vector<8x256xf32> to vector<8x32xf32>
    %87 = arith.truncf %86 : vector<8x32xf32> to vector<8x32xbf16>
    %c3 = arith.constant 3 : index
    %c0_46 = arith.constant 0 : index
    %c0_47 = arith.constant 0 : index
    %88 = vector.load %arg17[%c3, %c0_46, %c0_47] : memref<8x8x32xbf16, #tpu.memory_space<vmem>>, vector<1x8x32xbf16>
    %89 = vector.shape_cast %88 : vector<1x8x32xbf16> to vector<8x32xbf16>
    %c3_48 = arith.constant 3 : index
    %c0_49 = arith.constant 0 : index
    %c0_50 = arith.constant 0 : index
    %90 = vector.load %arg18[%c3_48, %c0_49, %c0_50] : memref<8x8x32xbf16, #tpu.memory_space<vmem>>, vector<1x8x32xbf16>
    %91 = vector.shape_cast %90 : vector<1x8x32xbf16> to vector<8x32xbf16>
    %cst_51 = arith.constant dense<0.000000e+00> : vector<8x8xf32>
    %92 = tpu.matmul %87, %89, %cst_51 {dimension_numbers = #tpu.dot_dimension_numbers<[1], [1], [0], [0], [0, 0, 1, 0], [], []>} : vector<8x32xbf16>, vector<8x32xbf16>, vector<8x8xf32> -> vector<8x8xf32>
    %93 = vector.broadcast %16 : vector<1x8xf32> to vector<8x8xf32>
    %94 = arith.addf %92, %93 : vector<8x8xf32>
    %cst_52 = arith.constant dense<0xFF800000> : vector<8xf32>
    %95 = vector.multi_reduction <maximumf>, %94, %cst_52 [1] : vector<8x8xf32> to vector<8xf32>
    %96 = vector.shape_cast %95 : vector<8xf32> to vector<8x1xf32>
    %97 = vector.broadcast %96 : vector<8x1xf32> to vector<8x8xf32>
    %98 = arith.subf %94, %97 : vector<8x8xf32>
    %99 = math.exp %98 : vector<8x8xf32>
    %cst_53 = arith.constant dense<0.000000e+00> : vector<8xf32>
    %100 = vector.multi_reduction <add>, %99, %cst_53 [1] : vector<8x8xf32> to vector<8xf32>
    %101 = vector.shape_cast %100 : vector<8xf32> to vector<8x1xf32>
    %102 = arith.truncf %99 : vector<8x8xf32> to vector<8x8xbf16>
    %cst_54 = arith.constant dense<0.000000e+00> : vector<8x32xf32>
    %103 = tpu.matmul %102, %91, %cst_54 {dimension_numbers = #tpu.dot_dimension_numbers<[1], [0], [0], [1], [0, 0, 1, 1], [], []>} : vector<8x8xbf16>, vector<8x32xbf16>, vector<8x32xf32> -> vector<8x32xf32>
    %104 = tpu.reciprocal %101 {approx = true} : vector<8x1xf32> -> vector<8x1xf32>
    %105 = vector.broadcast %104 : vector<8x1xf32> to vector<8x32xf32>
    %106 = arith.mulf %103, %105 : vector<8x32xf32>
    %107 = arith.truncf %106 : vector<8x32xf32> to vector<8x32xbf16>
    %c0_55 = arith.constant 0 : index
    %c96 = arith.constant 96 : index
    %108 = vector.load %arg19[%c0_55, %c96] : memref<8x256xbf16, #tpu.memory_space<vmem>>, vector<8x32xbf16>
    tpu.vector_store %arg19[%c0_55, %c96], %107 {strides = array<i32>} : memref<8x256xbf16, #tpu.memory_space<vmem>>, vector<8x32xbf16>,
    %109 = vector.extract_strided_slice %14 {offsets = [0, 128], sizes = [8, 32], strides = [1, 1]} : vector<8x256xf32> to vector<8x32xf32>
    %110 = arith.truncf %109 : vector<8x32xf32> to vector<8x32xbf16>
    %c4 = arith.constant 4 : index
    %c0_56 = arith.constant 0 : index
    %c0_57 = arith.constant 0 : index
    %111 = vector.load %arg17[%c4, %c0_56, %c0_57] : memref<8x8x32xbf16, #tpu.memory_space<vmem>>, vector<1x8x32xbf16>
    %112 = vector.shape_cast %111 : vector<1x8x32xbf16> to vector<8x32xbf16>
    %c4_58 = arith.constant 4 : index
    %c0_59 = arith.constant 0 : index
    %c0_60 = arith.constant 0 : index
    %113 = vector.load %arg18[%c4_58, %c0_59, %c0_60] : memref<8x8x32xbf16, #tpu.memory_space<vmem>>, vector<1x8x32xbf16>
    %114 = vector.shape_cast %113 : vector<1x8x32xbf16> to vector<8x32xbf16>
    %cst_61 = arith.constant dense<0.000000e+00> : vector<8x8xf32>
    %115 = tpu.matmul %110, %112, %cst_61 {dimension_numbers = #tpu.dot_dimension_numbers<[1], [1], [0], [0], [0, 0, 1, 0], [], []>} : vector<8x32xbf16>, vector<8x32xbf16>, vector<8x8xf32> -> vector<8x8xf32>
    %116 = vector.broadcast %16 : vector<1x8xf32> to vector<8x8xf32>
    %117 = arith.addf %115, %116 : vector<8x8xf32>
    %cst_62 = arith.constant dense<0xFF800000> : vector<8xf32>
    %118 = vector.multi_reduction <maximumf>, %117, %cst_62 [1] : vector<8x8xf32> to vector<8xf32>
    %119 = vector.shape_cast %118 : vector<8xf32> to vector<8x1xf32>
    %120 = vector.broadcast %119 : vector<8x1xf32> to vector<8x8xf32>
    %121 = arith.subf %117, %120 : vector<8x8xf32>
    %122 = math.exp %121 : vector<8x8xf32>
    %cst_63 = arith.constant dense<0.000000e+00> : vector<8xf32>
    %123 = vector.multi_reduction <add>, %122, %cst_63 [1] : vector<8x8xf32> to vector<8xf32>
    %124 = vector.shape_cast %123 : vector<8xf32> to vector<8x1xf32>
    %125 = arith.truncf %122 : vector<8x8xf32> to vector<8x8xbf16>
    %cst_64 = arith.constant dense<0.000000e+00> : vector<8x32xf32>
    %126 = tpu.matmul %125, %114, %cst_64 {dimension_numbers = #tpu.dot_dimension_numbers<[1], [0], [0], [1], [0, 0, 1, 1], [], []>} : vector<8x8xbf16>, vector<8x32xbf16>, vector<8x32xf32> -> vector<8x32xf32>
    %127 = tpu.reciprocal %124 {approx = true} : vector<8x1xf32> -> vector<8x1xf32>
    %128 = vector.broadcast %127 : vector<8x1xf32> to vector<8x32xf32>
    %129 = arith.mulf %126, %128 : vector<8x32xf32>
    %130 = arith.truncf %129 : vector<8x32xf32> to vector<8x32xbf16>
    %c0_65 = arith.constant 0 : index
    %c128 = arith.constant 128 : index
    %131 = vector.load %arg19[%c0_65, %c128] : memref<8x256xbf16, #tpu.memory_space<vmem>>, vector<8x32xbf16>
    tpu.vector_store %arg19[%c0_65, %c128], %130 {strides = array<i32>} : memref<8x256xbf16, #tpu.memory_space<vmem>>, vector<8x32xbf16>,
    %132 = vector.extract_strided_slice %14 {offsets = [0, 160], sizes = [8, 32], strides = [1, 1]} : vector<8x256xf32> to vector<8x32xf32>
    %133 = arith.truncf %132 : vector<8x32xf32> to vector<8x32xbf16>
    %c5 = arith.constant 5 : index
    %c0_66 = arith.constant 0 : index
    %c0_67 = arith.constant 0 : index
    %134 = vector.load %arg17[%c5, %c0_66, %c0_67] : memref<8x8x32xbf16, #tpu.memory_space<vmem>>, vector<1x8x32xbf16>
    %135 = vector.shape_cast %134 : vector<1x8x32xbf16> to vector<8x32xbf16>
    %c5_68 = arith.constant 5 : index
    %c0_69 = arith.constant 0 : index
    %c0_70 = arith.constant 0 : index
    %136 = vector.load %arg18[%c5_68, %c0_69, %c0_70] : memref<8x8x32xbf16, #tpu.memory_space<vmem>>, vector<1x8x32xbf16>
    %137 = vector.shape_cast %136 : vector<1x8x32xbf16> to vector<8x32xbf16>
    %cst_71 = arith.constant dense<0.000000e+00> : vector<8x8xf32>
    %138 = tpu.matmul %133, %135, %cst_71 {dimension_numbers = #tpu.dot_dimension_numbers<[1], [1], [0], [0], [0, 0, 1, 0], [], []>} : vector<8x32xbf16>, vector<8x32xbf16>, vector<8x8xf32> -> vector<8x8xf32>
    %139 = vector.broadcast %16 : vector<1x8xf32> to vector<8x8xf32>
    %140 = arith.addf %138, %139 : vector<8x8xf32>
    %cst_72 = arith.constant dense<0xFF800000> : vector<8xf32>
    %141 = vector.multi_reduction <maximumf>, %140, %cst_72 [1] : vector<8x8xf32> to vector<8xf32>
    %142 = vector.shape_cast %141 : vector<8xf32> to vector<8x1xf32>
    %143 = vector.broadcast %142 : vector<8x1xf32> to vector<8x8xf32>
    %144 = arith.subf %140, %143 : vector<8x8xf32>
    %145 = math.exp %144 : vector<8x8xf32>
    %cst_73 = arith.constant dense<0.000000e+00> : vector<8xf32>
    %146 = vector.multi_reduction <add>, %145, %cst_73 [1] : vector<8x8xf32> to vector<8xf32>
    %147 = vector.shape_cast %146 : vector<8xf32> to vector<8x1xf32>
    %148 = arith.truncf %145 : vector<8x8xf32> to vector<8x8xbf16>
    %cst_74 = arith.constant dense<0.000000e+00> : vector<8x32xf32>
    %149 = tpu.matmul %148, %137, %cst_74 {dimension_numbers = #tpu.dot_dimension_numbers<[1], [0], [0], [1], [0, 0, 1, 1], [], []>} : vector<8x8xbf16>, vector<8x32xbf16>, vector<8x32xf32> -> vector<8x32xf32>
    %150 = tpu.reciprocal %147 {approx = true} : vector<8x1xf32> -> vector<8x1xf32>
    %151 = vector.broadcast %150 : vector<8x1xf32> to vector<8x32xf32>
    %152 = arith.mulf %149, %151 : vector<8x32xf32>
    %153 = arith.truncf %152 : vector<8x32xf32> to vector<8x32xbf16>
    %c0_75 = arith.constant 0 : index
    %c160 = arith.constant 160 : index
    %154 = vector.load %arg19[%c0_75, %c160] : memref<8x256xbf16, #tpu.memory_space<vmem>>, vector<8x32xbf16>
    tpu.vector_store %arg19[%c0_75, %c160], %153 {strides = array<i32>} : memref<8x256xbf16, #tpu.memory_space<vmem>>, vector<8x32xbf16>,
    %155 = vector.extract_strided_slice %14 {offsets = [0, 192], sizes = [8, 32], strides = [1, 1]} : vector<8x256xf32> to vector<8x32xf32>
    %156 = arith.truncf %155 : vector<8x32xf32> to vector<8x32xbf16>
    %c6 = arith.constant 6 : index
    %c0_76 = arith.constant 0 : index
    %c0_77 = arith.constant 0 : index
    %157 = vector.load %arg17[%c6, %c0_76, %c0_77] : memref<8x8x32xbf16, #tpu.memory_space<vmem>>, vector<1x8x32xbf16>
    %158 = vector.shape_cast %157 : vector<1x8x32xbf16> to vector<8x32xbf16>
    %c6_78 = arith.constant 6 : index
    %c0_79 = arith.constant 0 : index
    %c0_80 = arith.constant 0 : index
    %159 = vector.load %arg18[%c6_78, %c0_79, %c0_80] : memref<8x8x32xbf16, #tpu.memory_space<vmem>>, vector<1x8x32xbf16>
    %160 = vector.shape_cast %159 : vector<1x8x32xbf16> to vector<8x32xbf16>
    %cst_81 = arith.constant dense<0.000000e+00> : vector<8x8xf32>
    %161 = tpu.matmul %156, %158, %cst_81 {dimension_numbers = #tpu.dot_dimension_numbers<[1], [1], [0], [0], [0, 0, 1, 0], [], []>} : vector<8x32xbf16>, vector<8x32xbf16>, vector<8x8xf32> -> vector<8x8xf32>
    %162 = vector.broadcast %16 : vector<1x8xf32> to vector<8x8xf32>
    %163 = arith.addf %161, %162 : vector<8x8xf32>
    %cst_82 = arith.constant dense<0xFF800000> : vector<8xf32>
    %164 = vector.multi_reduction <maximumf>, %163, %cst_82 [1] : vector<8x8xf32> to vector<8xf32>
    %165 = vector.shape_cast %164 : vector<8xf32> to vector<8x1xf32>
    %166 = vector.broadcast %165 : vector<8x1xf32> to vector<8x8xf32>
    %167 = arith.subf %163, %166 : vector<8x8xf32>
    %168 = math.exp %167 : vector<8x8xf32>
    %cst_83 = arith.constant dense<0.000000e+00> : vector<8xf32>
    %169 = vector.multi_reduction <add>, %168, %cst_83 [1] : vector<8x8xf32> to vector<8xf32>
    %170 = vector.shape_cast %169 : vector<8xf32> to vector<8x1xf32>
    %171 = arith.truncf %168 : vector<8x8xf32> to vector<8x8xbf16>
    %cst_84 = arith.constant dense<0.000000e+00> : vector<8x32xf32>
    %172 = tpu.matmul %171, %160, %cst_84 {dimension_numbers = #tpu.dot_dimension_numbers<[1], [0], [0], [1], [0, 0, 1, 1], [], []>} : vector<8x8xbf16>, vector<8x32xbf16>, vector<8x32xf32> -> vector<8x32xf32>
    %173 = tpu.reciprocal %170 {approx = true} : vector<8x1xf32> -> vector<8x1xf32>
    %174 = vector.broadcast %173 : vector<8x1xf32> to vector<8x32xf32>
    %175 = arith.mulf %172, %174 : vector<8x32xf32>
    %176 = arith.truncf %175 : vector<8x32xf32> to vector<8x32xbf16>
    %c0_85 = arith.constant 0 : index
    %c192 = arith.constant 192 : index
    %177 = vector.load %arg19[%c0_85, %c192] : memref<8x256xbf16, #tpu.memory_space<vmem>>, vector<8x32xbf16>
    tpu.vector_store %arg19[%c0_85, %c192], %176 {strides = array<i32>} : memref<8x256xbf16, #tpu.memory_space<vmem>>, vector<8x32xbf16>,
    %178 = vector.extract_strided_slice %14 {offsets = [0, 224], sizes = [8, 32], strides = [1, 1]} : vector<8x256xf32> to vector<8x32xf32>
    %179 = arith.truncf %178 : vector<8x32xf32> to vector<8x32xbf16>
    %c7 = arith.constant 7 : index
    %c0_86 = arith.constant 0 : index
    %c0_87 = arith.constant 0 : index
    %180 = vector.load %arg17[%c7, %c0_86, %c0_87] : memref<8x8x32xbf16, #tpu.memory_space<vmem>>, vector<1x8x32xbf16>
    %181 = vector.shape_cast %180 : vector<1x8x32xbf16> to vector<8x32xbf16>
    %c7_88 = arith.constant 7 : index
    %c0_89 = arith.constant 0 : index
    %c0_90 = arith.constant 0 : index
    %182 = vector.load %arg18[%c7_88, %c0_89, %c0_90] : memref<8x8x32xbf16, #tpu.memory_space<vmem>>, vector<1x8x32xbf16>
    %183 = vector.shape_cast %182 : vector<1x8x32xbf16> to vector<8x32xbf16>
    %cst_91 = arith.constant dense<0.000000e+00> : vector<8x8xf32>
    %184 = tpu.matmul %179, %181, %cst_91 {dimension_numbers = #tpu.dot_dimension_numbers<[1], [1], [0], [0], [0, 0, 1, 0], [], []>} : vector<8x32xbf16>, vector<8x32xbf16>, vector<8x8xf32> -> vector<8x8xf32>
    %185 = vector.broadcast %16 : vector<1x8xf32> to vector<8x8xf32>
    %186 = arith.addf %184, %185 : vector<8x8xf32>
    %cst_92 = arith.constant dense<0xFF800000> : vector<8xf32>
    %187 = vector.multi_reduction <maximumf>, %186, %cst_92 [1] : vector<8x8xf32> to vector<8xf32>
    %188 = vector.shape_cast %187 : vector<8xf32> to vector<8x1xf32>
    %189 = vector.broadcast %188 : vector<8x1xf32> to vector<8x8xf32>
    %190 = arith.subf %186, %189 : vector<8x8xf32>
    %191 = math.exp %190 : vector<8x8xf32>
    %cst_93 = arith.constant dense<0.000000e+00> : vector<8xf32>
    %192 = vector.multi_reduction <add>, %191, %cst_93 [1] : vector<8x8xf32> to vector<8xf32>
    %193 = vector.shape_cast %192 : vector<8xf32> to vector<8x1xf32>
    %194 = arith.truncf %191 : vector<8x8xf32> to vector<8x8xbf16>
    %cst_94 = arith.constant dense<0.000000e+00> : vector<8x32xf32>
    %195 = tpu.matmul %194, %183, %cst_94 {dimension_numbers = #tpu.dot_dimension_numbers<[1], [0], [0], [1], [0, 0, 1, 1], [], []>} : vector<8x8xbf16>, vector<8x32xbf16>, vector<8x32xf32> -> vector<8x32xf32>
    %196 = tpu.reciprocal %193 {approx = true} : vector<8x1xf32> -> vector<8x1xf32>
    %197 = vector.broadcast %196 : vector<8x1xf32> to vector<8x32xf32>
    %198 = arith.mulf %195, %197 : vector<8x32xf32>
    %199 = arith.truncf %198 : vector<8x32xf32> to vector<8x32xbf16>
    %c0_95 = arith.constant 0 : index
    %c224 = arith.constant 224 : index
    %200 = vector.load %arg19[%c0_95, %c224] : memref<8x256xbf16, #tpu.memory_space<vmem>>, vector<8x32xbf16>
    tpu.vector_store %arg19[%c0_95, %c224], %199 {strides = array<i32>} : memref<8x256xbf16, #tpu.memory_space<vmem>>, vector<8x32xbf16>,
    %c0_96 = arith.constant 0 : index
    %c0_97 = arith.constant 0 : index
    %201 = vector.load %arg19[%c0_96, %c0_97] : memref<8x256xbf16, #tpu.memory_space<vmem>>, vector<8x256xbf16>
    %c0_98 = arith.constant 0 : index
    %c0_99 = arith.constant 0 : index
    %202 = vector.load %arg12[%c0_98, %c0_99] : memref<256x256xbf16, #tpu.memory_space<vmem>>, vector<256x256xbf16>
    %cst_100 = arith.constant dense<0.000000e+00> : vector<8x256xf32>
    %203 = tpu.matmul %201, %202, %cst_100 {dimension_numbers = #tpu.dot_dimension_numbers<[1], [0], [0], [1], [0, 0, 1, 1], [], []>} : vector<8x256xbf16>, vector<256x256xbf16>, vector<8x256xf32> -> vector<8x256xf32>
    %c0_101 = arith.constant 0 : index
    %c0_102 = arith.constant 0 : index
    %204 = vector.load %arg13[%c0_101, %c0_102] : memref<1x256xf32, #tpu.memory_space<vmem>>, vector<1x256xf32>
    %205 = vector.broadcast %204 : vector<1x256xf32> to vector<8x256xf32>
    %206 = arith.addf %203, %205 : vector<8x256xf32>
    %c0_103 = arith.constant 0 : index
    %c0_104 = arith.constant 0 : index
    %c0_105 = arith.constant 0 : index
    %207 = vector.load %arg4[%c0_103, %c0_104, %c0_105] : memref<1x8x256xf32, #tpu.memory_space<vmem>>, vector<1x8x256xf32>
    %208 = vector.shape_cast %207 : vector<1x8x256xf32> to vector<8x256xf32>
    %209 = arith.addf %206, %208 : vector<8x256xf32>
    %cst_106 = arith.constant dense<0.000000e+00> : vector<8xf32>
    %210 = vector.multi_reduction <add>, %209, %cst_106 [1] : vector<8x256xf32> to vector<8xf32>
    %211 = vector.shape_cast %210 : vector<8xf32> to vector<8x1xf32>
    %cst_107 = arith.constant 2.560000e+02 : f32
    %212 = vector.broadcast %cst_107 : f32 to vector<8x1xf32>
    %213 = arith.divf %211, %212 : vector<8x1xf32>
    %214 = vector.broadcast %213 : vector<8x1xf32> to vector<8x256xf32>
    %215 = arith.subf %209, %214 : vector<8x256xf32>
    %216 = vector.broadcast %213 : vector<8x1xf32> to vector<8x256xf32>
    %217 = arith.subf %209, %216 : vector<8x256xf32>
    %218 = arith.mulf %215, %217 : vector<8x256xf32>
    %cst_108 = arith.constant dense<0.000000e+00> : vector<8xf32>
    %219 = vector.multi_reduction <add>, %218, %cst_108 [1] : vector<8x256xf32> to vector<8xf32>
    %220 = vector.shape_cast %219 : vector<8xf32> to vector<8x1xf32>
    %cst_109 = arith.constant 2.560000e+02 : f32
    %221 = vector.broadcast %cst_109 : f32 to vector<8x1xf32>
    %222 = arith.divf %220, %221 : vector<8x1xf32>
    %223 = vector.broadcast %213 : vector<8x1xf32> to vector<8x256xf32>
    %224 = arith.subf %209, %223 : vector<8x256xf32>
    %cst_110 = arith.constant 9.99999974E-6 : f32
    %225 = vector.broadcast %cst_110 : f32 to vector<8x1xf32>
    %226 = arith.addf %222, %225 : vector<8x1xf32>
    %227 = math.rsqrt %226 : vector<8x1xf32>
    %228 = vector.broadcast %227 : vector<8x1xf32> to vector<8x256xf32>
    %229 = arith.mulf %224, %228 : vector<8x256xf32>
    %c0_111 = arith.constant 0 : index
    %c0_112 = arith.constant 0 : index
    %230 = vector.load %arg14[%c0_111, %c0_112] : memref<1x256xf32, #tpu.memory_space<vmem>>, vector<1x256xf32>
    %231 = vector.broadcast %230 : vector<1x256xf32> to vector<8x256xf32>
    %232 = arith.mulf %229, %231 : vector<8x256xf32>
    %c0_113 = arith.constant 0 : index
    %c0_114 = arith.constant 0 : index
    %233 = vector.load %arg15[%c0_113, %c0_114] : memref<1x256xf32, #tpu.memory_space<vmem>>, vector<1x256xf32>
    %234 = vector.broadcast %233 : vector<1x256xf32> to vector<8x256xf32>
    %235 = arith.addf %232, %234 : vector<8x256xf32>
    %c0_115 = arith.constant 0 : index
    %c0_116 = arith.constant 0 : index
    %c0_117 = arith.constant 0 : index
    %236 = vector.load %arg16[%c0_115, %c0_116, %c0_117] : memref<1x8x256xf32, #tpu.memory_space<vmem>>, vector<1x8x256xf32>
    %237 = vector.shape_cast %236 : vector<1x8x256xf32> to vector<8x256xf32>
    %238 = vector.shape_cast %235 : vector<8x256xf32> to vector<1x8x256xf32>
    tpu.vector_store %arg16[%c0_115, %c0_116, %c0_117], %238 {strides = array<i32>} : memref<1x8x256xf32, #tpu.memory_space<vmem>>, vector<1x8x256xf32>,
    return
  }
  func.func @transform_0(%arg0: i32, %arg1: i32) -> (i32, i32, i32) {
    %c0_i32 = arith.constant 0 : i32
    %c0_i32_0 = arith.constant 0 : i32
    %c0_i32_1 = arith.constant 0 : i32
    return %arg0, %c0_i32, %c0_i32_0 : i32, i32, i32
  }
  func.func @transform_1(%arg0: i32, %arg1: i32) -> (i32, i32, i32) {
    %c0_i32 = arith.constant 0 : i32
    %c0_i32_0 = arith.constant 0 : i32
    %c0_i32_1 = arith.constant 0 : i32
    return %arg0, %c0_i32, %c0_i32_0 : i32, i32, i32
  }
  func.func @transform_2(%arg0: i32, %arg1: i32) -> (i32, i32, i32) {
    %c0_i32 = arith.constant 0 : i32
    %c0_i32_0 = arith.constant 0 : i32
    return %arg0, %arg1, %c0_i32 : i32, i32, i32
  }
  func.func @transform_3(%arg0: i32, %arg1: i32) -> (i32, i32, i32) {
    %c0_i32 = arith.constant 0 : i32
    %c0_i32_0 = arith.constant 0 : i32
    %c0_i32_1 = arith.constant 0 : i32
    return %arg0, %c0_i32, %c0_i32_0 : i32, i32, i32
  }
  func.func @transform_4(%arg0: i32, %arg1: i32) -> (i32, i32) {
    %c0_i32 = arith.constant 0 : i32
    %c0_i32_0 = arith.constant 0 : i32
    %c0_i32_1 = arith.constant 0 : i32
    return %c0_i32, %c0_i32_0 : i32, i32
  }
  func.func @transform_5(%arg0: i32, %arg1: i32) -> (i32, i32) {
    %c0_i32 = arith.constant 0 : i32
    %c0_i32_0 = arith.constant 0 : i32
    %c0_i32_1 = arith.constant 0 : i32
    return %c0_i32, %c0_i32_0 : i32, i32
  }
  func.func @transform_6(%arg0: i32, %arg1: i32) -> (i32, i32) {
    %c0_i32 = arith.constant 0 : i32
    %c0_i32_0 = arith.constant 0 : i32
    %c0_i32_1 = arith.constant 0 : i32
    return %c0_i32, %c0_i32_0 : i32, i32
  }
  func.func @transform_7(%arg0: i32, %arg1: i32) -> (i32, i32) {
    %c0_i32 = arith.constant 0 : i32
    %c0_i32_0 = arith.constant 0 : i32
    %c0_i32_1 = arith.constant 0 : i32
    return %c0_i32, %c0_i32_0 : i32, i32
  }
  func.func @transform_8(%arg0: i32, %arg1: i32) -> (i32, i32) {
    %c0_i32 = arith.constant 0 : i32
    %c0_i32_0 = arith.constant 0 : i32
    %c0_i32_1 = arith.constant 0 : i32
    return %c0_i32, %c0_i32_0 : i32, i32
  }
  func.func @transform_9(%arg0: i32, %arg1: i32) -> (i32, i32) {
    %c0_i32 = arith.constant 0 : i32
    %c0_i32_0 = arith.constant 0 : i32
    %c0_i32_1 = arith.constant 0 : i32
    return %c0_i32, %c0_i32_0 : i32, i32
  }
  func.func @transform_10(%arg0: i32, %arg1: i32) -> (i32, i32) {
    %c0_i32 = arith.constant 0 : i32
    %c0_i32_0 = arith.constant 0 : i32
    %c0_i32_1 = arith.constant 0 : i32
    return %c0_i32, %c0_i32_0 : i32, i32
  }
  func.func @transform_11(%arg0: i32, %arg1: i32) -> (i32, i32) {
    %c0_i32 = arith.constant 0 : i32
    %c0_i32_0 = arith.constant 0 : i32
    %c0_i32_1 = arith.constant 0 : i32
    return %c0_i32, %c0_i32_0 : i32, i32
  }
  func.func @transform_12(%arg0: i32, %arg1: i32) -> (i32, i32) {
    %c0_i32 = arith.constant 0 : i32
    %c0_i32_0 = arith.constant 0 : i32
    %c0_i32_1 = arith.constant 0 : i32
    return %c0_i32, %c0_i32_0 : i32, i32
  }
  func.func @transform_13(%arg0: i32, %arg1: i32) -> (i32, i32) {
    %c0_i32 = arith.constant 0 : i32
    %c0_i32_0 = arith.constant 0 : i32
    %c0_i32_1 = arith.constant 0 : i32
    return %c0_i32, %c0_i32_0 : i32, i32
  }
  func.func @transform_14(%arg0: i32, %arg1: i32) -> (i32, i32, i32) {
    %c0_i32 = arith.constant 0 : i32
    %c0_i32_0 = arith.constant 0 : i32
    return %arg0, %arg1, %c0_i32 : i32, i32, i32
  }
}

</mosaic_0001>

<llo_original>
// kernel: tpu_custom_call.1
$region0: #{tpu_custom_call.1}
  #allocation0 [shape = 'u32[]', space=smem, size = 0x4, offset = 0x4, fixed_abs, tag = 'smem constant byte address 0x4 - core index']
  #allocation1 [shape = 'u32[144,128]{1,0:T(1,128)}', space=vmem, size = 0x12000, scoped, tag = 'internal scratch']
  #allocation2 [shape = 'bf16[8,8,32]{2,1,0:T(8,128)(2,1)}', space=vmem, size = 0x4000, scoped, tag = 'scratch operand']
  #allocation3 [shape = 'bf16[8,8,32]{2,1,0:T(8,128)(2,1)}', space=vmem, size = 0x4000, scoped, tag = 'scratch operand']
  #allocation4 [shape = 'bf16[8,256]{1,0:T(8,128)(2,1)}', space=vmem, size = 0x1000, scoped, tag = 'scratch operand']
  %s0 = inlined_call_operand.hbm [shape: bf16[2,8,256], index: 0, kind: input, shape index: {}]
  %s1 = inlined_call_operand.hbm [shape: bf16[2,8,256], index: 1, kind: input, shape index: {}]
  %s2 = inlined_call_operand.hbm [shape: f32[2,8,256], index: 2, kind: input, shape index: {}]
  %s3 = inlined_call_operand.vmem [shape: f32[2,1,8], index: 3, kind: input, shape index: {}]
  %s4 = inlined_call_operand.hbm [shape: bf16[256,256], index: 4, kind: input, shape index: {}]
  %s5 = inlined_call_operand.hbm [shape: bf16[256,256], index: 5, kind: input, shape index: {}]
  %s6 = inlined_call_operand.hbm [shape: bf16[256,256], index: 6, kind: input, shape index: {}]
  %s7 = inlined_call_operand.vmem [shape: f32[1,256], index: 7, kind: input, shape index: {}]
  %s8 = inlined_call_operand.vmem [shape: f32[1,256], index: 8, kind: input, shape index: {}]
  %s9 = inlined_call_operand.vmem [shape: f32[1,256], index: 9, kind: input, shape index: {}]
  %s10 = inlined_call_operand.hbm [shape: bf16[256,256], index: 10, kind: input, shape index: {}]
  %s11 = inlined_call_operand.vmem [shape: f32[1,256], index: 11, kind: input, shape index: {}]
  %s12 = inlined_call_operand.vmem [shape: f32[1,256], index: 12, kind: input, shape index: {}]
  %s13 = inlined_call_operand.vmem [shape: f32[1,256], index: 13, kind: input, shape index: {}]
  %s14 = inlined_call_operand.hbm [shape: f32[2,8,256], index: 14, kind: output, shape index: {}]
  %s15 = sld [smem:[#allocation0]]
  $region121: #{tpu_custom_call.1} parent=0
    _
  %s17 = ssub.s32 1, %s15
  %s18 = scalar_select 0, %s17, %s15
  $region1: #{tpu_custom_call.1} parent=0
    #allocation5 [shape = 'u8[8192]{0}', space=vmem, size = 0x2000, scoped, tag = 'input window, operand 0']
    #allocation6 [shape = 's32[2]{0}', space=sflag, size = 0x8, scoped, tag = 'scoped memory for tpu_custom_call.1']
    #allocation7 [shape = 's32[2]{0}', space=sflag, size = 0x8, scoped, tag = 'scoped memory for tpu_custom_call.1']
    #allocation8 [shape = 'u8[8192]{0}', space=vmem, size = 0x2000, scoped, tag = 'input window, operand 1']
    #allocation9 [shape = 's32[2]{0}', space=sflag, size = 0x8, scoped, tag = 'scoped memory for tpu_custom_call.1']
    #allocation10 [shape = 'u8[16384]{0}', space=vmem, size = 0x4000, scoped, tag = 'input window, operand 2']
    #allocation11 [shape = 'u8[131072]{0}', space=vmem, size = 0x20000, scoped, tag = 'input window, operand 4, single buffered']
    #allocation12 [shape = 's32[1]{0}', space=sflag, size = 0x4, scoped, tag = 'scoped memory for tpu_custom_call.1']
    #allocation13 [shape = 'u8[131072]{0}', space=vmem, size = 0x20000, scoped, tag = 'input window, operand 5, single buffered']
    #allocation14 [shape = 'u8[131072]{0}', space=vmem, size = 0x20000, scoped, tag = 'input window, operand 6, single buffered']
    #allocation15 [shape = 's32[1]{0}', space=sflag, size = 0x4, scoped, tag = 'scoped memory for tpu_custom_call.1']
    #allocation16 [shape = 'u8[131072]{0}', space=vmem, size = 0x20000, scoped, tag = 'input window, operand 10, single buffered']
    #allocation17 [shape = 'u8[16384]{0}', space=vmem, size = 0x4000, scoped, tag = 'output window, operand 0']
    %19 = vsyncpa [#allocation6], 0
    %s20 = scalar_lea.sflag [#allocation6], 1
    %21 = vsyncpa %s20, 0
    %22 = vsyncpa [#allocation9], 0
    %s23 = scalar_lea.sflag [#allocation9], 1
    %24 = vsyncpa %s23, 0
    %25 = vsyncpa [#allocation12], 0
    %26 = vsyncpa [#allocation15], 0
    %27 = vsyncpa [#allocation7], 0
    %s28 = scalar_lea.sflag [#allocation7], 1
    %29 = vsyncpa %s28, 0
    loop: start=0, step=1, limit=4
    $region2: #{tpu_custom_call.1} parent=1 // loop_pre_header
      _
    $region3: #{tpu_custom_call.1} parent=1 // loop_header
      %s31 = sphi 0, %s35
      %p32 = scmp.ge.s32.totalorder %s31, 4
      %s38 = sphi 0, %s50
      %s39 = sphi 0, %s46
      %s40 = sphi 0, %s38
      %s41 = sphi 0, %s39
      %s42 = sphi 0, %s40
      %s43 = sphi 0, %s41
      %s53 = sphi 0, %s55
      %s56 = sphi 0, %s53
      %s57 = sphi 0, %s56
      %s73 = sphi 0, %s57
      %s79 = sphi 0, %s81
      %s82 = sphi 0, %s79
      %s83 = sphi 0, %s82
      %s99 = sphi 0, %s83
      %s107 = sphi 0, %s109
      %s110 = sphi 0, %s107
      %s111 = sphi 0, %s110
      %s127 = sphi 0, %s111
      %s133 = sphi 0, %s135
      %s136 = sphi 0, %s133
      %s137 = sphi 0, %s136
      %s153 = sphi 0, %s137
      %s157 = sphi 0, %s157
      %s159 = sphi 0, %s157
      %s160 = sphi 0, %s159
      %s174 = sphi 0, %s160
      %s178 = sphi 0, %s178
      %s180 = sphi 0, %s178
      %s181 = sphi 0, %s180
      %s195 = sphi 0, %s181
      %s199 = sphi 0, %s199
      %s201 = sphi 0, %s199
      %s202 = sphi 0, %s201
      %s216 = sphi 0, %s202
      %s220 = sphi 0, %s220
      %s222 = sphi 0, %s220
      %s223 = sphi 0, %s222
      %s237 = sphi 0, %s223
      %s241 = sphi 0, %s241
      %s243 = sphi 0, %s241
      %s244 = sphi 0, %s243
      %s258 = sphi 0, %s244
      %s262 = sphi 0, %s262
      %s264 = sphi 0, %s262
      %s265 = sphi 0, %s264
      %s279 = sphi 0, %s265
      %s283 = sphi 0, %s283
      %s285 = sphi 0, %s283
      %s286 = sphi 0, %s285
      %s300 = sphi 0, %s286
      %s304 = sphi 0, %s304
      %s306 = sphi 0, %s304
      %s307 = sphi 0, %s306
      %s321 = sphi 0, %s307
      %s325 = sphi 0, %s325
      %s327 = sphi 0, %s325
      %s328 = sphi 0, %s327
      %s342 = sphi 0, %s328
      %s346 = sphi 0, %s346
      %s348 = sphi 0, %s346
      %s349 = sphi 0, %s348
      %s363 = sphi 0, %s349
      %s371 = sphi 0, %s373
      %s374 = sphi 0, %s371
      %s375 = sphi 0, %s374
      %s391 = sphi 0, %s375
    $region4: #{tpu_custom_call.1} parent=1 // loop_header_branch
      %34 = sbr.rel (%p32) target = $region8
    $region5: #{tpu_custom_call.1} parent=1 // loop_body
      %s36 = ssub.s32 %s31, 1
      %s37 = ssub.s32 %s31, 2
      %s44 = sadd.s32 1, %s39
      %p45 = scmp.ge.s32.totalorder %s44, 1
      %s46 = scalar_select %p45, 0, %s44
      %s47 = sadd.s32 1, %s38
      %s48 = scalar_select %p45, %s47, %s38
      %p49 = scmp.ge.s32.totalorder %s48, 2
      %s50 = scalar_select %p49, 0, %s48
      %s51 = ssub.s32 %s38, %s50
      %p52 = scmp.eq.s32.totalorder %s51, 0
      %s54 = sadd.s32 %s53, 1
      %s55 = scalar_select %p52, %s53, %s54
      %p58 = pneg %p52
      %p59 = scmp.eq.s32.totalorder %s31, 1
      %p60 = por %p58, %p59
      %p61 = scmp.ne.s32.totalorder %s53, %s56
      %p62 = scmp.eq.s32.totalorder %s31, 0
      %p63 = por %p61, %p62
      %p64 = scmp.ne.s32.totalorder %s53, %s56
      %p65 = scmp.eq.s32.totalorder %s36, 1
      %p66 = por %p64, %p65
      %p67 = scmp.ne.s32.totalorder %s56, %s57
      %p68 = scmp.eq.s32.totalorder %s36, 0
      %p69 = por %p67, %p68
      %p70 = scmp.ne.s32.totalorder %s56, %s57
      %p71 = scmp.eq.s32.totalorder %s37, 1
      %p72 = por %p70, %p71
      %p74 = scmp.ne.s32.totalorder %s57, %s73
      %p75 = scmp.eq.s32.totalorder %s37, 0
      %p76 = por %p74, %p75
      %s77 = ssub.s32 %s38, %s50
      %p78 = scmp.eq.s32.totalorder %s77, 0
      %s80 = sadd.s32 %s79, 1
      %s81 = scalar_select %p78, %s79, %s80
      %p84 = pneg %p78
      %p85 = scmp.eq.s32.totalorder %s31, 1
      %p86 = por %p84, %p85
      %p87 = scmp.ne.s32.totalorder %s79, %s82
      %p88 = scmp.eq.s32.totalorder %s31, 0
      %p89 = por %p87, %p88
      %p90 = scmp.ne.s32.totalorder %s79, %s82
      %p91 = scmp.eq.s32.totalorder %s36, 1
      %p92 = por %p90, %p91
      %p93 = scmp.ne.s32.totalorder %s82, %s83
      %p94 = scmp.eq.s32.totalorder %s36, 0
      %p95 = por %p93, %p94
      %p96 = scmp.ne.s32.totalorder %s82, %s83
      %p97 = scmp.eq.s32.totalorder %s37, 1
      %p98 = por %p96, %p97
      %p100 = scmp.ne.s32.totalorder %s83, %s99
      %p101 = scmp.eq.s32.totalorder %s37, 0
      %p102 = por %p100, %p101
      %s103 = ssub.s32 %s38, %s50
      %s104 = ssub.s32 %s39, %s46
      %s105 = sor.u32 %s103, %s104
      %p106 = scmp.eq.s32.totalorder %s105, 0
      %s108 = sadd.s32 %s107, 1
      %s109 = scalar_select %p106, %s107, %s108
      %p112 = pneg %p106
      %p113 = scmp.eq.s32.totalorder %s31, 1
      %p114 = por %p112, %p113
      %p115 = scmp.ne.s32.totalorder %s107, %s110
      %p116 = scmp.eq.s32.totalorder %s31, 0
      %p117 = por %p115, %p116
      %p118 = scmp.ne.s32.totalorder %s107, %s110
      %p119 = scmp.eq.s32.totalorder %s36, 1
      %p120 = por %p118, %p119
      %p121 = scmp.ne.s32.totalorder %s110, %s111
      %p122 = scmp.eq.s32.totalorder %s36, 0
      %p123 = por %p121, %p122
      %p124 = scmp.ne.s32.totalorder %s110, %s111
      %p125 = scmp.eq.s32.totalorder %s37, 1
      %p126 = por %p124, %p125
      %p128 = scmp.ne.s32.totalorder %s111, %s127
      %p129 = scmp.eq.s32.totalorder %s37, 0
      %p130 = por %p128, %p129
      %s131 = ssub.s32 %s38, %s50
      %p132 = scmp.eq.s32.totalorder %s131, 0
      %s134 = sadd.s32 %s133, 1
      %s135 = scalar_select %p132, %s133, %s134
      %p138 = pneg %p132
      %p139 = scmp.eq.s32.totalorder %s31, 1
      %p140 = por %p138, %p139
      %p141 = scmp.ne.s32.totalorder %s133, %s136
      %p142 = scmp.eq.s32.totalorder %s31, 0
      %p143 = por %p141, %p142
      %p144 = scmp.ne.s32.totalorder %s133, %s136
      %p145 = scmp.eq.s32.totalorder %s36, 1
      %p146 = por %p144, %p145
      %p147 = scmp.ne.s32.totalorder %s136, %s137
      %p148 = scmp.eq.s32.totalorder %s36, 0
      %p149 = por %p147, %p148
      %p150 = scmp.ne.s32.totalorder %s136, %s137
      %p151 = scmp.eq.s32.totalorder %s37, 1
      %p152 = por %p150, %p151
      %p154 = scmp.ne.s32.totalorder %s137, %s153
      %p155 = scmp.eq.s32.totalorder %s37, 0
      %p156 = por %p154, %p155
      %s158 = sadd.s32 %s157, 1
      %p161 = scmp.eq.s32.totalorder %s31, 1
      %p162 = scmp.ne.s32.totalorder %s157, %s159
      %p163 = scmp.eq.s32.totalorder %s31, 0
      %p164 = por %p162, %p163
      %p165 = scmp.ne.s32.totalorder %s157, %s159
      %p166 = scmp.eq.s32.totalorder %s36, 1
      %p167 = por %p165, %p166
      %p168 = scmp.ne.s32.totalorder %s159, %s160
      %p169 = scmp.eq.s32.totalorder %s36, 0
      %p170 = por %p168, %p169
      %p171 = scmp.ne.s32.totalorder %s159, %s160
      %p172 = scmp.eq.s32.totalorder %s37, 1
      %p173 = por %p171, %p172
      %p175 = scmp.ne.s32.totalorder %s160, %s174
      %p176 = scmp.eq.s32.totalorder %s37, 0
      %p177 = por %p175, %p176
      %s179 = sadd.s32 %s178, 1
      %p182 = scmp.eq.s32.totalorder %s31, 1
      %p183 = scmp.ne.s32.totalorder %s178, %s180
      %p184 = scmp.eq.s32.totalorder %s31, 0
      %p185 = por %p183, %p184
      %p186 = scmp.ne.s32.totalorder %s178, %s180
      %p187 = scmp.eq.s32.totalorder %s36, 1
      %p188 = por %p186, %p187
      %p189 = scmp.ne.s32.totalorder %s180, %s181
      %p190 = scmp.eq.s32.totalorder %s36, 0
      %p191 = por %p189, %p190
      %p192 = scmp.ne.s32.totalorder %s180, %s181
      %p193 = scmp.eq.s32.totalorder %s37, 1
      %p194 = por %p192, %p193
      %p196 = scmp.ne.s32.totalorder %s181, %s195
      %p197 = scmp.eq.s32.totalorder %s37, 0
      %p198 = por %p196, %p197
      %s200 = sadd.s32 %s199, 1
      %p203 = scmp.eq.s32.totalorder %s31, 1
      %p204 = scmp.ne.s32.totalorder %s199, %s201
      %p205 = scmp.eq.s32.totalorder %s31, 0
      %p206 = por %p204, %p205
      %p207 = scmp.ne.s32.totalorder %s199, %s201
      %p208 = scmp.eq.s32.totalorder %s36, 1
      %p209 = por %p207, %p208
      %p210 = scmp.ne.s32.totalorder %s201, %s202
      %p211 = scmp.eq.s32.totalorder %s36, 0
      %p212 = por %p210, %p211
      %p213 = scmp.ne.s32.totalorder %s201, %s202
      %p214 = scmp.eq.s32.totalorder %s37, 1
      %p215 = por %p213, %p214
      %p217 = scmp.ne.s32.totalorder %s202, %s216
      %p218 = scmp.eq.s32.totalorder %s37, 0
      %p219 = por %p217, %p218
      %s221 = sadd.s32 %s220, 1
      %p224 = scmp.eq.s32.totalorder %s31, 1
      %p225 = scmp.ne.s32.totalorder %s220, %s222
      %p226 = scmp.eq.s32.totalorder %s31, 0
      %p227 = por %p225, %p226
      %p228 = scmp.ne.s32.totalorder %s220, %s222
      %p229 = scmp.eq.s32.totalorder %s36, 1
      %p230 = por %p228, %p229
      %p231 = scmp.ne.s32.totalorder %s222, %s223
      %p232 = scmp.eq.s32.totalorder %s36, 0
      %p233 = por %p231, %p232
      %p234 = scmp.ne.s32.totalorder %s222, %s223
      %p235 = scmp.eq.s32.totalorder %s37, 1
      %p236 = por %p234, %p235
      %p238 = scmp.ne.s32.totalorder %s223, %s237
      %p239 = scmp.eq.s32.totalorder %s37, 0
      %p240 = por %p238, %p239
      %s242 = sadd.s32 %s241, 1
      %p245 = scmp.eq.s32.totalorder %s31, 1
      %p246 = scmp.ne.s32.totalorder %s241, %s243
      %p247 = scmp.eq.s32.totalorder %s31, 0
      %p248 = por %p246, %p247
      %p249 = scmp.ne.s32.totalorder %s241, %s243
      %p250 = scmp.eq.s32.totalorder %s36, 1
      %p251 = por %p249, %p250
      %p252 = scmp.ne.s32.totalorder %s243, %s244
      %p253 = scmp.eq.s32.totalorder %s36, 0
      %p254 = por %p252, %p253
      %p255 = scmp.ne.s32.totalorder %s243, %s244
      %p256 = scmp.eq.s32.totalorder %s37, 1
      %p257 = por %p255, %p256
      %p259 = scmp.ne.s32.totalorder %s244, %s258
      %p260 = scmp.eq.s32.totalorder %s37, 0
      %p261 = por %p259, %p260
      %s263 = sadd.s32 %s262, 1
      %p266 = scmp.eq.s32.totalorder %s31, 1
      %p267 = scmp.ne.s32.totalorder %s262, %s264
      %p268 = scmp.eq.s32.totalorder %s31, 0
      %p269 = por %p267, %p268
      %p270 = scmp.ne.s32.totalorder %s262, %s264
      %p271 = scmp.eq.s32.totalorder %s36, 1
      %p272 = por %p270, %p271
      %p273 = scmp.ne.s32.totalorder %s264, %s265
      %p274 = scmp.eq.s32.totalorder %s36, 0
      %p275 = por %p273, %p274
      %p276 = scmp.ne.s32.totalorder %s264, %s265
      %p277 = scmp.eq.s32.totalorder %s37, 1
      %p278 = por %p276, %p277
      %p280 = scmp.ne.s32.totalorder %s265, %s279
      %p281 = scmp.eq.s32.totalorder %s37, 0
      %p282 = por %p280, %p281
      %s284 = sadd.s32 %s283, 1
      %p287 = scmp.eq.s32.totalorder %s31, 1
      %p288 = scmp.ne.s32.totalorder %s283, %s285
      %p289 = scmp.eq.s32.totalorder %s31, 0
      %p290 = por %p288, %p289
      %p291 = scmp.ne.s32.totalorder %s283, %s285
      %p292 = scmp.eq.s32.totalorder %s36, 1
      %p293 = por %p291, %p292
      %p294 = scmp.ne.s32.totalorder %s285, %s286
      %p295 = scmp.eq.s32.totalorder %s36, 0
      %p296 = por %p294, %p295
      %p297 = scmp.ne.s32.totalorder %s285, %s286
      %p298 = scmp.eq.s32.totalorder %s37, 1
      %p299 = por %p297, %p298
      %p301 = scmp.ne.s32.totalorder %s286, %s300
      %p302 = scmp.eq.s32.totalorder %s37, 0
      %p303 = por %p301, %p302
      %s305 = sadd.s32 %s304, 1
      %p308 = scmp.eq.s32.totalorder %s31, 1
      %p309 = scmp.ne.s32.totalorder %s304, %s306
      %p310 = scmp.eq.s32.totalorder %s31, 0
      %p311 = por %p309, %p310
      %p312 = scmp.ne.s32.totalorder %s304, %s306
      %p313 = scmp.eq.s32.totalorder %s36, 1
      %p314 = por %p312, %p313
      %p315 = scmp.ne.s32.totalorder %s306, %s307
      %p316 = scmp.eq.s32.totalorder %s36, 0
      %p317 = por %p315, %p316
      %p318 = scmp.ne.s32.totalorder %s306, %s307
      %p319 = scmp.eq.s32.totalorder %s37, 1
      %p320 = por %p318, %p319
      %p322 = scmp.ne.s32.totalorder %s307, %s321
      %p323 = scmp.eq.s32.totalorder %s37, 0
      %p324 = por %p322, %p323
      %s326 = sadd.s32 %s325, 1
      %p329 = scmp.eq.s32.totalorder %s31, 1
      %p330 = scmp.ne.s32.totalorder %s325, %s327
      %p331 = scmp.eq.s32.totalorder %s31, 0
      %p332 = por %p330, %p331
      %p333 = scmp.ne.s32.totalorder %s325, %s327
      %p334 = scmp.eq.s32.totalorder %s36, 1
      %p335 = por %p333, %p334
      %p336 = scmp.ne.s32.totalorder %s327, %s328
      %p337 = scmp.eq.s32.totalorder %s36, 0
      %p338 = por %p336, %p337
      %p339 = scmp.ne.s32.totalorder %s327, %s328
      %p340 = scmp.eq.s32.totalorder %s37, 1
      %p341 = por %p339, %p340
      %p343 = scmp.ne.s32.totalorder %s328, %s342
      %p344 = scmp.eq.s32.totalorder %s37, 0
      %p345 = por %p343, %p344
      %s347 = sadd.s32 %s346, 1
      %p350 = scmp.eq.s32.totalorder %s31, 1
      %p351 = scmp.ne.s32.totalorder %s346, %s348
      %p352 = scmp.eq.s32.totalorder %s31, 0
      %p353 = por %p351, %p352
      %p354 = scmp.ne.s32.totalorder %s346, %s348
      %p355 = scmp.eq.s32.totalorder %s36, 1
      %p356 = por %p354, %p355
      %p357 = scmp.ne.s32.totalorder %s348, %s349
      %p358 = scmp.eq.s32.totalorder %s36, 0
      %p359 = por %p357, %p358
      %p360 = scmp.ne.s32.totalorder %s348, %s349
      %p361 = scmp.eq.s32.totalorder %s37, 1
      %p362 = por %p360, %p361
      %p364 = scmp.ne.s32.totalorder %s349, %s363
      %p365 = scmp.eq.s32.totalorder %s37, 0
      %p366 = por %p364, %p365
      %s367 = ssub.s32 %s38, %s50
      %s368 = ssub.s32 %s39, %s46
      %s369 = sor.u32 %s367, %s368
      %p370 = scmp.eq.s32.totalorder %s369, 0
      %s372 = sadd.s32 %s371, 1
      %s373 = scalar_select %p370, %s371, %s372
      %p376 = pneg %p370
      %p377 = scmp.eq.s32.totalorder %s31, 1
      %p378 = por %p376, %p377
      %p379 = scmp.ne.s32.totalorder %s371, %s374
      %p380 = scmp.eq.s32.totalorder %s31, 0
      %p381 = por %p379, %p380
      %p382 = scmp.ne.s32.totalorder %s371, %s374
      %p383 = scmp.eq.s32.totalorder %s36, 1
      %p384 = por %p382, %p383
      %p385 = scmp.ne.s32.totalorder %s374, %s375
      %p386 = scmp.eq.s32.totalorder %s36, 0
      %p387 = por %p385, %p386
      %p388 = scmp.ne.s32.totalorder %s374, %s375
      %p389 = scmp.eq.s32.totalorder %s37, 1
      %p390 = por %p388, %p389
      %p392 = scmp.ne.s32.totalorder %s375, %s391
      %p393 = scmp.eq.s32.totalorder %s37, 0
      %p394 = por %p392, %p393
      %p395 = scmp.le.s32.totalorder 1, %s31
      %p396 = scmp.lt.s32.totalorder %s31, 3
      %p397 = pnand %p395, %p396
      %p398 = pneg %p397
      // Predicated region
      $region9: #{tpu_custom_call.1} parent=5 // pred_check
        _
      $region10: #{tpu_custom_call.1} parent=5 // pred_check_branch
        %400 = sbr.rel (%p397) target = $region12
      $region11: #{tpu_custom_call.1} parent=5 // pred_region
        %s401 = ssub.s32 %s31, 1
        // Predicated region
        $region13: #{tpu_custom_call.1} parent=11 // pred_check
          %p402 = pneg %p170
        $region14: #{tpu_custom_call.1} parent=11 // pred_check_branch
          %404 = sbr.rel (%p402) target = $region16
        $region15: #{tpu_custom_call.1} parent=11 // pred_region
          %s406 = ssub.s32 4096, 4096
          %407 = vsyncadd [#allocation12], %s406
          %s408 = sshll.u32 [#allocation11], 4
          %s409 = int_to_ptr.vmem [resolvable:$true] %s408
          %414 = dma.hbm_to_vmem [thread:$0]  %s4, 4096, %s409, [#allocation12], 128, 128, 8
        $region16: #{tpu_custom_call.1} parent=11 // pred_fallthru
          _
        // Predicated region
        $region17: #{tpu_custom_call.1} parent=11 // pred_check
          %p415 = pneg %p191
        $region18: #{tpu_custom_call.1} parent=11 // pred_check_branch
          %417 = sbr.rel (%p415) target = $region20
        $region19: #{tpu_custom_call.1} parent=11 // pred_region
          %s419 = ssub.s32 4096, 4096
          %420 = vsyncadd [#allocation12], %s419
          %s421 = sshll.u32 [#allocation13], 4
          %s422 = int_to_ptr.vmem [resolvable:$true] %s421
          %427 = dma.hbm_to_vmem [thread:$0]  %s5, 4096, %s422, [#allocation12], 128, 128, 8
        $region20: #{tpu_custom_call.1} parent=11 // pred_fallthru
          _
        // Predicated region
        $region21: #{tpu_custom_call.1} parent=11 // pred_check
          %p428 = pneg %p212
        $region22: #{tpu_custom_call.1} parent=11 // pred_check_branch
          %430 = sbr.rel (%p428) target = $region24
        $region23: #{tpu_custom_call.1} parent=11 // pred_region
          %s432 = ssub.s32 4096, 4096
          %433 = vsyncadd [#allocation15], %s432
          %s434 = sshll.u32 [#allocation14], 4
          %s435 = int_to_ptr.vmem [resolvable:$true] %s434
          %440 = dma.hbm_to_vmem [thread:$0]  %s6, 4096, %s435, [#allocation15], 128, 128, 8
        $region24: #{tpu_custom_call.1} parent=11 // pred_fallthru
          _
        // Predicated region
        $region25: #{tpu_custom_call.1} parent=11 // pred_check
          %p441 = pneg %p233
        $region26: #{tpu_custom_call.1} parent=11 // pred_check_branch
          %443 = sbr.rel (%p441) target = $region28
        $region27: #{tpu_custom_call.1} parent=11 // pred_region
          _
        $region28: #{tpu_custom_call.1} parent=11 // pred_fallthru
          _
        // Predicated region
        $region29: #{tpu_custom_call.1} parent=11 // pred_check
          %p444 = pneg %p254
        $region30: #{tpu_custom_call.1} parent=11 // pred_check_branch
          %446 = sbr.rel (%p444) target = $region32
        $region31: #{tpu_custom_call.1} parent=11 // pred_region
          _
        $region32: #{tpu_custom_call.1} parent=11 // pred_fallthru
          _
        // Predicated region
        $region33: #{tpu_custom_call.1} parent=11 // pred_check
          %p447 = pneg %p275
        $region34: #{tpu_custom_call.1} parent=11 // pred_check_branch
          %449 = sbr.rel (%p447) target = $region36
        $region35: #{tpu_custom_call.1} parent=11 // pred_region
          _
        $region36: #{tpu_custom_call.1} parent=11 // pred_fallthru
          _
        // Predicated region
        $region37: #{tpu_custom_call.1} parent=11 // pred_check
          %p450 = pneg %p296
        $region38: #{tpu_custom_call.1} parent=11 // pred_check_branch
          %452 = sbr.rel (%p450) target = $region40
        $region39: #{tpu_custom_call.1} parent=11 // pred_region
          %s454 = ssub.s32 4096, 4096
          %455 = vsyncadd [#allocation15], %s454
          %s456 = sshll.u32 [#allocation16], 4
          %s457 = int_to_ptr.vmem [resolvable:$true] %s456
          %462 = dma.hbm_to_vmem [thread:$0]  %s10, 4096, %s457, [#allocation15], 128, 128, 8
        $region40: #{tpu_custom_call.1} parent=11 // pred_fallthru
          _
        // Predicated region
        $region41: #{tpu_custom_call.1} parent=11 // pred_check
          %p463 = pneg %p317
        $region42: #{tpu_custom_call.1} parent=11 // pred_check_branch
          %465 = sbr.rel (%p463) target = $region44
        $region43: #{tpu_custom_call.1} parent=11 // pred_region
          _
        $region44: #{tpu_custom_call.1} parent=11 // pred_fallthru
          _
        // Predicated region
        $region45: #{tpu_custom_call.1} parent=11 // pred_check
          %p466 = pneg %p338
        $region46: #{tpu_custom_call.1} parent=11 // pred_check_branch
          %468 = sbr.rel (%p466) target = $region48
        $region47: #{tpu_custom_call.1} parent=11 // pred_region
          _
        $region48: #{tpu_custom_call.1} parent=11 // pred_fallthru
          _
        // Predicated region
        $region49: #{tpu_custom_call.1} parent=11 // pred_check
          %p469 = pneg %p359
        $region50: #{tpu_custom_call.1} parent=11 // pred_check_branch
          %471 = sbr.rel (%p469) target = $region52
        $region51: #{tpu_custom_call.1} parent=11 // pred_region
          _
        $region52: #{tpu_custom_call.1} parent=11 // pred_fallthru
          _
      $region12: #{tpu_custom_call.1} parent=5 // pred_fallthru
        _
      %p472 = scmp.lt.s32.totalorder %s31, 2
      // Predicated region
      $region53: #{tpu_custom_call.1} parent=5 // pred_check
        %p473 = pneg %p472
      $region54: #{tpu_custom_call.1} parent=5 // pred_check_branch
        %475 = sbr.rel (%p473) target = $region56
      $region55: #{tpu_custom_call.1} parent=5 // pred_region
        // Predicated region
        $region57: #{tpu_custom_call.1} parent=55 // pred_check
          %p476 = pneg %p63
        $region58: #{tpu_custom_call.1} parent=55 // pred_check_branch
          %478 = sbr.rel (%p476) target = $region60
        $region59: #{tpu_custom_call.1} parent=55 // pred_region
          %s479 = sand.u32 %s53, 1
          %s480 = scalar_lea.sflag [#allocation6], %s479
          %s481 = sand.u32 %s53, 1
          %s482 = smul.addr %s481, 8
          %s483 = scalar_lea.vmem [#allocation5], %s482
          %s485 = ssub.s32 128, 128
          %486 = vsyncadd %s480, %s485
          %s487 = smul.addr %s38, 2
          %s488 = smul.addr %s487, 64
          %s489 = scalar_lea.hbm %s0, %s488
          %s491 = sshll.u32 %s483, 4
          %s492 = int_to_ptr.vmem [resolvable:$true] %s491
          %494 = dma.hbm_to_vmem [thread:$0]  %s489, 128, %s492, %s480
        $region60: #{tpu_custom_call.1} parent=55 // pred_fallthru
          _
        // Predicated region
        $region61: #{tpu_custom_call.1} parent=55 // pred_check
          %p495 = pneg %p89
        $region62: #{tpu_custom_call.1} parent=55 // pred_check_branch
          %497 = sbr.rel (%p495) target = $region64
        $region63: #{tpu_custom_call.1} parent=55 // pred_region
          %s498 = sand.u32 %s31, 1
          %s499 = scalar_lea.sflag [#allocation9], %s498
          %s500 = sand.u32 %s79, 1
          %s501 = smul.addr %s500, 8
          %s502 = scalar_lea.vmem [#allocation8], %s501
          %s504 = ssub.s32 128, 128
          %505 = vsyncadd %s499, %s504
          %s506 = smul.addr %s38, 2
          %s507 = smul.addr %s506, 64
          %s508 = scalar_lea.hbm %s1, %s507
          %s510 = sshll.u32 %s502, 4
          %s511 = int_to_ptr.vmem [resolvable:$true] %s510
          %513 = dma.hbm_to_vmem [thread:$0]  %s508, 128, %s511, %s499
        $region64: #{tpu_custom_call.1} parent=55 // pred_fallthru
          _
        // Predicated region
        $region65: #{tpu_custom_call.1} parent=55 // pred_check
          %p514 = pneg %p117
        $region66: #{tpu_custom_call.1} parent=55 // pred_check_branch
          %516 = sbr.rel (%p514) target = $region68
        $region67: #{tpu_custom_call.1} parent=55 // pred_region
          %s517 = sand.u32 %s31, 1
          %s518 = scalar_lea.sflag [#allocation9], %s517
          %s519 = sand.u32 %s107, 1
          %s520 = smul.addr %s519, 16
          %s521 = scalar_lea.vmem [#allocation10], %s520
          %s523 = ssub.s32 256, 256
          %524 = vsyncadd %s518, %s523
          %s525 = smul.addr %s39, 2
          %s526 = smul.addr %s38, 2
          %s527 = sadd.s32 %s525, %s526
          %s528 = smul.addr %s527, 128
          %s529 = scalar_lea.hbm %s2, %s528
          %s531 = sshll.u32 %s521, 4
          %s532 = int_to_ptr.vmem [resolvable:$true] %s531
          %534 = dma.hbm_to_vmem [thread:$0]  %s529, 256, %s532, %s518
        $region68: #{tpu_custom_call.1} parent=55 // pred_fallthru
          _
        // Predicated region
        $region69: #{tpu_custom_call.1} parent=55 // pred_check
          %p535 = pneg %p143
        $region70: #{tpu_custom_call.1} parent=55 // pred_check_branch
          %537 = sbr.rel (%p535) target = $region72
        $region71: #{tpu_custom_call.1} parent=55 // pred_region
          %p538 = scmp.lt.s32.totalorder %s38, 1
          %s539 = scalar_select %p538, %s38, 1
          %s540 = scalar_lea.vmem %s3, %s539
        $region72: #{tpu_custom_call.1} parent=55 // pred_fallthru
          _
      $region56: #{tpu_custom_call.1} parent=5 // pred_fallthru
        _
      %p541 = scmp.le.s32.totalorder 1, %s31
      %p542 = scmp.lt.s32.totalorder %s31, 3
      %p543 = pnand %p541, %p542
      %p544 = pneg %p543
      // Predicated region
      $region73: #{tpu_custom_call.1} parent=5 // pred_check
        _
      $region74: #{tpu_custom_call.1} parent=5 // pred_check_branch
        %546 = sbr.rel (%p543) target = $region76
      $region75: #{tpu_custom_call.1} parent=5 // pred_region
        %s547 = ssub.s32 %s31, 1
        %s548 = sand.u32 %s56, 1
        %s549 = scalar_lea.sflag [#allocation6], %s548
        %s550 = sand.u32 %s56, 1
        %s551 = smul.addr %s550, 8
        %s552 = scalar_lea.vmem [#allocation5], %s551
        // Predicated region
        $region77: #{tpu_custom_call.1} parent=75 // pred_check
          %p553 = pneg %p69
        $region78: #{tpu_custom_call.1} parent=75 // pred_check_branch
          %555 = sbr.rel (%p553) target = $region80
        $region79: #{tpu_custom_call.1} parent=75 // pred_region
          %556 = dma.done %s549, 128
        $region80: #{tpu_custom_call.1} parent=75 // pred_fallthru
          _
        %s557 = sand.u32 %s36, 1
        %s558 = scalar_lea.sflag [#allocation9], %s557
        %s559 = sand.u32 %s82, 1
        %s560 = smul.addr %s559, 8
        %s561 = scalar_lea.vmem [#allocation8], %s560
        // Predicated region
        $region81: #{tpu_custom_call.1} parent=75 // pred_check
          %p562 = pneg %p95
        $region82: #{tpu_custom_call.1} parent=75 // pred_check_branch
          %564 = sbr.rel (%p562) target = $region84
        $region83: #{tpu_custom_call.1} parent=75 // pred_region
          %565 = dma.done %s558, 128
        $region84: #{tpu_custom_call.1} parent=75 // pred_fallthru
          _
        %s566 = sand.u32 %s36, 1
        %s567 = scalar_lea.sflag [#allocation9], %s566
        %s568 = sand.u32 %s110, 1
        %s569 = smul.addr %s568, 16
        %s570 = scalar_lea.vmem [#allocation10], %s569
        // Predicated region
        $region85: #{tpu_custom_call.1} parent=75 // pred_check
          %p571 = pneg %p123
        $region86: #{tpu_custom_call.1} parent=75 // pred_check_branch
          %573 = sbr.rel (%p571) target = $region88
        $region87: #{tpu_custom_call.1} parent=75 // pred_region
          %574 = dma.done %s567, 256
        $region88: #{tpu_custom_call.1} parent=75 // pred_fallthru
          _
        // Predicated region
        $region89: #{tpu_custom_call.1} parent=75 // pred_check
          %p575 = pneg %p170
        $region90: #{tpu_custom_call.1} parent=75 // pred_check_branch
          %577 = sbr.rel (%p575) target = $region92
        $region91: #{tpu_custom_call.1} parent=75 // pred_region
          %578 = dma.done [#allocation12], 4096
        $region92: #{tpu_custom_call.1} parent=75 // pred_fallthru
          _
        // Predicated region
        $region93: #{tpu_custom_call.1} parent=75 // pred_check
          %p579 = pneg %p191
        $region94: #{tpu_custom_call.1} parent=75 // pred_check_branch
          %581 = sbr.rel (%p579) target = $region96
        $region95: #{tpu_custom_call.1} parent=75 // pred_region
          %582 = dma.done [#allocation12], 4096
        $region96: #{tpu_custom_call.1} parent=75 // pred_fallthru
          _
        // Predicated region
        $region97: #{tpu_custom_call.1} parent=75 // pred_check
          %p583 = pneg %p212
        $region98: #{tpu_custom_call.1} parent=75 // pred_check_branch
          %585 = sbr.rel (%p583) target = $region100
        $region99: #{tpu_custom_call.1} parent=75 // pred_region
          %586 = dma.done [#allocation15], 4096
        $region100: #{tpu_custom_call.1} parent=75 // pred_fallthru
          _
        // Predicated region
        $region101: #{tpu_custom_call.1} parent=75 // pred_check
          %p587 = pneg %p296
        $region102: #{tpu_custom_call.1} parent=75 // pred_check_branch
          %589 = sbr.rel (%p587) target = $region104
        $region103: #{tpu_custom_call.1} parent=75 // pred_region
          %590 = dma.done [#allocation15], 4096
        $region104: #{tpu_custom_call.1} parent=75 // pred_fallthru
          _
        %s591 = sand.u32 %s56, 1
        %s592 = scalar_lea.sflag [#allocation6], %s591
        %s593 = sand.u32 %s56, 1
        %s594 = smul.addr %s593, 8
        %s595 = scalar_lea.vmem [#allocation5], %s594
        %p596 = pneg %p69
        %p597 = pneg %p66
        %s598 = sand.u32 %s36, 1
        %s599 = scalar_lea.sflag [#allocation9], %s598
        %s600 = sand.u32 %s82, 1
        %s601 = smul.addr %s600, 8
        %s602 = scalar_lea.vmem [#allocation8], %s601
        %p603 = pneg %p95
        %p604 = pneg %p92
        %s605 = sand.u32 %s36, 1
        %s606 = scalar_lea.sflag [#allocation9], %s605
        %s607 = sand.u32 %s110, 1
        %s608 = smul.addr %s607, 16
        %s609 = scalar_lea.vmem [#allocation10], %s608
        %p610 = pneg %p123
        %p611 = pneg %p120
        %p612 = scmp.lt.s32.totalorder %s40, 1
        %s613 = scalar_select %p612, %s40, 1
        %s614 = scalar_lea.vmem %s3, %s613
        %p615 = pneg %p149
        %p616 = pneg %p146
        %p617 = pneg %p170
        %p618 = pneg %p167
        %p619 = pneg %p191
        %p620 = pneg %p188
        %p621 = pneg %p212
        %p622 = pneg %p209
        %p623 = pneg %p233
        %p624 = pneg %p230
        %p625 = pneg %p254
        %p626 = pneg %p251
        %p627 = pneg %p275
        %p628 = pneg %p272
        %p629 = pneg %p296
        %p630 = pneg %p293
        %p631 = pneg %p317
        %p632 = pneg %p314
        %p633 = pneg %p338
        %p634 = pneg %p335
        %p635 = pneg %p359
        %p636 = pneg %p356
        %p637 = pneg %p387
        %p638 = pneg %p384
        %s639 = sand.u32 %s374, 1
        %s640 = scalar_lea.sflag [#allocation7], %s639
        %s641 = sand.u32 %s374, 1
        %s642 = smul.addr %s641, 16
        %s643 = scalar_lea.vmem [#allocation17], %s642
        %p644 = scmp.lt.s32.totalorder %s40, 1
        %s645 = scalar_select %p644, %s40, 1
        %s646 = scalar_lea.vmem %s3, %s645
        %p648 = scmp.eq.s32.totalorder %s41, 0
        // Predicated region
        $region105: #{tpu_custom_call.1} parent=75 // pred_check
          %p649 = pneg %p648
        $region106: #{tpu_custom_call.1} parent=75 // pred_check_branch
          %651 = sbr.rel (%p649) target = $region108
        $region107: #{tpu_custom_call.1} parent=75 // pred_region
          %v652 = vld [vmem:[%s552] sm:$0xff]
          %v653 = vld [vmem:[%s561] sm:$0xff]
          %v654 = vadd.bf16 %v652, %v653
          %v655 = vld [vmem:[#allocation13] sm:$0xff]
          %v656 = vld [vmem:[#allocation13 + $0x8] sm:$0xff]
          %v657 = vld [vmem:[#allocation13 + $0x10] sm:$0xff]
          %v658 = vld [vmem:[#allocation13 + $0x18] sm:$0xff]
          %v659 = vld [vmem:[#allocation13 + $0x20] sm:$0xff]
          %v660 = vld [vmem:[#allocation13 + $0x28] sm:$0xff]
          %v661 = vld [vmem:[#allocation13 + $0x30] sm:$0xff]
          %v662 = vld [vmem:[#allocation13 + $0x38] sm:$0xff]
          %v663 = vld [vmem:[#allocation13 + $0x40] sm:$0xff]
          %v664 = vld [vmem:[#allocation13 + $0x48] sm:$0xff]
          %v665 = vld [vmem:[#allocation13 + $0x50] sm:$0xff]
          %v666 = vld [vmem:[#allocation13 + $0x58] sm:$0xff]
          %v667 = vld [vmem:[#allocation13 + $0x60] sm:$0xff]
          %v668 = vld [vmem:[#allocation13 + $0x68] sm:$0xff]
          %v669 = vld [vmem:[#allocation13 + $0x70] sm:$0xff]
          %v670 = vld [vmem:[#allocation13 + $0x78] sm:$0xff]
          %v671 = vld [vmem:[#allocation13 + $0x80] sm:$0xff]
          %v672 = vld [vmem:[#allocation13 + $0x88] sm:$0xff]
          %v673 = vld [vmem:[#allocation13 + $0x90] sm:$0xff]
          %v674 = vld [vmem:[#allocation13 + $0x98] sm:$0xff]
          %v675 = vld [vmem:[#allocation13 + $0xa0] sm:$0xff]
          %v676 = vld [vmem:[#allocation13 + $0xa8] sm:$0xff]
          %v677 = vld [vmem:[#allocation13 + $0xb0] sm:$0xff]
          %v678 = vld [vmem:[#allocation13 + $0xb8] sm:$0xff]
          %v679 = vld [vmem:[#allocation13 + $0xc0] sm:$0xff]
          %v680 = vld [vmem:[#allocation13 + $0xc8] sm:$0xff]
          %v681 = vld [vmem:[#allocation13 + $0xd0] sm:$0xff]
          %v682 = vld [vmem:[#allocation13 + $0xd8] sm:$0xff]
          %v683 = vld [vmem:[#allocation13 + $0xe0] sm:$0xff]
          %v684 = vld [vmem:[#allocation13 + $0xe8] sm:$0xff]
          %v685 = vld [vmem:[#allocation13 + $0xf0] sm:$0xff]
          %v686 = vld [vmem:[#allocation13 + $0xf8] sm:$0xff]
          %v687 = vld [vmem:[%s8] sm:$0x3]
          %v689 = vlaneseq
          %v690 = vshrl.u32 %v689, 7
          %v691 = vsub.s32 0, %v690
          %v692 = vrot.slane %v687, %v691
          %v693 = vlaneseq
          %v694 = vshrl.u32 %v693, 7
          %v695 = vsub.s32 1, %v694
          %v696 = vrot.slane %v687, %v695
          %v700 = vunpack.c.l.b16 %v654
          %v701 = vunpack.c.h.b16 %v654
          %v702 = vpack.c.b16 %v700, %v700
          %v703 = vpack.c.b16 %v701, %v701
          %v738 = vunpack.c.l.b16 %v655
          %v739 = vunpack.c.h.b16 %v655
          %v740 = vunpack.c.l.b16 %v656
          %v741 = vunpack.c.h.b16 %v656
          %v742 = vunpack.c.l.b16 %v657
          %v743 = vunpack.c.h.b16 %v657
          %v744 = vunpack.c.l.b16 %v658
          %v745 = vunpack.c.h.b16 %v658
          %v746 = vunpack.c.l.b16 %v659
          %v747 = vunpack.c.h.b16 %v659
          %v748 = vunpack.c.l.b16 %v660
          %v749 = vunpack.c.h.b16 %v660
          %v750 = vunpack.c.l.b16 %v661
          %v751 = vunpack.c.h.b16 %v661
          %v752 = vunpack.c.l.b16 %v662
          %v753 = vunpack.c.h.b16 %v662
          %v754 = vunpack.c.l.b16 %v663
          %v755 = vunpack.c.h.b16 %v663
          %v756 = vunpack.c.l.b16 %v664
          %v757 = vunpack.c.h.b16 %v664
          %v758 = vunpack.c.l.b16 %v665
          %v759 = vunpack.c.h.b16 %v665
          %v760 = vunpack.c.l.b16 %v666
          %v761 = vunpack.c.h.b16 %v666
          %v762 = vunpack.c.l.b16 %v667
          %v763 = vunpack.c.h.b16 %v667
          %v764 = vunpack.c.l.b16 %v668
          %v765 = vunpack.c.h.b16 %v668
          %v766 = vunpack.c.l.b16 %v669
          %v767 = vunpack.c.h.b16 %v669
          %v768 = vunpack.c.l.b16 %v670
          %v769 = vunpack.c.h.b16 %v670
          %v770 = vunpack.c.l.b16 %v671
          %v771 = vunpack.c.h.b16 %v671
          %v772 = vunpack.c.l.b16 %v672
          %v773 = vunpack.c.h.b16 %v672
          %v774 = vunpack.c.l.b16 %v673
          %v775 = vunpack.c.h.b16 %v673
          %v776 = vunpack.c.l.b16 %v674
          %v777 = vunpack.c.h.b16 %v674
          %v778 = vunpack.c.l.b16 %v675
          %v779 = vunpack.c.h.b16 %v675
          %v780 = vunpack.c.l.b16 %v676
          %v781 = vunpack.c.h.b16 %v676
          %v782 = vunpack.c.l.b16 %v677
          %v783 = vunpack.c.h.b16 %v677
          %v784 = vunpack.c.l.b16 %v678
          %v785 = vunpack.c.h.b16 %v678
          %v786 = vunpack.c.l.b16 %v679
          %v787 = vunpack.c.h.b16 %v679
          %v788 = vunpack.c.l.b16 %v680
          %v789 = vunpack.c.h.b16 %v680
          %v790 = vunpack.c.l.b16 %v681
          %v791 = vunpack.c.h.b16 %v681
          %v792 = vunpack.c.l.b16 %v682
          %v793 = vunpack.c.h.b16 %v682
          %v794 = vunpack.c.l.b16 %v683
          %v795 = vunpack.c.h.b16 %v683
          %v796 = vunpack.c.l.b16 %v684
          %v797 = vunpack.c.h.b16 %v684
          %v798 = vunpack.c.l.b16 %v685
          %v799 = vunpack.c.h.b16 %v685
          %v800 = vunpack.c.l.b16 %v686
          %v801 = vunpack.c.h.b16 %v686
          %v802 = vpack.c.b16 %v740, %v738
          %v803 = vpack.c.b16 %v741, %v739
          %v804 = vpack.c.b16 %v744, %v742
          %v805 = vpack.c.b16 %v745, %v743
          %v806 = vpack.c.b16 %v748, %v746
          %v807 = vpack.c.b16 %v749, %v747
          %v808 = vpack.c.b16 %v752, %v750
          %v809 = vpack.c.b16 %v753, %v751
          %v810 = vpack.c.b16 %v756, %v754
          %v811 = vpack.c.b16 %v757, %v755
          %v812 = vpack.c.b16 %v760, %v758
          %v813 = vpack.c.b16 %v761, %v759
          %v814 = vpack.c.b16 %v764, %v762
          %v815 = vpack.c.b16 %v765, %v763
          %v816 = vpack.c.b16 %v768, %v766
          %v817 = vpack.c.b16 %v769, %v767
          %v818 = vpack.c.b16 %v772, %v770
          %v819 = vpack.c.b16 %v773, %v771
          %v820 = vpack.c.b16 %v776, %v774
          %v821 = vpack.c.b16 %v777, %v775
          %v822 = vpack.c.b16 %v780, %v778
          %v823 = vpack.c.b16 %v781, %v779
          %v824 = vpack.c.b16 %v784, %v782
          %v825 = vpack.c.b16 %v785, %v783
          %v826 = vpack.c.b16 %v788, %v786
          %v827 = vpack.c.b16 %v789, %v787
          %v828 = vpack.c.b16 %v792, %v790
          %v829 = vpack.c.b16 %v793, %v791
          %v830 = vpack.c.b16 %v796, %v794
          %v831 = vpack.c.b16 %v797, %v795
          %v832 = vpack.c.b16 %v800, %v798
          %v833 = vpack.c.b16 %v801, %v799
          %866 = vmatprep.subr.bf16.mxu0 %v817
          %867 = vmatpush1.bf16.msra.mxu0 %v816
          %868 = vmatprep.subr.bf16.mxu0 %v815
          %869 = vmatpush1.bf16.msra.mxu0 %v814
          %870 = vmatprep.subr.bf16.mxu0 %v813
          %871 = vmatpush1.bf16.msra.mxu0 %v812
          %872 = vmatprep.subr.bf16.mxu0 %v811
          %873 = vmatpush1.bf16.msra.mxu0 %v810
          %874 = vmatprep.subr.bf16.mxu0 %v809
          %875 = vmatpush1.bf16.msra.mxu0 %v808
          %876 = vmatprep.subr.bf16.mxu0 %v807
          %877 = vmatpush1.bf16.msra.mxu0 %v806
          %878 = vmatprep.subr.bf16.mxu0 %v805
          %879 = vmatpush1.bf16.msra.mxu0 %v804
          %880 = vmatprep.subr.bf16.mxu0 %v803
          %881 = vmatpush1.bf16.msra.mxu0 %v802
          %882 = vmatprep.subr.bf16.mxu0 %v833
          %883 = vmatpush2.bf16.msra.mxu0 %v832
          %884 = vmatprep.subr.bf16.mxu0 %v831
          %885 = vmatpush2.bf16.msra.mxu0 %v830
          %886 = vmatprep.subr.bf16.mxu0 %v829
          %887 = vmatpush2.bf16.msra.mxu0 %v828
          %888 = vmatprep.subr.bf16.mxu0 %v827
          %889 = vmatpush2.bf16.msra.mxu0 %v826
          %890 = vmatprep.subr.bf16.mxu0 %v825
          %891 = vmatpush2.bf16.msra.mxu0 %v824
          %892 = vmatprep.subr.bf16.mxu0 %v823
          %893 = vmatpush2.bf16.msra.mxu0 %v822
          %894 = vmatprep.subr.bf16.mxu0 %v821
          %895 = vmatpush2.bf16.msra.mxu0 %v820
          %896 = vmatprep.subr.bf16.mxu0 %v819
          %897 = vmatpush2.bf16.msra.mxu0 %v818
          %898 = vmatprep.mubr.bf16.mxu0 %v703
          %899 = vmatmul.mubr.bf16.gmra.mxu0 %v702
          %v900 = vpop.f32.mrf.mxu0
          %v901 = vadd.f32 %v692, %v900
          %v902 = vpop.f32.mrf.mxu0
          %v903 = vadd.f32 %v696, %v902
          %v904 = vpop.f32.mrf.mxu0
          %v905 = vpop.f32.mrf.mxu0
          %906 = vdwg.mxu0
          %v907 = vld [vmem:[#allocation14] sm:$0xff]
          %v908 = vld [vmem:[#allocation14 + $0x8] sm:$0xff]
          %v909 = vld [vmem:[#allocation14 + $0x10] sm:$0xff]
          %v910 = vld [vmem:[#allocation14 + $0x18] sm:$0xff]
          %v911 = vld [vmem:[#allocation14 + $0x20] sm:$0xff]
          %v912 = vld [vmem:[#allocation14 + $0x28] sm:$0xff]
          %v913 = vld [vmem:[#allocation14 + $0x30] sm:$0xff]
          %v914 = vld [vmem:[#allocation14 + $0x38] sm:$0xff]
          %v915 = vld [vmem:[#allocation14 + $0x40] sm:$0xff]
          %v916 = vld [vmem:[#allocation14 + $0x48] sm:$0xff]
          %v917 = vld [vmem:[#allocation14 + $0x50] sm:$0xff]
          %v918 = vld [vmem:[#allocation14 + $0x58] sm:$0xff]
          %v919 = vld [vmem:[#allocation14 + $0x60] sm:$0xff]
          %v920 = vld [vmem:[#allocation14 + $0x68] sm:$0xff]
          %v921 = vld [vmem:[#allocation14 + $0x70] sm:$0xff]
          %v922 = vld [vmem:[#allocation14 + $0x78] sm:$0xff]
          %v923 = vld [vmem:[#allocation14 + $0x80] sm:$0xff]
          %v924 = vld [vmem:[#allocation14 + $0x88] sm:$0xff]
          %v925 = vld [vmem:[#allocation14 + $0x90] sm:$0xff]
          %v926 = vld [vmem:[#allocation14 + $0x98] sm:$0xff]
          %v927 = vld [vmem:[#allocation14 + $0xa0] sm:$0xff]
          %v928 = vld [vmem:[#allocation14 + $0xa8] sm:$0xff]
          %v929 = vld [vmem:[#allocation14 + $0xb0] sm:$0xff]
          %v930 = vld [vmem:[#allocation14 + $0xb8] sm:$0xff]
          %v931 = vld [vmem:[#allocation14 + $0xc0] sm:$0xff]
          %v932 = vld [vmem:[#allocation14 + $0xc8] sm:$0xff]
          %v933 = vld [vmem:[#allocation14 + $0xd0] sm:$0xff]
          %v934 = vld [vmem:[#allocation14 + $0xd8] sm:$0xff]
          %v935 = vld [vmem:[#allocation14 + $0xe0] sm:$0xff]
          %v936 = vld [vmem:[#allocation14 + $0xe8] sm:$0xff]
          %v937 = vld [vmem:[#allocation14 + $0xf0] sm:$0xff]
          %v938 = vld [vmem:[#allocation14 + $0xf8] sm:$0xff]
          %v939 = vld [vmem:[%s9] sm:$0x3]
          %v941 = vlaneseq
          %v942 = vshrl.u32 %v941, 7
          %v943 = vsub.s32 0, %v942
          %v944 = vrot.slane %v939, %v943
          %v945 = vlaneseq
          %v946 = vshrl.u32 %v945, 7
          %v947 = vsub.s32 1, %v946
          %v948 = vrot.slane %v939, %v947
          %v952 = vunpack.c.l.b16 %v652
          %v953 = vunpack.c.h.b16 %v652
          %v954 = vpack.c.b16 %v952, %v952
          %v955 = vpack.c.b16 %v953, %v953
          %v990 = vunpack.c.l.b16 %v907
          %v991 = vunpack.c.h.b16 %v907
          %v992 = vunpack.c.l.b16 %v908
          %v993 = vunpack.c.h.b16 %v908
          %v994 = vunpack.c.l.b16 %v909
          %v995 = vunpack.c.h.b16 %v909
          %v996 = vunpack.c.l.b16 %v910
          %v997 = vunpack.c.h.b16 %v910
          %v998 = vunpack.c.l.b16 %v911
          %v999 = vunpack.c.h.b16 %v911
          %v1000 = vunpack.c.l.b16 %v912
          %v1001 = vunpack.c.h.b16 %v912
          %v1002 = vunpack.c.l.b16 %v913
          %v1003 = vunpack.c.h.b16 %v913
          %v1004 = vunpack.c.l.b16 %v914
          %v1005 = vunpack.c.h.b16 %v914
          %v1006 = vunpack.c.l.b16 %v915
          %v1007 = vunpack.c.h.b16 %v915
          %v1008 = vunpack.c.l.b16 %v916
          %v1009 = vunpack.c.h.b16 %v916
          %v1010 = vunpack.c.l.b16 %v917
          %v1011 = vunpack.c.h.b16 %v917
          %v1012 = vunpack.c.l.b16 %v918
          %v1013 = vunpack.c.h.b16 %v918
          %v1014 = vunpack.c.l.b16 %v919
          %v1015 = vunpack.c.h.b16 %v919
          %v1016 = vunpack.c.l.b16 %v920
          %v1017 = vunpack.c.h.b16 %v920
          %v1018 = vunpack.c.l.b16 %v921
          %v1019 = vunpack.c.h.b16 %v921
          %v1020 = vunpack.c.l.b16 %v922
          %v1021 = vunpack.c.h.b16 %v922
          %v1022 = vunpack.c.l.b16 %v923
          %v1023 = vunpack.c.h.b16 %v923
          %v1024 = vunpack.c.l.b16 %v924
          %v1025 = vunpack.c.h.b16 %v924
          %v1026 = vunpack.c.l.b16 %v925
          %v1027 = vunpack.c.h.b16 %v925
          %v1028 = vunpack.c.l.b16 %v926
          %v1029 = vunpack.c.h.b16 %v926
          %v1030 = vunpack.c.l.b16 %v927
          %v1031 = vunpack.c.h.b16 %v927
          %v1032 = vunpack.c.l.b16 %v928
          %v1033 = vunpack.c.h.b16 %v928
          %v1034 = vunpack.c.l.b16 %v929
          %v1035 = vunpack.c.h.b16 %v929
          %v1036 = vunpack.c.l.b16 %v930
          %v1037 = vunpack.c.h.b16 %v930
          %v1038 = vunpack.c.l.b16 %v931
          %v1039 = vunpack.c.h.b16 %v931
          %v1040 = vunpack.c.l.b16 %v932
          %v1041 = vunpack.c.h.b16 %v932
          %v1042 = vunpack.c.l.b16 %v933
          %v1043 = vunpack.c.h.b16 %v933
          %v1044 = vunpack.c.l.b16 %v934
          %v1045 = vunpack.c.h.b16 %v934
          %v1046 = vunpack.c.l.b16 %v935
          %v1047 = vunpack.c.h.b16 %v935
          %v1048 = vunpack.c.l.b16 %v936
          %v1049 = vunpack.c.h.b16 %v936
          %v1050 = vunpack.c.l.b16 %v937
          %v1051 = vunpack.c.h.b16 %v937
          %v1052 = vunpack.c.l.b16 %v938
          %v1053 = vunpack.c.h.b16 %v938
          %v1054 = vpack.c.b16 %v992, %v990
          %v1055 = vpack.c.b16 %v993, %v991
          %v1056 = vpack.c.b16 %v996, %v994
          %v1057 = vpack.c.b16 %v997, %v995
          %v1058 = vpack.c.b16 %v1000, %v998
          %v1059 = vpack.c.b16 %v1001, %v999
          %v1060 = vpack.c.b16 %v1004, %v1002
          %v1061 = vpack.c.b16 %v1005, %v1003
          %v1062 = vpack.c.b16 %v1008, %v1006
          %v1063 = vpack.c.b16 %v1009, %v1007
          %v1064 = vpack.c.b16 %v1012, %v1010
          %v1065 = vpack.c.b16 %v1013, %v1011
          %v1066 = vpack.c.b16 %v1016, %v1014
          %v1067 = vpack.c.b16 %v1017, %v1015
          %v1068 = vpack.c.b16 %v1020, %v1018
          %v1069 = vpack.c.b16 %v1021, %v1019
          %v1070 = vpack.c.b16 %v1024, %v1022
          %v1071 = vpack.c.b16 %v1025, %v1023
          %v1072 = vpack.c.b16 %v1028, %v1026
          %v1073 = vpack.c.b16 %v1029, %v1027
          %v1074 = vpack.c.b16 %v1032, %v1030
          %v1075 = vpack.c.b16 %v1033, %v1031
          %v1076 = vpack.c.b16 %v1036, %v1034
          %v1077 = vpack.c.b16 %v1037, %v1035
          %v1078 = vpack.c.b16 %v1040, %v1038
          %v1079 = vpack.c.b16 %v1041, %v1039
          %v1080 = vpack.c.b16 %v1044, %v1042
          %v1081 = vpack.c.b16 %v1045, %v1043
          %v1082 = vpack.c.b16 %v1048, %v1046
          %v1083 = vpack.c.b16 %v1049, %v1047
          %v1084 = vpack.c.b16 %v1052, %v1050
          %v1085 = vpack.c.b16 %v1053, %v1051
          %1118 = vmatprep.subr.bf16.mxu0 %v1069
          %1119 = vmatpush1.bf16.msra.mxu0 %v1068
          %1120 = vmatprep.subr.bf16.mxu0 %v1067
          %1121 = vmatpush1.bf16.msra.mxu0 %v1066
          %1122 = vmatprep.subr.bf16.mxu0 %v1065
          %1123 = vmatpush1.bf16.msra.mxu0 %v1064
          %1124 = vmatprep.subr.bf16.mxu0 %v1063
          %1125 = vmatpush1.bf16.msra.mxu0 %v1062
          %1126 = vmatprep.subr.bf16.mxu0 %v1061
          %1127 = vmatpush1.bf16.msra.mxu0 %v1060
          %1128 = vmatprep.subr.bf16.mxu0 %v1059
          %1129 = vmatpush1.bf16.msra.mxu0 %v1058
          %1130 = vmatprep.subr.bf16.mxu0 %v1057
          %1131 = vmatpush1.bf16.msra.mxu0 %v1056
          %1132 = vmatprep.subr.bf16.mxu0 %v1055
          %1133 = vmatpush1.bf16.msra.mxu0 %v1054
          %1134 = vmatprep.subr.bf16.mxu0 %v1085
          %1135 = vmatpush2.bf16.msra.mxu0 %v1084
          %1136 = vmatprep.subr.bf16.mxu0 %v1083
          %1137 = vmatpush2.bf16.msra.mxu0 %v1082
          %1138 = vmatprep.subr.bf16.mxu0 %v1081
          %1139 = vmatpush2.bf16.msra.mxu0 %v1080
          %1140 = vmatprep.subr.bf16.mxu0 %v1079
          %1141 = vmatpush2.bf16.msra.mxu0 %v1078
          %1142 = vmatprep.subr.bf16.mxu0 %v1077
          %1143 = vmatpush2.bf16.msra.mxu0 %v1076
          %1144 = vmatprep.subr.bf16.mxu0 %v1075
          %1145 = vmatpush2.bf16.msra.mxu0 %v1074
          %1146 = vmatprep.subr.bf16.mxu0 %v1073
          %1147 = vmatpush2.bf16.msra.mxu0 %v1072
          %1148 = vmatprep.subr.bf16.mxu0 %v1071
          %1149 = vmatpush2.bf16.msra.mxu0 %v1070
          %1150 = vmatprep.mubr.bf16.mxu0 %v955
          %1151 = vmatmul.mubr.bf16.gmra.mxu0 %v954
          %v1152 = vpop.f32.mrf.mxu0
          %v1153 = vadd.f32 %v944, %v1152
          %v1154 = vpop.f32.mrf.mxu0
          %v1155 = vadd.f32 %v948, %v1154
          %v1156 = vpop.f32.mrf.mxu0
          %v1157 = vpop.f32.mrf.mxu0
          %1158 = vdwg.mxu0
          %v1159 = vpack.c.bf16 %v901, %v901
          %v1160 = vpack.c.bf16 %v903, %v903
          %v1161 = vpack.c.bf16 %v1153, %v1153
          %v1162 = vpack.c.bf16 %v1155, %v1155
          %vm1163 = vcmask 257024
          %1164 = vst.msk [vmem:[#allocation2] sm:$0xf] %vm1163, %v1159
          %1165 = vst.msk [vmem:[#allocation3] sm:$0xf] %vm1163, %v1161
          %v1167 = vunpack.c.l.b16 %v1159
          %v1168 = vpack.c.b16 %v1167, %v1167
          %1169 = vrot.lane.b32.xlu0 %v1168, 96
          %v1170 = vpop.permute.xlu0 %1169
          %s1172 = scalar_lea.vmem [#allocation2], 4
          %1173 = vst.msk [vmem:[%s1172] sm:$0xf] %vm1163, %v1170
          %v1175 = vunpack.c.l.b16 %v1161
          %v1176 = vpack.c.b16 %v1175, %v1175
          %1177 = vrot.lane.b32.xlu0 %v1176, 96
          %v1178 = vpop.permute.xlu0 %1177
          %s1180 = scalar_lea.vmem [#allocation3], 4
          %1181 = vst.msk [vmem:[%s1180] sm:$0xf] %vm1163, %v1178
          %1182 = vrot.lane.b32.xlu0 %v1168, 64
          %v1183 = vpop.permute.xlu0 %1182
          %s1185 = scalar_lea.vmem [#allocation2], 8
          %1186 = vst.msk [vmem:[%s1185] sm:$0xf] %vm1163, %v1183
          %1187 = vrot.lane.b32.xlu0 %v1176, 64
          %v1188 = vpop.permute.xlu0 %1187
          %s1190 = scalar_lea.vmem [#allocation3], 8
          %1191 = vst.msk [vmem:[%s1190] sm:$0xf] %vm1163, %v1188
          %1192 = vrot.lane.b32.xlu0 %v1168, 32
          %v1193 = vpop.permute.xlu0 %1192
          %s1195 = scalar_lea.vmem [#allocation2], 12
          %1196 = vst.msk [vmem:[%s1195] sm:$0xf] %vm1163, %v1193
          %1197 = vrot.lane.b32.xlu0 %v1176, 32
          %v1198 = vpop.permute.xlu0 %1197
          %s1200 = scalar_lea.vmem [#allocation3], 12
          %1201 = vst.msk [vmem:[%s1200] sm:$0xf] %vm1163, %v1198
          %s1202 = scalar_lea.vmem [#allocation2], 16
          %1203 = vst.msk [vmem:[%s1202] sm:$0xf] %vm1163, %v1160
          %s1204 = scalar_lea.vmem [#allocation3], 16
          %1205 = vst.msk [vmem:[%s1204] sm:$0xf] %vm1163, %v1162
          %v1207 = vunpack.c.l.b16 %v1160
          %v1208 = vpack.c.b16 %v1207, %v1207
          %1209 = vrot.lane.b32.xlu0 %v1208, 96
          %v1210 = vpop.permute.xlu0 %1209
          %s1212 = scalar_lea.vmem [#allocation2], 20
          %1213 = vst.msk [vmem:[%s1212] sm:$0xf] %vm1163, %v1210
          %v1215 = vunpack.c.l.b16 %v1162
          %v1216 = vpack.c.b16 %v1215, %v1215
          %1217 = vrot.lane.b32.xlu0 %v1216, 96
          %v1218 = vpop.permute.xlu0 %1217
          %s1220 = scalar_lea.vmem [#allocation3], 20
          %1221 = vst.msk [vmem:[%s1220] sm:$0xf] %vm1163, %v1218
          %1222 = vrot.lane.b32.xlu0 %v1208, 64
          %v1223 = vpop.permute.xlu0 %1222
          %s1225 = scalar_lea.vmem [#allocation2], 24
          %1226 = vst.msk [vmem:[%s1225] sm:$0xf] %vm1163, %v1223
          %1227 = vrot.lane.b32.xlu0 %v1216, 64
          %v1228 = vpop.permute.xlu0 %1227
          %s1230 = scalar_lea.vmem [#allocation3], 24
          %1231 = vst.msk [vmem:[%s1230] sm:$0xf] %vm1163, %v1228
          %1232 = vrot.lane.b32.xlu0 %v1208, 32
          %v1233 = vpop.permute.xlu0 %1232
          %s1235 = scalar_lea.vmem [#allocation2], 28
          %1236 = vst.msk [vmem:[%s1235] sm:$0xf] %vm1163, %v1233
          %1237 = vrot.lane.b32.xlu0 %v1216, 32
          %v1238 = vpop.permute.xlu0 %1237
          %s1240 = scalar_lea.vmem [#allocation3], 28
          %1241 = vst.msk [vmem:[%s1240] sm:$0xf] %vm1163, %v1238
        $region108: #{tpu_custom_call.1} parent=75 // pred_fallthru
          _
        %v1242 = vld [vmem:[%s552] sm:$0xff]
        %v1243 = vld [vmem:[%s561] sm:$0xff]
        %v1244 = vadd.bf16 %v1242, %v1243
        %v1245 = vld [vmem:[#allocation11] sm:$0xff]
        %v1246 = vld [vmem:[#allocation11 + $0x8] sm:$0xff]
        %v1247 = vld [vmem:[#allocation11 + $0x10] sm:$0xff]
        %v1248 = vld [vmem:[#allocation11 + $0x18] sm:$0xff]
        %v1249 = vld [vmem:[#allocation11 + $0x20] sm:$0xff]
        %v1250 = vld [vmem:[#allocation11 + $0x28] sm:$0xff]
        %v1251 = vld [vmem:[#allocation11 + $0x30] sm:$0xff]
        %v1252 = vld [vmem:[#allocation11 + $0x38] sm:$0xff]
        %v1253 = vld [vmem:[#allocation11 + $0x40] sm:$0xff]
        %v1254 = vld [vmem:[#allocation11 + $0x48] sm:$0xff]
        %v1255 = vld [vmem:[#allocation11 + $0x50] sm:$0xff]
        %v1256 = vld [vmem:[#allocation11 + $0x58] sm:$0xff]
        %v1257 = vld [vmem:[#allocation11 + $0x60] sm:$0xff]
        %v1258 = vld [vmem:[#allocation11 + $0x68] sm:$0xff]
        %v1259 = vld [vmem:[#allocation11 + $0x70] sm:$0xff]
        %v1260 = vld [vmem:[#allocation11 + $0x78] sm:$0xff]
        %v1261 = vld [vmem:[#allocation11 + $0x80] sm:$0xff]
        %v1262 = vld [vmem:[#allocation11 + $0x88] sm:$0xff]
        %v1263 = vld [vmem:[#allocation11 + $0x90] sm:$0xff]
        %v1264 = vld [vmem:[#allocation11 + $0x98] sm:$0xff]
        %v1265 = vld [vmem:[#allocation11 + $0xa0] sm:$0xff]
        %v1266 = vld [vmem:[#allocation11 + $0xa8] sm:$0xff]
        %v1267 = vld [vmem:[#allocation11 + $0xb0] sm:$0xff]
        %v1268 = vld [vmem:[#allocation11 + $0xb8] sm:$0xff]
        %v1269 = vld [vmem:[#allocation11 + $0xc0] sm:$0xff]
        %v1270 = vld [vmem:[#allocation11 + $0xc8] sm:$0xff]
        %v1271 = vld [vmem:[#allocation11 + $0xd0] sm:$0xff]
        %v1272 = vld [vmem:[#allocation11 + $0xd8] sm:$0xff]
        %v1273 = vld [vmem:[#allocation11 + $0xe0] sm:$0xff]
        %v1274 = vld [vmem:[#allocation11 + $0xe8] sm:$0xff]
        %v1275 = vld [vmem:[#allocation11 + $0xf0] sm:$0xff]
        %v1276 = vld [vmem:[#allocation11 + $0xf8] sm:$0xff]
        %v1277 = vld [vmem:[%s7] sm:$0x3]
        %v1279 = vlaneseq
        %v1280 = vshrl.u32 %v1279, 7
        %v1281 = vsub.s32 0, %v1280
        %v1282 = vrot.slane %v1277, %v1281
        %v1283 = vlaneseq
        %v1284 = vshrl.u32 %v1283, 7
        %v1285 = vsub.s32 1, %v1284
        %v1286 = vrot.slane %v1277, %v1285
        %v1290 = vunpack.c.l.b16 %v1244
        %v1291 = vunpack.c.h.b16 %v1244
        %v1292 = vpack.c.b16 %v1290, %v1290
        %v1293 = vpack.c.b16 %v1291, %v1291
        %v1328 = vunpack.c.l.b16 %v1245
        %v1329 = vunpack.c.h.b16 %v1245
        %v1330 = vunpack.c.l.b16 %v1246
        %v1331 = vunpack.c.h.b16 %v1246
        %v1332 = vunpack.c.l.b16 %v1247
        %v1333 = vunpack.c.h.b16 %v1247
        %v1334 = vunpack.c.l.b16 %v1248
        %v1335 = vunpack.c.h.b16 %v1248
        %v1336 = vunpack.c.l.b16 %v1249
        %v1337 = vunpack.c.h.b16 %v1249
        %v1338 = vunpack.c.l.b16 %v1250
        %v1339 = vunpack.c.h.b16 %v1250
        %v1340 = vunpack.c.l.b16 %v1251
        %v1341 = vunpack.c.h.b16 %v1251
        %v1342 = vunpack.c.l.b16 %v1252
        %v1343 = vunpack.c.h.b16 %v1252
        %v1344 = vunpack.c.l.b16 %v1253
        %v1345 = vunpack.c.h.b16 %v1253
        %v1346 = vunpack.c.l.b16 %v1254
        %v1347 = vunpack.c.h.b16 %v1254
        %v1348 = vunpack.c.l.b16 %v1255
        %v1349 = vunpack.c.h.b16 %v1255
        %v1350 = vunpack.c.l.b16 %v1256
        %v1351 = vunpack.c.h.b16 %v1256
        %v1352 = vunpack.c.l.b16 %v1257
        %v1353 = vunpack.c.h.b16 %v1257
        %v1354 = vunpack.c.l.b16 %v1258
        %v1355 = vunpack.c.h.b16 %v1258
        %v1356 = vunpack.c.l.b16 %v1259
        %v1357 = vunpack.c.h.b16 %v1259
        %v1358 = vunpack.c.l.b16 %v1260
        %v1359 = vunpack.c.h.b16 %v1260
        %v1360 = vunpack.c.l.b16 %v1261
        %v1361 = vunpack.c.h.b16 %v1261
        %v1362 = vunpack.c.l.b16 %v1262
        %v1363 = vunpack.c.h.b16 %v1262
        %v1364 = vunpack.c.l.b16 %v1263
        %v1365 = vunpack.c.h.b16 %v1263
        %v1366 = vunpack.c.l.b16 %v1264
        %v1367 = vunpack.c.h.b16 %v1264
        %v1368 = vunpack.c.l.b16 %v1265
        %v1369 = vunpack.c.h.b16 %v1265
        %v1370 = vunpack.c.l.b16 %v1266
        %v1371 = vunpack.c.h.b16 %v1266
        %v1372 = vunpack.c.l.b16 %v1267
        %v1373 = vunpack.c.h.b16 %v1267
        %v1374 = vunpack.c.l.b16 %v1268
        %v1375 = vunpack.c.h.b16 %v1268
        %v1376 = vunpack.c.l.b16 %v1269
        %v1377 = vunpack.c.h.b16 %v1269
        %v1378 = vunpack.c.l.b16 %v1270
        %v1379 = vunpack.c.h.b16 %v1270
        %v1380 = vunpack.c.l.b16 %v1271
        %v1381 = vunpack.c.h.b16 %v1271
        %v1382 = vunpack.c.l.b16 %v1272
        %v1383 = vunpack.c.h.b16 %v1272
        %v1384 = vunpack.c.l.b16 %v1273
        %v1385 = vunpack.c.h.b16 %v1273
        %v1386 = vunpack.c.l.b16 %v1274
        %v1387 = vunpack.c.h.b16 %v1274
        %v1388 = vunpack.c.l.b16 %v1275
        %v1389 = vunpack.c.h.b16 %v1275
        %v1390 = vunpack.c.l.b16 %v1276
        %v1391 = vunpack.c.h.b16 %v1276
        %v1392 = vpack.c.b16 %v1330, %v1328
        %v1393 = vpack.c.b16 %v1331, %v1329
        %v1394 = vpack.c.b16 %v1334, %v1332
        %v1395 = vpack.c.b16 %v1335, %v1333
        %v1396 = vpack.c.b16 %v1338, %v1336
        %v1397 = vpack.c.b16 %v1339, %v1337
        %v1398 = vpack.c.b16 %v1342, %v1340
        %v1399 = vpack.c.b16 %v1343, %v1341
        %v1400 = vpack.c.b16 %v1346, %v1344
        %v1401 = vpack.c.b16 %v1347, %v1345
        %v1402 = vpack.c.b16 %v1350, %v1348
        %v1403 = vpack.c.b16 %v1351, %v1349
        %v1404 = vpack.c.b16 %v1354, %v1352
        %v1405 = vpack.c.b16 %v1355, %v1353
        %v1406 = vpack.c.b16 %v1358, %v1356
        %v1407 = vpack.c.b16 %v1359, %v1357
        %v1408 = vpack.c.b16 %v1362, %v1360
        %v1409 = vpack.c.b16 %v1363, %v1361
        %v1410 = vpack.c.b16 %v1366, %v1364
        %v1411 = vpack.c.b16 %v1367, %v1365
        %v1412 = vpack.c.b16 %v1370, %v1368
        %v1413 = vpack.c.b16 %v1371, %v1369
        %v1414 = vpack.c.b16 %v1374, %v1372
        %v1415 = vpack.c.b16 %v1375, %v1373
        %v1416 = vpack.c.b16 %v1378, %v1376
        %v1417 = vpack.c.b16 %v1379, %v1377
        %v1418 = vpack.c.b16 %v1382, %v1380
        %v1419 = vpack.c.b16 %v1383, %v1381
        %v1420 = vpack.c.b16 %v1386, %v1384
        %v1421 = vpack.c.b16 %v1387, %v1385
        %v1422 = vpack.c.b16 %v1390, %v1388
        %v1423 = vpack.c.b16 %v1391, %v1389
        %1456 = vmatprep.subr.bf16.mxu0 %v1407
        %1457 = vmatpush1.bf16.msra.mxu0 %v1406
        %1458 = vmatprep.subr.bf16.mxu0 %v1405
        %1459 = vmatpush1.bf16.msra.mxu0 %v1404
        %1460 = vmatprep.subr.bf16.mxu0 %v1403
        %1461 = vmatpush1.bf16.msra.mxu0 %v1402
        %1462 = vmatprep.subr.bf16.mxu0 %v1401
        %1463 = vmatpush1.bf16.msra.mxu0 %v1400
        %1464 = vmatprep.subr.bf16.mxu0 %v1399
        %1465 = vmatpush1.bf16.msra.mxu0 %v1398
        %1466 = vmatprep.subr.bf16.mxu0 %v1397
        %1467 = vmatpush1.bf16.msra.mxu0 %v1396
        %1468 = vmatprep.subr.bf16.mxu0 %v1395
        %1469 = vmatpush1.bf16.msra.mxu0 %v1394
        %1470 = vmatprep.subr.bf16.mxu0 %v1393
        %1471 = vmatpush1.bf16.msra.mxu0 %v1392
        %1472 = vmatprep.subr.bf16.mxu0 %v1423
        %1473 = vmatpush2.bf16.msra.mxu0 %v1422
        %1474 = vmatprep.subr.bf16.mxu0 %v1421
        %1475 = vmatpush2.bf16.msra.mxu0 %v1420
        %1476 = vmatprep.subr.bf16.mxu0 %v1419
        %1477 = vmatpush2.bf16.msra.mxu0 %v1418
        %1478 = vmatprep.subr.bf16.mxu0 %v1417
        %1479 = vmatpush2.bf16.msra.mxu0 %v1416
        %1480 = vmatprep.subr.bf16.mxu0 %v1415
        %1481 = vmatpush2.bf16.msra.mxu0 %v1414
        %1482 = vmatprep.subr.bf16.mxu0 %v1413
        %1483 = vmatpush2.bf16.msra.mxu0 %v1412
        %1484 = vmatprep.subr.bf16.mxu0 %v1411
        %1485 = vmatpush2.bf16.msra.mxu0 %v1410
        %1486 = vmatprep.subr.bf16.mxu0 %v1409
        %1487 = vmatpush2.bf16.msra.mxu0 %v1408
        %1488 = vmatprep.mubr.bf16.mxu0 %v1293
        %1489 = vmatmul.mubr.bf16.gmra.mxu0 %v1292
        %v1490 = vpop.f32.mrf.mxu0
        %v1491 = vadd.f32 %v1282, %v1490
        %v1492 = vpop.f32.mrf.mxu0
        %v1493 = vadd.f32 %v1286, %v1492
        %v1494 = vpop.f32.mrf.mxu0
        %v1495 = vpop.f32.mrf.mxu0
        %1496 = vdwg.mxu0
        %v1497 = vmul.f32 %v1491, 0.17677669
        %v1498 = vmul.f32 %v1493, 0.17677669
        %v1499 = vld [vmem:[%s646] sm:$0x1]
        %v1500 = vpack.c.bf16 %v1497, %v1497
        %v1501 = vld [vmem:[#allocation2] sm:$0xf]
        %v1502 = vld [vmem:[#allocation3] sm:$0xf]
        %v1504 = vlaneseq
        %v1505 = vshrl.u32 %v1504, 7
        %v1506 = vsub.s32 0, %v1505
        %v1507 = vrot.slane %v1499, %v1506
        %vm1509 = vcmask 261120
        %v1511 = vsel %vm1509, %v1500, 0
        %v1514 = vsel %vm1509, %v1501, 0
        %1516 = vmatprep.subr.bf16.mxu0 0
        %1517 = vmatpush1.bf16.xpose.msra.mxu0 0
        %1518 = vmatprep.subr.bf16.mxu0 0
        %1519 = vmatpush1.bf16.xpose.msra.mxu0 0
        %1520 = vmatprep.subr.bf16.mxu0 0
        %1521 = vmatpush1.bf16.xpose.msra.mxu0 0
        %1522 = vmatprep.subr.bf16.mxu0 0
        %1523 = vmatpush1.bf16.xpose.msra.mxu0 0
        %1524 = vmatprep.subr.bf16.mxu0 0
        %1525 = vmatpush1.bf16.xpose.msra.mxu0 0
        %1526 = vmatprep.subr.bf16.mxu0 0
        %1527 = vmatpush1.bf16.xpose.msra.mxu0 0
        %1528 = vmatprep.subr.bf16.mxu0 0
        %1529 = vmatpush1.bf16.xpose.msra.mxu0 0
        %1530 = vmatprep.subr.bf16.mxu0 0
        %1531 = vmatpush1.bf16.xpose.msra.mxu0 %v1514
        %1532 = vmatprep.subr.bf16.mxu0 0
        %1533 = vmatpush2.bf16.xpose.msra.mxu0 0
        %1534 = vmatprep.subr.bf16.mxu0 0
        %1535 = vmatpush2.bf16.xpose.msra.mxu0 0
        %1536 = vmatprep.subr.bf16.mxu0 0
        %1537 = vmatpush2.bf16.xpose.msra.mxu0 0
        %1538 = vmatprep.subr.bf16.mxu0 0
        %1539 = vmatpush2.bf16.xpose.msra.mxu0 0
        %1540 = vmatprep.subr.bf16.mxu0 0
        %1541 = vmatpush2.bf16.xpose.msra.mxu0 0
        %1542 = vmatprep.subr.bf16.mxu0 0
        %1543 = vmatpush2.bf16.xpose.msra.mxu0 0
        %1544 = vmatprep.subr.bf16.mxu0 0
        %1545 = vmatpush2.bf16.xpose.msra.mxu0 0
        %1546 = vmatprep.subr.bf16.mxu0 0
        %1547 = vmatpush2.bf16.xpose.msra.mxu0 0
        %1548 = vmatprep.mubr.bf16.mxu0 0
        %1549 = vmatmul.mubr.bf16.gmra.mxu0 %v1511
        %v1550 = vpop.f32.mrf.mxu0
        %v1551 = vadd.f32 %v1507, %v1550
        %v1552 = vpop.f32.mrf.mxu0
        %v1553 = vpop.f32.mrf.mxu0
        %v1554 = vpop.f32.mrf.mxu0
        %1555 = vdwg.mxu0
        %vm1556 = vcmask 64512
        %v1557 = vsel %vm1556, %v1551, -inf
        %1558 = vmax.xlane.f32.xlu0 %v1557
        %v1559 = vpop.xlane.xlu0 %1558
        %v1560 = vsub.f32 %v1551, %v1559
        %v1561 = vmul.f32 %v1560, 1.442695
        %v1562 = vpow.pop %v1561
        %v1563 = vsel %vm1556, %v1562, 0.0
        %1564 = vadd.xlane.f32.xlu0 %v1563
        %v1565 = vpop.xlane.xlu0 %1564
        %v1566 = vpack.c.bf16 %v1562, %v1562
        %v1568 = vsel %vm1556, %v1566, 0
        %vm1570 = vcmask 1043456
        %v1572 = vsel %vm1570, %v1502, 0
        %1574 = vmatprep.subr.bf16.mxu0 0
        %1575 = vmatpush1.bf16.msra.mxu0 0
        %1576 = vmatprep.subr.bf16.mxu0 0
        %1577 = vmatpush1.bf16.msra.mxu0 0
        %1578 = vmatprep.subr.bf16.mxu0 0
        %1579 = vmatpush1.bf16.msra.mxu0 0
        %1580 = vmatprep.subr.bf16.mxu0 0
        %1581 = vmatpush1.bf16.msra.mxu0 0
        %1582 = vmatprep.subr.bf16.mxu0 0
        %1583 = vmatpush1.bf16.msra.mxu0 0
        %1584 = vmatprep.subr.bf16.mxu0 0
        %1585 = vmatpush1.bf16.msra.mxu0 0
        %1586 = vmatprep.subr.bf16.mxu0 0
        %1587 = vmatpush1.bf16.msra.mxu0 0
        %1588 = vmatprep.subr.bf16.mxu0 0
        %1589 = vmatpush1.bf16.msra.mxu0 %v1572
        %1590 = vmatprep.subr.bf16.mxu0 0
        %1591 = vmatpush2.bf16.msra.mxu0 0
        %1592 = vmatprep.subr.bf16.mxu0 0
        %1593 = vmatpush2.bf16.msra.mxu0 0
        %1594 = vmatprep.subr.bf16.mxu0 0
        %1595 = vmatpush2.bf16.msra.mxu0 0
        %1596 = vmatprep.subr.bf16.mxu0 0
        %1597 = vmatpush2.bf16.msra.mxu0 0
        %1598 = vmatprep.subr.bf16.mxu0 0
        %1599 = vmatpush2.bf16.msra.mxu0 0
        %1600 = vmatprep.subr.bf16.mxu0 0
        %1601 = vmatpush2.bf16.msra.mxu0 0
        %1602 = vmatprep.subr.bf16.mxu0 0
        %1603 = vmatpush2.bf16.msra.mxu0 0
        %1604 = vmatprep.subr.bf16.mxu0 0
        %1605 = vmatpush2.bf16.msra.mxu0 0
        %1606 = vmatprep.mubr.bf16.mxu0 0
        %1607 = vmatmul.mubr.bf16.gmra.mxu0 %v1568
        %v1608 = vpop.f32.mrf.mxu0
        %v1609 = vadd.f32 0.0, %v1608
        %v1610 = vpop.f32.mrf.mxu0
        %v1611 = vpop.f32.mrf.mxu0
        %v1612 = vpop.f32.mrf.mxu0
        %1613 = vdwg.mxu0
        %v1614 = vrcp.pop %v1565
        %v1615 = vmul.f32 %v1609, %v1614
        %v1616 = vpack.c.bf16 %v1615, %v1615
        %vm1617 = vcmask 257024
        %1618 = vst.msk [vmem:[#allocation4] sm:$0xf] %vm1617, %v1616
        %s1619 = scalar_lea.vmem [#allocation2], 4
        %v1620 = vld [vmem:[%s1619] sm:$0xf]
        %s1621 = scalar_lea.vmem [#allocation3], 4
        %v1622 = vld [vmem:[%s1621] sm:$0xf]
        %1624 = vrot.lane.b32.xlu0 %v1500, 96
        %v1625 = vpop.permute.xlu0 %1624
        %v1627 = vsel %vm1509, %v1625, 0
        %v1630 = vsel %vm1509, %v1620, 0
        %1632 = vmatprep.subr.bf16.mxu0 0
        %1633 = vmatpush1.bf16.xpose.msra.mxu0 0
        %1634 = vmatprep.subr.bf16.mxu0 0
        %1635 = vmatpush1.bf16.xpose.msra.mxu0 0
        %1636 = vmatprep.subr.bf16.mxu0 0
        %1637 = vmatpush1.bf16.xpose.msra.mxu0 0
        %1638 = vmatprep.subr.bf16.mxu0 0
        %1639 = vmatpush1.bf16.xpose.msra.mxu0 0
        %1640 = vmatprep.subr.bf16.mxu0 0
        %1641 = vmatpush1.bf16.xpose.msra.mxu0 0
        %1642 = vmatprep.subr.bf16.mxu0 0
        %1643 = vmatpush1.bf16.xpose.msra.mxu0 0
        %1644 = vmatprep.subr.bf16.mxu0 0
        %1645 = vmatpush1.bf16.xpose.msra.mxu0 0
        %1646 = vmatprep.subr.bf16.mxu0 0
        %1647 = vmatpush1.bf16.xpose.msra.mxu0 %v1630
        %1648 = vmatprep.subr.bf16.mxu0 0
        %1649 = vmatpush2.bf16.xpose.msra.mxu0 0
        %1650 = vmatprep.subr.bf16.mxu0 0
        %1651 = vmatpush2.bf16.xpose.msra.mxu0 0
        %1652 = vmatprep.subr.bf16.mxu0 0
        %1653 = vmatpush2.bf16.xpose.msra.mxu0 0
        %1654 = vmatprep.subr.bf16.mxu0 0
        %1655 = vmatpush2.bf16.xpose.msra.mxu0 0
        %1656 = vmatprep.subr.bf16.mxu0 0
        %1657 = vmatpush2.bf16.xpose.msra.mxu0 0
        %1658 = vmatprep.subr.bf16.mxu0 0
        %1659 = vmatpush2.bf16.xpose.msra.mxu0 0
        %1660 = vmatprep.subr.bf16.mxu0 0
        %1661 = vmatpush2.bf16.xpose.msra.mxu0 0
        %1662 = vmatprep.subr.bf16.mxu0 0
        %1663 = vmatpush2.bf16.xpose.msra.mxu0 0
        %1664 = vmatprep.mubr.bf16.mxu0 0
        %1665 = vmatmul.mubr.bf16.gmra.mxu0 %v1627
        %v1666 = vpop.f32.mrf.mxu0
        %v1667 = vadd.f32 %v1507, %v1666
        %v1668 = vpop.f32.mrf.mxu0
        %v1669 = vpop.f32.mrf.mxu0
        %v1670 = vpop.f32.mrf.mxu0
        %1671 = vdwg.mxu0
        %v1672 = vsel %vm1556, %v1667, -inf
        %1673 = vmax.xlane.f32.xlu0 %v1672
        %v1674 = vpop.xlane.xlu0 %1673
        %v1675 = vsub.f32 %v1667, %v1674
        %v1676 = vmul.f32 %v1675, 1.442695
        %v1677 = vpow.pop %v1676
        %v1678 = vsel %vm1556, %v1677, 0.0
        %1679 = vadd.xlane.f32.xlu0 %v1678
        %v1680 = vpop.xlane.xlu0 %1679
        %v1681 = vpack.c.bf16 %v1677, %v1677
        %v1683 = vsel %vm1556, %v1681, 0
        %v1686 = vsel %vm1570, %v1622, 0
        %1688 = vmatprep.subr.bf16.mxu0 0
        %1689 = vmatpush1.bf16.msra.mxu0 0
        %1690 = vmatprep.subr.bf16.mxu0 0
        %1691 = vmatpush1.bf16.msra.mxu0 0
        %1692 = vmatprep.subr.bf16.mxu0 0
        %1693 = vmatpush1.bf16.msra.mxu0 0
        %1694 = vmatprep.subr.bf16.mxu0 0
        %1695 = vmatpush1.bf16.msra.mxu0 0
        %1696 = vmatprep.subr.bf16.mxu0 0
        %1697 = vmatpush1.bf16.msra.mxu0 0
        %1698 = vmatprep.subr.bf16.mxu0 0
        %1699 = vmatpush1.bf16.msra.mxu0 0
        %1700 = vmatprep.subr.bf16.mxu0 0
        %1701 = vmatpush1.bf16.msra.mxu0 0
        %1702 = vmatprep.subr.bf16.mxu0 0
        %1703 = vmatpush1.bf16.msra.mxu0 %v1686
        %1704 = vmatprep.subr.bf16.mxu0 0
        %1705 = vmatpush2.bf16.msra.mxu0 0
        %1706 = vmatprep.subr.bf16.mxu0 0
        %1707 = vmatpush2.bf16.msra.mxu0 0
        %1708 = vmatprep.subr.bf16.mxu0 0
        %1709 = vmatpush2.bf16.msra.mxu0 0
        %1710 = vmatprep.subr.bf16.mxu0 0
        %1711 = vmatpush2.bf16.msra.mxu0 0
        %1712 = vmatprep.subr.bf16.mxu0 0
        %1713 = vmatpush2.bf16.msra.mxu0 0
        %1714 = vmatprep.subr.bf16.mxu0 0
        %1715 = vmatpush2.bf16.msra.mxu0 0
        %1716 = vmatprep.subr.bf16.mxu0 0
        %1717 = vmatpush2.bf16.msra.mxu0 0
        %1718 = vmatprep.subr.bf16.mxu0 0
        %1719 = vmatpush2.bf16.msra.mxu0 0
        %1720 = vmatprep.mubr.bf16.mxu0 0
        %1721 = vmatmul.mubr.bf16.gmra.mxu0 %v1683
        %v1722 = vpop.f32.mrf.mxu0
        %v1723 = vadd.f32 0.0, %v1722
        %v1724 = vpop.f32.mrf.mxu0
        %v1725 = vpop.f32.mrf.mxu0
        %v1726 = vpop.f32.mrf.mxu0
        %1727 = vdwg.mxu0
        %v1728 = vrcp.pop %v1680
        %v1729 = vmul.f32 %v1723, %v1728
        %v1730 = vpack.c.bf16 %v1729, %v1729
        %v1732 = vunpack.c.l.b16 %v1730
        %v1733 = vpack.c.b16 %v1732, %v1732
        %1734 = vrot.lane.b32.xlu0 %v1733, 32
        %v1735 = vpop.permute.xlu0 %1734
        %vm1737 = vcmask 519424
        %1738 = vst.msk [vmem:[#allocation4] sm:$0xf] %vm1737, %v1735
        %s1739 = scalar_lea.vmem [#allocation2], 8
        %v1740 = vld [vmem:[%s1739] sm:$0xf]
        %s1741 = scalar_lea.vmem [#allocation3], 8
        %v1742 = vld [vmem:[%s1741] sm:$0xf]
        %1743 = vrot.lane.b32.xlu0 %v1500, 64
        %v1744 = vpop.permute.xlu0 %1743
        %v1746 = vsel %vm1509, %v1744, 0
        %v1749 = vsel %vm1509, %v1740, 0
        %1751 = vmatprep.subr.bf16.mxu0 0
        %1752 = vmatpush1.bf16.xpose.msra.mxu0 0
        %1753 = vmatprep.subr.bf16.mxu0 0
        %1754 = vmatpush1.bf16.xpose.msra.mxu0 0
        %1755 = vmatprep.subr.bf16.mxu0 0
        %1756 = vmatpush1.bf16.xpose.msra.mxu0 0
        %1757 = vmatprep.subr.bf16.mxu0 0
        %1758 = vmatpush1.bf16.xpose.msra.mxu0 0
        %1759 = vmatprep.subr.bf16.mxu0 0
        %1760 = vmatpush1.bf16.xpose.msra.mxu0 0
        %1761 = vmatprep.subr.bf16.mxu0 0
        %1762 = vmatpush1.bf16.xpose.msra.mxu0 0
        %1763 = vmatprep.subr.bf16.mxu0 0
        %1764 = vmatpush1.bf16.xpose.msra.mxu0 0
        %1765 = vmatprep.subr.bf16.mxu0 0
        %1766 = vmatpush1.bf16.xpose.msra.mxu0 %v1749
        %1767 = vmatprep.subr.bf16.mxu0 0
        %1768 = vmatpush2.bf16.xpose.msra.mxu0 0
        %1769 = vmatprep.subr.bf16.mxu0 0
        %1770 = vmatpush2.bf16.xpose.msra.mxu0 0
        %1771 = vmatprep.subr.bf16.mxu0 0
        %1772 = vmatpush2.bf16.xpose.msra.mxu0 0
        %1773 = vmatprep.subr.bf16.mxu0 0
        %1774 = vmatpush2.bf16.xpose.msra.mxu0 0
        %1775 = vmatprep.subr.bf16.mxu0 0
        %1776 = vmatpush2.bf16.xpose.msra.mxu0 0
        %1777 = vmatprep.subr.bf16.mxu0 0
        %1778 = vmatpush2.bf16.xpose.msra.mxu0 0
        %1779 = vmatprep.subr.bf16.mxu0 0
        %1780 = vmatpush2.bf16.xpose.msra.mxu0 0
        %1781 = vmatprep.subr.bf16.mxu0 0
        %1782 = vmatpush2.bf16.xpose.msra.mxu0 0
        %1783 = vmatprep.mubr.bf16.mxu0 0
        %1784 = vmatmul.mubr.bf16.gmra.mxu0 %v1746
        %v1785 = vpop.f32.mrf.mxu0
        %v1786 = vadd.f32 %v1507, %v1785
        %v1787 = vpop.f32.mrf.mxu0
        %v1788 = vpop.f32.mrf.mxu0
        %v1789 = vpop.f32.mrf.mxu0
        %1790 = vdwg.mxu0
        %v1791 = vsel %vm1556, %v1786, -inf
        %1792 = vmax.xlane.f32.xlu0 %v1791
        %v1793 = vpop.xlane.xlu0 %1792
        %v1794 = vsub.f32 %v1786, %v1793
        %v1795 = vmul.f32 %v1794, 1.442695
        %v1796 = vpow.pop %v1795
        %v1797 = vsel %vm1556, %v1796, 0.0
        %1798 = vadd.xlane.f32.xlu0 %v1797
        %v1799 = vpop.xlane.xlu0 %1798
        %v1800 = vpack.c.bf16 %v1796, %v1796
        %v1802 = vsel %vm1556, %v1800, 0
        %v1805 = vsel %vm1570, %v1742, 0
        %1807 = vmatprep.subr.bf16.mxu0 0
        %1808 = vmatpush1.bf16.msra.mxu0 0
        %1809 = vmatprep.subr.bf16.mxu0 0
        %1810 = vmatpush1.bf16.msra.mxu0 0
        %1811 = vmatprep.subr.bf16.mxu0 0
        %1812 = vmatpush1.bf16.msra.mxu0 0
        %1813 = vmatprep.subr.bf16.mxu0 0
        %1814 = vmatpush1.bf16.msra.mxu0 0
        %1815 = vmatprep.subr.bf16.mxu0 0
        %1816 = vmatpush1.bf16.msra.mxu0 0
        %1817 = vmatprep.subr.bf16.mxu0 0
        %1818 = vmatpush1.bf16.msra.mxu0 0
        %1819 = vmatprep.subr.bf16.mxu0 0
        %1820 = vmatpush1.bf16.msra.mxu0 0
        %1821 = vmatprep.subr.bf16.mxu0 0
        %1822 = vmatpush1.bf16.msra.mxu0 %v1805
        %1823 = vmatprep.subr.bf16.mxu0 0
        %1824 = vmatpush2.bf16.msra.mxu0 0
        %1825 = vmatprep.subr.bf16.mxu0 0
        %1826 = vmatpush2.bf16.msra.mxu0 0
        %1827 = vmatprep.subr.bf16.mxu0 0
        %1828 = vmatpush2.bf16.msra.mxu0 0
        %1829 = vmatprep.subr.bf16.mxu0 0
        %1830 = vmatpush2.bf16.msra.mxu0 0
        %1831 = vmatprep.subr.bf16.mxu0 0
        %1832 = vmatpush2.bf16.msra.mxu0 0
        %1833 = vmatprep.subr.bf16.mxu0 0
        %1834 = vmatpush2.bf16.msra.mxu0 0
        %1835 = vmatprep.subr.bf16.mxu0 0
        %1836 = vmatpush2.bf16.msra.mxu0 0
        %1837 = vmatprep.subr.bf16.mxu0 0
        %1838 = vmatpush2.bf16.msra.mxu0 0
        %1839 = vmatprep.mubr.bf16.mxu0 0
        %1840 = vmatmul.mubr.bf16.gmra.mxu0 %v1802
        %v1841 = vpop.f32.mrf.mxu0
        %v1842 = vadd.f32 0.0, %v1841
        %v1843 = vpop.f32.mrf.mxu0
        %v1844 = vpop.f32.mrf.mxu0
        %v1845 = vpop.f32.mrf.mxu0
        %1846 = vdwg.mxu0
        %v1847 = vrcp.pop %v1799
        %v1848 = vmul.f32 %v1842, %v1847
        %v1849 = vpack.c.bf16 %v1848, %v1848
        %v1851 = vunpack.c.l.b16 %v1849
        %v1852 = vpack.c.b16 %v1851, %v1851
        %1853 = vrot.lane.b32.xlu0 %v1852, 64
        %v1854 = vpop.permute.xlu0 %1853
        %vm1856 = vcmask 781824
        %1857 = vst.msk [vmem:[#allocation4] sm:$0xf] %vm1856, %v1854
        %s1858 = scalar_lea.vmem [#allocation2], 12
        %v1859 = vld [vmem:[%s1858] sm:$0xf]
        %s1860 = scalar_lea.vmem [#allocation3], 12
        %v1861 = vld [vmem:[%s1860] sm:$0xf]
        %1862 = vrot.lane.b32.xlu0 %v1500, 32
        %v1863 = vpop.permute.xlu0 %1862
        %v1865 = vsel %vm1509, %v1863, 0
        %v1868 = vsel %vm1509, %v1859, 0
        %1870 = vmatprep.subr.bf16.mxu0 0
        %1871 = vmatpush1.bf16.xpose.msra.mxu0 0
        %1872 = vmatprep.subr.bf16.mxu0 0
        %1873 = vmatpush1.bf16.xpose.msra.mxu0 0
        %1874 = vmatprep.subr.bf16.mxu0 0
        %1875 = vmatpush1.bf16.xpose.msra.mxu0 0
        %1876 = vmatprep.subr.bf16.mxu0 0
        %1877 = vmatpush1.bf16.xpose.msra.mxu0 0
        %1878 = vmatprep.subr.bf16.mxu0 0
        %1879 = vmatpush1.bf16.xpose.msra.mxu0 0
        %1880 = vmatprep.subr.bf16.mxu0 0
        %1881 = vmatpush1.bf16.xpose.msra.mxu0 0
        %1882 = vmatprep.subr.bf16.mxu0 0
        %1883 = vmatpush1.bf16.xpose.msra.mxu0 0
        %1884 = vmatprep.subr.bf16.mxu0 0
        %1885 = vmatpush1.bf16.xpose.msra.mxu0 %v1868
        %1886 = vmatprep.subr.bf16.mxu0 0
        %1887 = vmatpush2.bf16.xpose.msra.mxu0 0
        %1888 = vmatprep.subr.bf16.mxu0 0
        %1889 = vmatpush2.bf16.xpose.msra.mxu0 0
        %1890 = vmatprep.subr.bf16.mxu0 0
        %1891 = vmatpush2.bf16.xpose.msra.mxu0 0
        %1892 = vmatprep.subr.bf16.mxu0 0
        %1893 = vmatpush2.bf16.xpose.msra.mxu0 0
        %1894 = vmatprep.subr.bf16.mxu0 0
        %1895 = vmatpush2.bf16.xpose.msra.mxu0 0
        %1896 = vmatprep.subr.bf16.mxu0 0
        %1897 = vmatpush2.bf16.xpose.msra.mxu0 0
        %1898 = vmatprep.subr.bf16.mxu0 0
        %1899 = vmatpush2.bf16.xpose.msra.mxu0 0
        %1900 = vmatprep.subr.bf16.mxu0 0
        %1901 = vmatpush2.bf16.xpose.msra.mxu0 0
        %1902 = vmatprep.mubr.bf16.mxu0 0
        %1903 = vmatmul.mubr.bf16.gmra.mxu0 %v1865
        %v1904 = vpop.f32.mrf.mxu0
        %v1905 = vadd.f32 %v1507, %v1904
        %v1906 = vpop.f32.mrf.mxu0
        %v1907 = vpop.f32.mrf.mxu0
        %v1908 = vpop.f32.mrf.mxu0
        %1909 = vdwg.mxu0
        %v1910 = vsel %vm1556, %v1905, -inf
        %1911 = vmax.xlane.f32.xlu0 %v1910
        %v1912 = vpop.xlane.xlu0 %1911
        %v1913 = vsub.f32 %v1905, %v1912
        %v1914 = vmul.f32 %v1913, 1.442695
        %v1915 = vpow.pop %v1914
        %v1916 = vsel %vm1556, %v1915, 0.0
        %1917 = vadd.xlane.f32.xlu0 %v1916
        %v1918 = vpop.xlane.xlu0 %1917
        %v1919 = vpack.c.bf16 %v1915, %v1915
        %v1921 = vsel %vm1556, %v1919, 0
        %v1924 = vsel %vm1570, %v1861, 0
        %1926 = vmatprep.subr.bf16.mxu0 0
        %1927 = vmatpush1.bf16.msra.mxu0 0
        %1928 = vmatprep.subr.bf16.mxu0 0
        %1929 = vmatpush1.bf16.msra.mxu0 0
        %1930 = vmatprep.subr.bf16.mxu0 0
        %1931 = vmatpush1.bf16.msra.mxu0 0
        %1932 = vmatprep.subr.bf16.mxu0 0
        %1933 = vmatpush1.bf16.msra.mxu0 0
        %1934 = vmatprep.subr.bf16.mxu0 0
        %1935 = vmatpush1.bf16.msra.mxu0 0
        %1936 = vmatprep.subr.bf16.mxu0 0
        %1937 = vmatpush1.bf16.msra.mxu0 0
        %1938 = vmatprep.subr.bf16.mxu0 0
        %1939 = vmatpush1.bf16.msra.mxu0 0
        %1940 = vmatprep.subr.bf16.mxu0 0
        %1941 = vmatpush1.bf16.msra.mxu0 %v1924
        %1942 = vmatprep.subr.bf16.mxu0 0
        %1943 = vmatpush2.bf16.msra.mxu0 0
        %1944 = vmatprep.subr.bf16.mxu0 0
        %1945 = vmatpush2.bf16.msra.mxu0 0
        %1946 = vmatprep.subr.bf16.mxu0 0
        %1947 = vmatpush2.bf16.msra.mxu0 0
        %1948 = vmatprep.subr.bf16.mxu0 0
        %1949 = vmatpush2.bf16.msra.mxu0 0
        %1950 = vmatprep.subr.bf16.mxu0 0
        %1951 = vmatpush2.bf16.msra.mxu0 0
        %1952 = vmatprep.subr.bf16.mxu0 0
        %1953 = vmatpush2.bf16.msra.mxu0 0
        %1954 = vmatprep.subr.bf16.mxu0 0
        %1955 = vmatpush2.bf16.msra.mxu0 0
        %1956 = vmatprep.subr.bf16.mxu0 0
        %1957 = vmatpush2.bf16.msra.mxu0 0
        %1958 = vmatprep.mubr.bf16.mxu0 0
        %1959 = vmatmul.mubr.bf16.gmra.mxu0 %v1921
        %v1960 = vpop.f32.mrf.mxu0
        %v1961 = vadd.f32 0.0, %v1960
        %v1962 = vpop.f32.mrf.mxu0
        %v1963 = vpop.f32.mrf.mxu0
        %v1964 = vpop.f32.mrf.mxu0
        %1965 = vdwg.mxu0
        %v1966 = vrcp.pop %v1918
        %v1967 = vmul.f32 %v1961, %v1966
        %v1968 = vpack.c.bf16 %v1967, %v1967
        %v1970 = vunpack.c.l.b16 %v1968
        %v1971 = vpack.c.b16 %v1970, %v1970
        %1972 = vrot.lane.b32.xlu0 %v1971, 96
        %v1973 = vpop.permute.xlu0 %1972
        %vm1975 = vcmask 1044224
        %1976 = vst.msk [vmem:[#allocation4] sm:$0xf] %vm1975, %v1973
        %v1977 = vpack.c.bf16 %v1498, %v1498
        %s1978 = scalar_lea.vmem [#allocation2], 16
        %v1979 = vld [vmem:[%s1978] sm:$0xf]
        %s1980 = scalar_lea.vmem [#allocation3], 16
        %v1981 = vld [vmem:[%s1980] sm:$0xf]
        %v1983 = vsel %vm1509, %v1977, 0
        %v1986 = vsel %vm1509, %v1979, 0
        %1988 = vmatprep.subr.bf16.mxu0 0
        %1989 = vmatpush1.bf16.xpose.msra.mxu0 0
        %1990 = vmatprep.subr.bf16.mxu0 0
        %1991 = vmatpush1.bf16.xpose.msra.mxu0 0
        %1992 = vmatprep.subr.bf16.mxu0 0
        %1993 = vmatpush1.bf16.xpose.msra.mxu0 0
        %1994 = vmatprep.subr.bf16.mxu0 0
        %1995 = vmatpush1.bf16.xpose.msra.mxu0 0
        %1996 = vmatprep.subr.bf16.mxu0 0
        %1997 = vmatpush1.bf16.xpose.msra.mxu0 0
        %1998 = vmatprep.subr.bf16.mxu0 0
        %1999 = vmatpush1.bf16.xpose.msra.mxu0 0
        %2000 = vmatprep.subr.bf16.mxu0 0
        %2001 = vmatpush1.bf16.xpose.msra.mxu0 0
        %2002 = vmatprep.subr.bf16.mxu0 0
        %2003 = vmatpush1.bf16.xpose.msra.mxu0 %v1986
        %2004 = vmatprep.subr.bf16.mxu0 0
        %2005 = vmatpush2.bf16.xpose.msra.mxu0 0
        %2006 = vmatprep.subr.bf16.mxu0 0
        %2007 = vmatpush2.bf16.xpose.msra.mxu0 0
        %2008 = vmatprep.subr.bf16.mxu0 0
        %2009 = vmatpush2.bf16.xpose.msra.mxu0 0
        %2010 = vmatprep.subr.bf16.mxu0 0
        %2011 = vmatpush2.bf16.xpose.msra.mxu0 0
        %2012 = vmatprep.subr.bf16.mxu0 0
        %2013 = vmatpush2.bf16.xpose.msra.mxu0 0
        %2014 = vmatprep.subr.bf16.mxu0 0
        %2015 = vmatpush2.bf16.xpose.msra.mxu0 0
        %2016 = vmatprep.subr.bf16.mxu0 0
        %2017 = vmatpush2.bf16.xpose.msra.mxu0 0
        %2018 = vmatprep.subr.bf16.mxu0 0
        %2019 = vmatpush2.bf16.xpose.msra.mxu0 0
        %2020 = vmatprep.mubr.bf16.mxu0 0
        %2021 = vmatmul.mubr.bf16.gmra.mxu0 %v1983
        %v2022 = vpop.f32.mrf.mxu0
        %v2023 = vadd.f32 %v1507, %v2022
        %v2024 = vpop.f32.mrf.mxu0
        %v2025 = vpop.f32.mrf.mxu0
        %v2026 = vpop.f32.mrf.mxu0
        %2027 = vdwg.mxu0
        %v2028 = vsel %vm1556, %v2023, -inf
        %2029 = vmax.xlane.f32.xlu0 %v2028
        %v2030 = vpop.xlane.xlu0 %2029
        %v2031 = vsub.f32 %v2023, %v2030
        %v2032 = vmul.f32 %v2031, 1.442695
        %v2033 = vpow.pop %v2032
        %v2034 = vsel %vm1556, %v2033, 0.0
        %2035 = vadd.xlane.f32.xlu0 %v2034
        %v2036 = vpop.xlane.xlu0 %2035
        %v2037 = vpack.c.bf16 %v2033, %v2033
        %v2039 = vsel %vm1556, %v2037, 0
        %v2042 = vsel %vm1570, %v1981, 0
        %2044 = vmatprep.subr.bf16.mxu0 0
        %2045 = vmatpush1.bf16.msra.mxu0 0
        %2046 = vmatprep.subr.bf16.mxu0 0
        %2047 = vmatpush1.bf16.msra.mxu0 0
        %2048 = vmatprep.subr.bf16.mxu0 0
        %2049 = vmatpush1.bf16.msra.mxu0 0
        %2050 = vmatprep.subr.bf16.mxu0 0
        %2051 = vmatpush1.bf16.msra.mxu0 0
        %2052 = vmatprep.subr.bf16.mxu0 0
        %2053 = vmatpush1.bf16.msra.mxu0 0
        %2054 = vmatprep.subr.bf16.mxu0 0
        %2055 = vmatpush1.bf16.msra.mxu0 0
        %2056 = vmatprep.subr.bf16.mxu0 0
        %2057 = vmatpush1.bf16.msra.mxu0 0
        %2058 = vmatprep.subr.bf16.mxu0 0
        %2059 = vmatpush1.bf16.msra.mxu0 %v2042
        %2060 = vmatprep.subr.bf16.mxu0 0
        %2061 = vmatpush2.bf16.msra.mxu0 0
        %2062 = vmatprep.subr.bf16.mxu0 0
        %2063 = vmatpush2.bf16.msra.mxu0 0
        %2064 = vmatprep.subr.bf16.mxu0 0
        %2065 = vmatpush2.bf16.msra.mxu0 0
        %2066 = vmatprep.subr.bf16.mxu0 0
        %2067 = vmatpush2.bf16.msra.mxu0 0
        %2068 = vmatprep.subr.bf16.mxu0 0
        %2069 = vmatpush2.bf16.msra.mxu0 0
        %2070 = vmatprep.subr.bf16.mxu0 0
        %2071 = vmatpush2.bf16.msra.mxu0 0
        %2072 = vmatprep.subr.bf16.mxu0 0
        %2073 = vmatpush2.bf16.msra.mxu0 0
        %2074 = vmatprep.subr.bf16.mxu0 0
        %2075 = vmatpush2.bf16.msra.mxu0 0
        %2076 = vmatprep.mubr.bf16.mxu0 0
        %2077 = vmatmul.mubr.bf16.gmra.mxu0 %v2039
        %v2078 = vpop.f32.mrf.mxu0
        %v2079 = vadd.f32 0.0, %v2078
        %v2080 = vpop.f32.mrf.mxu0
        %v2081 = vpop.f32.mrf.mxu0
        %v2082 = vpop.f32.mrf.mxu0
        %2083 = vdwg.mxu0
        %v2084 = vrcp.pop %v2036
        %v2085 = vmul.f32 %v2079, %v2084
        %v2086 = vpack.c.bf16 %v2085, %v2085
        %2087 = vst.msk [vmem:[#allocation4 + $0x4] sm:$0xf] %vm1617, %v2086
        %s2088 = scalar_lea.vmem [#allocation2], 20
        %v2089 = vld [vmem:[%s2088] sm:$0xf]
        %s2090 = scalar_lea.vmem [#allocation3], 20
        %v2091 = vld [vmem:[%s2090] sm:$0xf]
        %2093 = vrot.lane.b32.xlu0 %v1977, 96
        %v2094 = vpop.permute.xlu0 %2093
        %v2096 = vsel %vm1509, %v2094, 0
        %v2099 = vsel %vm1509, %v2089, 0
        %2101 = vmatprep.subr.bf16.mxu0 0
        %2102 = vmatpush1.bf16.xpose.msra.mxu0 0
        %2103 = vmatprep.subr.bf16.mxu0 0
        %2104 = vmatpush1.bf16.xpose.msra.mxu0 0
        %2105 = vmatprep.subr.bf16.mxu0 0
        %2106 = vmatpush1.bf16.xpose.msra.mxu0 0
        %2107 = vmatprep.subr.bf16.mxu0 0
        %2108 = vmatpush1.bf16.xpose.msra.mxu0 0
        %2109 = vmatprep.subr.bf16.mxu0 0
        %2110 = vmatpush1.bf16.xpose.msra.mxu0 0
        %2111 = vmatprep.subr.bf16.mxu0 0
        %2112 = vmatpush1.bf16.xpose.msra.mxu0 0
        %2113 = vmatprep.subr.bf16.mxu0 0
        %2114 = vmatpush1.bf16.xpose.msra.mxu0 0
        %2115 = vmatprep.subr.bf16.mxu0 0
        %2116 = vmatpush1.bf16.xpose.msra.mxu0 %v2099
        %2117 = vmatprep.subr.bf16.mxu0 0
        %2118 = vmatpush2.bf16.xpose.msra.mxu0 0
        %2119 = vmatprep.subr.bf16.mxu0 0
        %2120 = vmatpush2.bf16.xpose.msra.mxu0 0
        %2121 = vmatprep.subr.bf16.mxu0 0
        %2122 = vmatpush2.bf16.xpose.msra.mxu0 0
        %2123 = vmatprep.subr.bf16.mxu0 0
        %2124 = vmatpush2.bf16.xpose.msra.mxu0 0
        %2125 = vmatprep.subr.bf16.mxu0 0
        %2126 = vmatpush2.bf16.xpose.msra.mxu0 0
        %2127 = vmatprep.subr.bf16.mxu0 0
        %2128 = vmatpush2.bf16.xpose.msra.mxu0 0
        %2129 = vmatprep.subr.bf16.mxu0 0
        %2130 = vmatpush2.bf16.xpose.msra.mxu0 0
        %2131 = vmatprep.subr.bf16.mxu0 0
        %2132 = vmatpush2.bf16.xpose.msra.mxu0 0
        %2133 = vmatprep.mubr.bf16.mxu0 0
        %2134 = vmatmul.mubr.bf16.gmra.mxu0 %v2096
        %v2135 = vpop.f32.mrf.mxu0
        %v2136 = vadd.f32 %v1507, %v2135
        %v2137 = vpop.f32.mrf.mxu0
        %v2138 = vpop.f32.mrf.mxu0
        %v2139 = vpop.f32.mrf.mxu0
        %2140 = vdwg.mxu0
        %v2141 = vsel %vm1556, %v2136, -inf
        %2142 = vmax.xlane.f32.xlu0 %v2141
        %v2143 = vpop.xlane.xlu0 %2142
        %v2144 = vsub.f32 %v2136, %v2143
        %v2145 = vmul.f32 %v2144, 1.442695
        %v2146 = vpow.pop %v2145
        %v2147 = vsel %vm1556, %v2146, 0.0
        %2148 = vadd.xlane.f32.xlu0 %v2147
        %v2149 = vpop.xlane.xlu0 %2148
        %v2150 = vpack.c.bf16 %v2146, %v2146
        %v2152 = vsel %vm1556, %v2150, 0
        %v2155 = vsel %vm1570, %v2091, 0
        %2157 = vmatprep.subr.bf16.mxu0 0
        %2158 = vmatpush1.bf16.msra.mxu0 0
        %2159 = vmatprep.subr.bf16.mxu0 0
        %2160 = vmatpush1.bf16.msra.mxu0 0
        %2161 = vmatprep.subr.bf16.mxu0 0
        %2162 = vmatpush1.bf16.msra.mxu0 0
        %2163 = vmatprep.subr.bf16.mxu0 0
        %2164 = vmatpush1.bf16.msra.mxu0 0
        %2165 = vmatprep.subr.bf16.mxu0 0
        %2166 = vmatpush1.bf16.msra.mxu0 0
        %2167 = vmatprep.subr.bf16.mxu0 0
        %2168 = vmatpush1.bf16.msra.mxu0 0
        %2169 = vmatprep.subr.bf16.mxu0 0
        %2170 = vmatpush1.bf16.msra.mxu0 0
        %2171 = vmatprep.subr.bf16.mxu0 0
        %2172 = vmatpush1.bf16.msra.mxu0 %v2155
        %2173 = vmatprep.subr.bf16.mxu0 0
        %2174 = vmatpush2.bf16.msra.mxu0 0
        %2175 = vmatprep.subr.bf16.mxu0 0
        %2176 = vmatpush2.bf16.msra.mxu0 0
        %2177 = vmatprep.subr.bf16.mxu0 0
        %2178 = vmatpush2.bf16.msra.mxu0 0
        %2179 = vmatprep.subr.bf16.mxu0 0
        %2180 = vmatpush2.bf16.msra.mxu0 0
        %2181 = vmatprep.subr.bf16.mxu0 0
        %2182 = vmatpush2.bf16.msra.mxu0 0
        %2183 = vmatprep.subr.bf16.mxu0 0
        %2184 = vmatpush2.bf16.msra.mxu0 0
        %2185 = vmatprep.subr.bf16.mxu0 0
        %2186 = vmatpush2.bf16.msra.mxu0 0
        %2187 = vmatprep.subr.bf16.mxu0 0
        %2188 = vmatpush2.bf16.msra.mxu0 0
        %2189 = vmatprep.mubr.bf16.mxu0 0
        %2190 = vmatmul.mubr.bf16.gmra.mxu0 %v2152
        %v2191 = vpop.f32.mrf.mxu0
        %v2192 = vadd.f32 0.0, %v2191
        %v2193 = vpop.f32.mrf.mxu0
        %v2194 = vpop.f32.mrf.mxu0
        %v2195 = vpop.f32.mrf.mxu0
        %2196 = vdwg.mxu0
        %v2197 = vrcp.pop %v2149
        %v2198 = vmul.f32 %v2192, %v2197
        %v2199 = vpack.c.bf16 %v2198, %v2198
        %v2201 = vunpack.c.l.b16 %v2199
        %v2202 = vpack.c.b16 %v2201, %v2201
        %2203 = vrot.lane.b32.xlu0 %v2202, 32
        %v2204 = vpop.permute.xlu0 %2203
        %2206 = vst.msk [vmem:[#allocation4 + $0x4] sm:$0xf] %vm1737, %v2204
        %s2207 = scalar_lea.vmem [#allocation2], 24
        %v2208 = vld [vmem:[%s2207] sm:$0xf]
        %s2209 = scalar_lea.vmem [#allocation3], 24
        %v2210 = vld [vmem:[%s2209] sm:$0xf]
        %2211 = vrot.lane.b32.xlu0 %v1977, 64
        %v2212 = vpop.permute.xlu0 %2211
        %v2214 = vsel %vm1509, %v2212, 0
        %v2217 = vsel %vm1509, %v2208, 0
        %2219 = vmatprep.subr.bf16.mxu0 0
        %2220 = vmatpush1.bf16.xpose.msra.mxu0 0
        %2221 = vmatprep.subr.bf16.mxu0 0
        %2222 = vmatpush1.bf16.xpose.msra.mxu0 0
        %2223 = vmatprep.subr.bf16.mxu0 0
        %2224 = vmatpush1.bf16.xpose.msra.mxu0 0
        %2225 = vmatprep.subr.bf16.mxu0 0
        %2226 = vmatpush1.bf16.xpose.msra.mxu0 0
        %2227 = vmatprep.subr.bf16.mxu0 0
        %2228 = vmatpush1.bf16.xpose.msra.mxu0 0
        %2229 = vmatprep.subr.bf16.mxu0 0
        %2230 = vmatpush1.bf16.xpose.msra.mxu0 0
        %2231 = vmatprep.subr.bf16.mxu0 0
        %2232 = vmatpush1.bf16.xpose.msra.mxu0 0
        %2233 = vmatprep.subr.bf16.mxu0 0
        %2234 = vmatpush1.bf16.xpose.msra.mxu0 %v2217
        %2235 = vmatprep.subr.bf16.mxu0 0
        %2236 = vmatpush2.bf16.xpose.msra.mxu0 0
        %2237 = vmatprep.subr.bf16.mxu0 0
        %2238 = vmatpush2.bf16.xpose.msra.mxu0 0
        %2239 = vmatprep.subr.bf16.mxu0 0
        %2240 = vmatpush2.bf16.xpose.msra.mxu0 0
        %2241 = vmatprep.subr.bf16.mxu0 0
        %2242 = vmatpush2.bf16.xpose.msra.mxu0 0
        %2243 = vmatprep.subr.bf16.mxu0 0
        %2244 = vmatpush2.bf16.xpose.msra.mxu0 0
        %2245 = vmatprep.subr.bf16.mxu0 0
        %2246 = vmatpush2.bf16.xpose.msra.mxu0 0
        %2247 = vmatprep.subr.bf16.mxu0 0
        %2248 = vmatpush2.bf16.xpose.msra.mxu0 0
        %2249 = vmatprep.subr.bf16.mxu0 0
        %2250 = vmatpush2.bf16.xpose.msra.mxu0 0
        %2251 = vmatprep.mubr.bf16.mxu0 0
        %2252 = vmatmul.mubr.bf16.gmra.mxu0 %v2214
        %v2253 = vpop.f32.mrf.mxu0
        %v2254 = vadd.f32 %v1507, %v2253
        %v2255 = vpop.f32.mrf.mxu0
        %v2256 = vpop.f32.mrf.mxu0
        %v2257 = vpop.f32.mrf.mxu0
        %2258 = vdwg.mxu0
        %v2259 = vsel %vm1556, %v2254, -inf
        %2260 = vmax.xlane.f32.xlu0 %v2259
        %v2261 = vpop.xlane.xlu0 %2260
        %v2262 = vsub.f32 %v2254, %v2261
        %v2263 = vmul.f32 %v2262, 1.442695
        %v2264 = vpow.pop %v2263
        %v2265 = vsel %vm1556, %v2264, 0.0
        %2266 = vadd.xlane.f32.xlu0 %v2265
        %v2267 = vpop.xlane.xlu0 %2266
        %v2268 = vpack.c.bf16 %v2264, %v2264
        %v2270 = vsel %vm1556, %v2268, 0
        %v2273 = vsel %vm1570, %v2210, 0
        %2275 = vmatprep.subr.bf16.mxu0 0
        %2276 = vmatpush1.bf16.msra.mxu0 0
        %2277 = vmatprep.subr.bf16.mxu0 0
        %2278 = vmatpush1.bf16.msra.mxu0 0
        %2279 = vmatprep.subr.bf16.mxu0 0
        %2280 = vmatpush1.bf16.msra.mxu0 0
        %2281 = vmatprep.subr.bf16.mxu0 0
        %2282 = vmatpush1.bf16.msra.mxu0 0
        %2283 = vmatprep.subr.bf16.mxu0 0
        %2284 = vmatpush1.bf16.msra.mxu0 0
        %2285 = vmatprep.subr.bf16.mxu0 0
        %2286 = vmatpush1.bf16.msra.mxu0 0
        %2287 = vmatprep.subr.bf16.mxu0 0
        %2288 = vmatpush1.bf16.msra.mxu0 0
        %2289 = vmatprep.subr.bf16.mxu0 0
        %2290 = vmatpush1.bf16.msra.mxu0 %v2273
        %2291 = vmatprep.subr.bf16.mxu0 0
        %2292 = vmatpush2.bf16.msra.mxu0 0
        %2293 = vmatprep.subr.bf16.mxu0 0
        %2294 = vmatpush2.bf16.msra.mxu0 0
        %2295 = vmatprep.subr.bf16.mxu0 0
        %2296 = vmatpush2.bf16.msra.mxu0 0
        %2297 = vmatprep.subr.bf16.mxu0 0
        %2298 = vmatpush2.bf16.msra.mxu0 0
        %2299 = vmatprep.subr.bf16.mxu0 0
        %2300 = vmatpush2.bf16.msra.mxu0 0
        %2301 = vmatprep.subr.bf16.mxu0 0
        %2302 = vmatpush2.bf16.msra.mxu0 0
        %2303 = vmatprep.subr.bf16.mxu0 0
        %2304 = vmatpush2.bf16.msra.mxu0 0
        %2305 = vmatprep.subr.bf16.mxu0 0
        %2306 = vmatpush2.bf16.msra.mxu0 0
        %2307 = vmatprep.mubr.bf16.mxu0 0
        %2308 = vmatmul.mubr.bf16.gmra.mxu0 %v2270
        %v2309 = vpop.f32.mrf.mxu0
        %v2310 = vadd.f32 0.0, %v2309
        %v2311 = vpop.f32.mrf.mxu0
        %v2312 = vpop.f32.mrf.mxu0
        %v2313 = vpop.f32.mrf.mxu0
        %2314 = vdwg.mxu0
        %v2315 = vrcp.pop %v2267
        %v2316 = vmul.f32 %v2310, %v2315
        %v2317 = vpack.c.bf16 %v2316, %v2316
        %v2319 = vunpack.c.l.b16 %v2317
        %v2320 = vpack.c.b16 %v2319, %v2319
        %2321 = vrot.lane.b32.xlu0 %v2320, 64
        %v2322 = vpop.permute.xlu0 %2321
        %2324 = vst.msk [vmem:[#allocation4 + $0x4] sm:$0xf] %vm1856, %v2322
        %s2325 = scalar_lea.vmem [#allocation2], 28
        %v2326 = vld [vmem:[%s2325] sm:$0xf]
        %s2327 = scalar_lea.vmem [#allocation3], 28
        %v2328 = vld [vmem:[%s2327] sm:$0xf]
        %2329 = vrot.lane.b32.xlu0 %v1977, 32
        %v2330 = vpop.permute.xlu0 %2329
        %v2332 = vsel %vm1509, %v2330, 0
        %v2335 = vsel %vm1509, %v2326, 0
        %2337 = vmatprep.subr.bf16.mxu0 0
        %2338 = vmatpush1.bf16.xpose.msra.mxu0 0
        %2339 = vmatprep.subr.bf16.mxu0 0
        %2340 = vmatpush1.bf16.xpose.msra.mxu0 0
        %2341 = vmatprep.subr.bf16.mxu0 0
        %2342 = vmatpush1.bf16.xpose.msra.mxu0 0
        %2343 = vmatprep.subr.bf16.mxu0 0
        %2344 = vmatpush1.bf16.xpose.msra.mxu0 0
        %2345 = vmatprep.subr.bf16.mxu0 0
        %2346 = vmatpush1.bf16.xpose.msra.mxu0 0
        %2347 = vmatprep.subr.bf16.mxu0 0
        %2348 = vmatpush1.bf16.xpose.msra.mxu0 0
        %2349 = vmatprep.subr.bf16.mxu0 0
        %2350 = vmatpush1.bf16.xpose.msra.mxu0 0
        %2351 = vmatprep.subr.bf16.mxu0 0
        %2352 = vmatpush1.bf16.xpose.msra.mxu0 %v2335
        %2353 = vmatprep.subr.bf16.mxu0 0
        %2354 = vmatpush2.bf16.xpose.msra.mxu0 0
        %2355 = vmatprep.subr.bf16.mxu0 0
        %2356 = vmatpush2.bf16.xpose.msra.mxu0 0
        %2357 = vmatprep.subr.bf16.mxu0 0
        %2358 = vmatpush2.bf16.xpose.msra.mxu0 0
        %2359 = vmatprep.subr.bf16.mxu0 0
        %2360 = vmatpush2.bf16.xpose.msra.mxu0 0
        %2361 = vmatprep.subr.bf16.mxu0 0
        %2362 = vmatpush2.bf16.xpose.msra.mxu0 0
        %2363 = vmatprep.subr.bf16.mxu0 0
        %2364 = vmatpush2.bf16.xpose.msra.mxu0 0
        %2365 = vmatprep.subr.bf16.mxu0 0
        %2366 = vmatpush2.bf16.xpose.msra.mxu0 0
        %2367 = vmatprep.subr.bf16.mxu0 0
        %2368 = vmatpush2.bf16.xpose.msra.mxu0 0
        %2369 = vmatprep.mubr.bf16.mxu0 0
        %2370 = vmatmul.mubr.bf16.gmra.mxu0 %v2332
        %v2371 = vpop.f32.mrf.mxu0
        %v2372 = vadd.f32 %v1507, %v2371
        %v2373 = vpop.f32.mrf.mxu0
        %v2374 = vpop.f32.mrf.mxu0
        %v2375 = vpop.f32.mrf.mxu0
        %2376 = vdwg.mxu0
        %v2377 = vsel %vm1556, %v2372, -inf
        %2378 = vmax.xlane.f32.xlu0 %v2377
        %v2379 = vpop.xlane.xlu0 %2378
        %v2380 = vsub.f32 %v2372, %v2379
        %v2381 = vmul.f32 %v2380, 1.442695
        %v2382 = vpow.pop %v2381
        %v2383 = vsel %vm1556, %v2382, 0.0
        %2384 = vadd.xlane.f32.xlu0 %v2383
        %v2385 = vpop.xlane.xlu0 %2384
        %v2386 = vpack.c.bf16 %v2382, %v2382
        %v2388 = vsel %vm1556, %v2386, 0
        %v2391 = vsel %vm1570, %v2328, 0
        %2393 = vmatprep.subr.bf16.mxu0 0
        %2394 = vmatpush1.bf16.msra.mxu0 0
        %2395 = vmatprep.subr.bf16.mxu0 0
        %2396 = vmatpush1.bf16.msra.mxu0 0
        %2397 = vmatprep.subr.bf16.mxu0 0
        %2398 = vmatpush1.bf16.msra.mxu0 0
        %2399 = vmatprep.subr.bf16.mxu0 0
        %2400 = vmatpush1.bf16.msra.mxu0 0
        %2401 = vmatprep.subr.bf16.mxu0 0
        %2402 = vmatpush1.bf16.msra.mxu0 0
        %2403 = vmatprep.subr.bf16.mxu0 0
        %2404 = vmatpush1.bf16.msra.mxu0 0
        %2405 = vmatprep.subr.bf16.mxu0 0
        %2406 = vmatpush1.bf16.msra.mxu0 0
        %2407 = vmatprep.subr.bf16.mxu0 0
        %2408 = vmatpush1.bf16.msra.mxu0 %v2391
        %2409 = vmatprep.subr.bf16.mxu0 0
        %2410 = vmatpush2.bf16.msra.mxu0 0
        %2411 = vmatprep.subr.bf16.mxu0 0
        %2412 = vmatpush2.bf16.msra.mxu0 0
        %2413 = vmatprep.subr.bf16.mxu0 0
        %2414 = vmatpush2.bf16.msra.mxu0 0
        %2415 = vmatprep.subr.bf16.mxu0 0
        %2416 = vmatpush2.bf16.msra.mxu0 0
        %2417 = vmatprep.subr.bf16.mxu0 0
        %2418 = vmatpush2.bf16.msra.mxu0 0
        %2419 = vmatprep.subr.bf16.mxu0 0
        %2420 = vmatpush2.bf16.msra.mxu0 0
        %2421 = vmatprep.subr.bf16.mxu0 0
        %2422 = vmatpush2.bf16.msra.mxu0 0
        %2423 = vmatprep.subr.bf16.mxu0 0
        %2424 = vmatpush2.bf16.msra.mxu0 0
        %2425 = vmatprep.mubr.bf16.mxu0 0
        %2426 = vmatmul.mubr.bf16.gmra.mxu0 %v2388
        %v2427 = vpop.f32.mrf.mxu0
        %v2428 = vadd.f32 0.0, %v2427
        %v2429 = vpop.f32.mrf.mxu0
        %v2430 = vpop.f32.mrf.mxu0
        %v2431 = vpop.f32.mrf.mxu0
        %2432 = vdwg.mxu0
        %v2433 = vrcp.pop %v2385
        %v2434 = vmul.f32 %v2428, %v2433
        %v2435 = vpack.c.bf16 %v2434, %v2434
        %v2437 = vunpack.c.l.b16 %v2435
        %v2438 = vpack.c.b16 %v2437, %v2437
        %2439 = vrot.lane.b32.xlu0 %v2438, 96
        %v2440 = vpop.permute.xlu0 %2439
        %2442 = vst.msk [vmem:[#allocation4 + $0x4] sm:$0xf] %vm1975, %v2440
        %v2443 = vld [vmem:[#allocation4] sm:$0xff]
        %v2444 = vld [vmem:[#allocation16] sm:$0xff]
        %v2445 = vld [vmem:[#allocation16 + $0x8] sm:$0xff]
        %v2446 = vld [vmem:[#allocation16 + $0x10] sm:$0xff]
        %v2447 = vld [vmem:[#allocation16 + $0x18] sm:$0xff]
        %v2448 = vld [vmem:[#allocation16 + $0x20] sm:$0xff]
        %v2449 = vld [vmem:[#allocation16 + $0x28] sm:$0xff]
        %v2450 = vld [vmem:[#allocation16 + $0x30] sm:$0xff]
        %v2451 = vld [vmem:[#allocation16 + $0x38] sm:$0xff]
        %v2452 = vld [vmem:[#allocation16 + $0x40] sm:$0xff]
        %v2453 = vld [vmem:[#allocation16 + $0x48] sm:$0xff]
        %v2454 = vld [vmem:[#allocation16 + $0x50] sm:$0xff]
        %v2455 = vld [vmem:[#allocation16 + $0x58] sm:$0xff]
        %v2456 = vld [vmem:[#allocation16 + $0x60] sm:$0xff]
        %v2457 = vld [vmem:[#allocation16 + $0x68] sm:$0xff]
        %v2458 = vld [vmem:[#allocation16 + $0x70] sm:$0xff]
        %v2459 = vld [vmem:[#allocation16 + $0x78] sm:$0xff]
        %v2460 = vld [vmem:[#allocation16 + $0x80] sm:$0xff]
        %v2461 = vld [vmem:[#allocation16 + $0x88] sm:$0xff]
        %v2462 = vld [vmem:[#allocation16 + $0x90] sm:$0xff]
        %v2463 = vld [vmem:[#allocation16 + $0x98] sm:$0xff]
        %v2464 = vld [vmem:[#allocation16 + $0xa0] sm:$0xff]
        %v2465 = vld [vmem:[#allocation16 + $0xa8] sm:$0xff]
        %v2466 = vld [vmem:[#allocation16 + $0xb0] sm:$0xff]
        %v2467 = vld [vmem:[#allocation16 + $0xb8] sm:$0xff]
        %v2468 = vld [vmem:[#allocation16 + $0xc0] sm:$0xff]
        %v2469 = vld [vmem:[#allocation16 + $0xc8] sm:$0xff]
        %v2470 = vld [vmem:[#allocation16 + $0xd0] sm:$0xff]
        %v2471 = vld [vmem:[#allocation16 + $0xd8] sm:$0xff]
        %v2472 = vld [vmem:[#allocation16 + $0xe0] sm:$0xff]
        %v2473 = vld [vmem:[#allocation16 + $0xe8] sm:$0xff]
        %v2474 = vld [vmem:[#allocation16 + $0xf0] sm:$0xff]
        %v2475 = vld [vmem:[#allocation16 + $0xf8] sm:$0xff]
        %v2476 = vld [vmem:[%s11] sm:$0x3]
        %v2478 = vlaneseq
        %v2479 = vshrl.u32 %v2478, 7
        %v2480 = vsub.s32 0, %v2479
        %v2481 = vrot.slane %v2476, %v2480
        %v2482 = vlaneseq
        %v2483 = vshrl.u32 %v2482, 7
        %v2484 = vsub.s32 1, %v2483
        %v2485 = vrot.slane %v2476, %v2484
        %v2489 = vunpack.c.l.b16 %v2443
        %v2490 = vunpack.c.h.b16 %v2443
        %v2491 = vpack.c.b16 %v2489, %v2489
        %v2492 = vpack.c.b16 %v2490, %v2490
        %v2527 = vunpack.c.l.b16 %v2444
        %v2528 = vunpack.c.h.b16 %v2444
        %v2529 = vunpack.c.l.b16 %v2445
        %v2530 = vunpack.c.h.b16 %v2445
        %v2531 = vunpack.c.l.b16 %v2446
        %v2532 = vunpack.c.h.b16 %v2446
        %v2533 = vunpack.c.l.b16 %v2447
        %v2534 = vunpack.c.h.b16 %v2447
        %v2535 = vunpack.c.l.b16 %v2448
        %v2536 = vunpack.c.h.b16 %v2448
        %v2537 = vunpack.c.l.b16 %v2449
        %v2538 = vunpack.c.h.b16 %v2449
        %v2539 = vunpack.c.l.b16 %v2450
        %v2540 = vunpack.c.h.b16 %v2450
        %v2541 = vunpack.c.l.b16 %v2451
        %v2542 = vunpack.c.h.b16 %v2451
        %v2543 = vunpack.c.l.b16 %v2452
        %v2544 = vunpack.c.h.b16 %v2452
        %v2545 = vunpack.c.l.b16 %v2453
        %v2546 = vunpack.c.h.b16 %v2453
        %v2547 = vunpack.c.l.b16 %v2454
        %v2548 = vunpack.c.h.b16 %v2454
        %v2549 = vunpack.c.l.b16 %v2455
        %v2550 = vunpack.c.h.b16 %v2455
        %v2551 = vunpack.c.l.b16 %v2456
        %v2552 = vunpack.c.h.b16 %v2456
        %v2553 = vunpack.c.l.b16 %v2457
        %v2554 = vunpack.c.h.b16 %v2457
        %v2555 = vunpack.c.l.b16 %v2458
        %v2556 = vunpack.c.h.b16 %v2458
        %v2557 = vunpack.c.l.b16 %v2459
        %v2558 = vunpack.c.h.b16 %v2459
        %v2559 = vunpack.c.l.b16 %v2460
        %v2560 = vunpack.c.h.b16 %v2460
        %v2561 = vunpack.c.l.b16 %v2461
        %v2562 = vunpack.c.h.b16 %v2461
        %v2563 = vunpack.c.l.b16 %v2462
        %v2564 = vunpack.c.h.b16 %v2462
        %v2565 = vunpack.c.l.b16 %v2463
        %v2566 = vunpack.c.h.b16 %v2463
        %v2567 = vunpack.c.l.b16 %v2464
        %v2568 = vunpack.c.h.b16 %v2464
        %v2569 = vunpack.c.l.b16 %v2465
        %v2570 = vunpack.c.h.b16 %v2465
        %v2571 = vunpack.c.l.b16 %v2466
        %v2572 = vunpack.c.h.b16 %v2466
        %v2573 = vunpack.c.l.b16 %v2467
        %v2574 = vunpack.c.h.b16 %v2467
        %v2575 = vunpack.c.l.b16 %v2468
        %v2576 = vunpack.c.h.b16 %v2468
        %v2577 = vunpack.c.l.b16 %v2469
        %v2578 = vunpack.c.h.b16 %v2469
        %v2579 = vunpack.c.l.b16 %v2470
        %v2580 = vunpack.c.h.b16 %v2470
        %v2581 = vunpack.c.l.b16 %v2471
        %v2582 = vunpack.c.h.b16 %v2471
        %v2583 = vunpack.c.l.b16 %v2472
        %v2584 = vunpack.c.h.b16 %v2472
        %v2585 = vunpack.c.l.b16 %v2473
        %v2586 = vunpack.c.h.b16 %v2473
        %v2587 = vunpack.c.l.b16 %v2474
        %v2588 = vunpack.c.h.b16 %v2474
        %v2589 = vunpack.c.l.b16 %v2475
        %v2590 = vunpack.c.h.b16 %v2475
        %v2591 = vpack.c.b16 %v2529, %v2527
        %v2592 = vpack.c.b16 %v2530, %v2528
        %v2593 = vpack.c.b16 %v2533, %v2531
        %v2594 = vpack.c.b16 %v2534, %v2532
        %v2595 = vpack.c.b16 %v2537, %v2535
        %v2596 = vpack.c.b16 %v2538, %v2536
        %v2597 = vpack.c.b16 %v2541, %v2539
        %v2598 = vpack.c.b16 %v2542, %v2540
        %v2599 = vpack.c.b16 %v2545, %v2543
        %v2600 = vpack.c.b16 %v2546, %v2544
        %v2601 = vpack.c.b16 %v2549, %v2547
        %v2602 = vpack.c.b16 %v2550, %v2548
        %v2603 = vpack.c.b16 %v2553, %v2551
        %v2604 = vpack.c.b16 %v2554, %v2552
        %v2605 = vpack.c.b16 %v2557, %v2555
        %v2606 = vpack.c.b16 %v2558, %v2556
        %v2607 = vpack.c.b16 %v2561, %v2559
        %v2608 = vpack.c.b16 %v2562, %v2560
        %v2609 = vpack.c.b16 %v2565, %v2563
        %v2610 = vpack.c.b16 %v2566, %v2564
        %v2611 = vpack.c.b16 %v2569, %v2567
        %v2612 = vpack.c.b16 %v2570, %v2568
        %v2613 = vpack.c.b16 %v2573, %v2571
        %v2614 = vpack.c.b16 %v2574, %v2572
        %v2615 = vpack.c.b16 %v2577, %v2575
        %v2616 = vpack.c.b16 %v2578, %v2576
        %v2617 = vpack.c.b16 %v2581, %v2579
        %v2618 = vpack.c.b16 %v2582, %v2580
        %v2619 = vpack.c.b16 %v2585, %v2583
        %v2620 = vpack.c.b16 %v2586, %v2584
        %v2621 = vpack.c.b16 %v2589, %v2587
        %v2622 = vpack.c.b16 %v2590, %v2588
        %2655 = vmatprep.subr.bf16.mxu0 %v2606
        %2656 = vmatpush1.bf16.msra.mxu0 %v2605
        %2657 = vmatprep.subr.bf16.mxu0 %v2604
        %2658 = vmatpush1.bf16.msra.mxu0 %v2603
        %2659 = vmatprep.subr.bf16.mxu0 %v2602
        %2660 = vmatpush1.bf16.msra.mxu0 %v2601
        %2661 = vmatprep.subr.bf16.mxu0 %v2600
        %2662 = vmatpush1.bf16.msra.mxu0 %v2599
        %2663 = vmatprep.subr.bf16.mxu0 %v2598
        %2664 = vmatpush1.bf16.msra.mxu0 %v2597
        %2665 = vmatprep.subr.bf16.mxu0 %v2596
        %2666 = vmatpush1.bf16.msra.mxu0 %v2595
        %2667 = vmatprep.subr.bf16.mxu0 %v2594
        %2668 = vmatpush1.bf16.msra.mxu0 %v2593
        %2669 = vmatprep.subr.bf16.mxu0 %v2592
        %2670 = vmatpush1.bf16.msra.mxu0 %v2591
        %2671 = vmatprep.subr.bf16.mxu0 %v2622
        %2672 = vmatpush2.bf16.msra.mxu0 %v2621
        %2673 = vmatprep.subr.bf16.mxu0 %v2620
        %2674 = vmatpush2.bf16.msra.mxu0 %v2619
        %2675 = vmatprep.subr.bf16.mxu0 %v2618
        %2676 = vmatpush2.bf16.msra.mxu0 %v2617
        %2677 = vmatprep.subr.bf16.mxu0 %v2616
        %2678 = vmatpush2.bf16.msra.mxu0 %v2615
        %2679 = vmatprep.subr.bf16.mxu0 %v2614
        %2680 = vmatpush2.bf16.msra.mxu0 %v2613
        %2681 = vmatprep.subr.bf16.mxu0 %v2612
        %2682 = vmatpush2.bf16.msra.mxu0 %v2611
        %2683 = vmatprep.subr.bf16.mxu0 %v2610
        %2684 = vmatpush2.bf16.msra.mxu0 %v2609
        %2685 = vmatprep.subr.bf16.mxu0 %v2608
        %2686 = vmatpush2.bf16.msra.mxu0 %v2607
        %2687 = vmatprep.mubr.bf16.mxu0 %v2492
        %2688 = vmatmul.mubr.bf16.gmra.mxu0 %v2491
        %v2689 = vpop.f32.mrf.mxu0
        %v2690 = vadd.f32 %v2481, %v2689
        %v2691 = vpop.f32.mrf.mxu0
        %v2692 = vadd.f32 %v2485, %v2691
        %v2693 = vpop.f32.mrf.mxu0
        %v2694 = vpop.f32.mrf.mxu0
        %2695 = vdwg.mxu0
        %v2696 = vld [vmem:[%s570] sm:$0xff]
        %v2697 = vld [vmem:[%s570 + $0x8] sm:$0xff]
        %v2698 = vadd.f32 %v2690, %v2696
        %v2699 = vadd.f32 %v2692, %v2697
        %v2700 = vadd.f32 %v2698, %v2699
        %2701 = vadd.xlane.f32.xlu0 %v2700
        %v2702 = vpop.xlane.xlu0 %2701
        %v2703 = vrcp.pop 256.0
        %v2704 = vmul.f32 %v2702, %v2703
        %v2705 = vsub.f32 %v2698, %v2704
        %v2706 = vsub.f32 %v2699, %v2704
        %v2707 = vmul.f32 %v2705, %v2705
        %v2708 = vmul.f32 %v2706, %v2706
        %v2709 = vadd.f32 %v2707, %v2708
        %2710 = vadd.xlane.f32.xlu0 %v2709
        %v2711 = vpop.xlane.xlu0 %2710
        %v2712 = vmul.f32 %v2711, %v2703
        %v2713 = vadd.f32 %v2712, 1e-05
        %v2714 = vrsqrt.pop %v2713
        %v2715 = vmul.f32 %v2705, %v2714
        %v2716 = vmul.f32 %v2706, %v2714
        %v2717 = vld [vmem:[%s12] sm:$0x3]
        %v2719 = vlaneseq
        %v2720 = vshrl.u32 %v2719, 7
        %v2721 = vsub.s32 0, %v2720
        %v2722 = vrot.slane %v2717, %v2721
        %v2723 = vlaneseq
        %v2724 = vshrl.u32 %v2723, 7
        %v2725 = vsub.s32 1, %v2724
        %v2726 = vrot.slane %v2717, %v2725
        %v2729 = vmul.f32 %v2715, %v2722
        %v2730 = vmul.f32 %v2716, %v2726
        %v2731 = vld [vmem:[%s13] sm:$0x3]
        %v2733 = vlaneseq
        %v2734 = vshrl.u32 %v2733, 7
        %v2735 = vsub.s32 0, %v2734
        %v2736 = vrot.slane %v2731, %v2735
        %v2737 = vlaneseq
        %v2738 = vshrl.u32 %v2737, 7
        %v2739 = vsub.s32 1, %v2738
        %v2740 = vrot.slane %v2731, %v2739
        %v2743 = vadd.f32 %v2729, %v2736
        %v2744 = vadd.f32 %v2730, %v2740
        %2745 = vst [vmem:[%s643] sm:$0xff] %v2743
        %2746 = vst [vmem:[%s643 + $0x8] sm:$0xff] %v2744
        %s2747 = sand.u32 %s374, 1
        %s2748 = scalar_lea.sflag [#allocation7], %s2747
        %s2749 = sand.u32 %s374, 1
        %s2750 = smul.addr %s2749, 16
        %s2751 = scalar_lea.vmem [#allocation17], %s2750
        // Predicated region
        $region109: #{tpu_custom_call.1} parent=75 // pred_check
          %p2752 = pneg %p384
        $region110: #{tpu_custom_call.1} parent=75 // pred_check_branch
          %2754 = sbr.rel (%p2752) target = $region112
        $region111: #{tpu_custom_call.1} parent=75 // pred_region
          %s2756 = ssub.s32 256, 256
          %2757 = vsyncadd %s2748, %s2756
          %s2758 = smul.addr %s41, 2
          %s2759 = smul.addr %s40, 2
          %s2760 = sadd.s32 %s2758, %s2759
          %s2761 = smul.addr %s2760, 128
          %s2762 = scalar_lea.hbm %s14, %s2761
          %s2764 = sshll.u32 %s2751, 4
          %s2765 = int_to_ptr.vmem [resolvable:$true] %s2764
          %2767 = dma.vmem_to_hbm [thread:$0]  %s2765, 256, %s2762, %s2748
        $region112: #{tpu_custom_call.1} parent=75 // pred_fallthru
          _
      $region76: #{tpu_custom_call.1} parent=5 // pred_fallthru
        _
      %p2768 = scmp.le.s32.totalorder 2, %s31
      // Predicated region
      $region113: #{tpu_custom_call.1} parent=5 // pred_check
        %p2769 = pneg %p2768
      $region114: #{tpu_custom_call.1} parent=5 // pred_check_branch
        %2771 = sbr.rel (%p2769) target = $region116
      $region115: #{tpu_custom_call.1} parent=5 // pred_region
        %s2772 = ssub.s32 %s31, 2
        // Predicated region
        $region117: #{tpu_custom_call.1} parent=115 // pred_check
          %p2773 = pneg %p390
        $region118: #{tpu_custom_call.1} parent=115 // pred_check_branch
          %2775 = sbr.rel (%p2773) target = $region120
        $region119: #{tpu_custom_call.1} parent=115 // pred_region
          %s2776 = sand.u32 %s375, 1
          %s2777 = scalar_lea.sflag [#allocation7], %s2776
          %s2778 = sand.u32 %s375, 1
          %s2779 = smul.addr %s2778, 16
          %s2780 = scalar_lea.vmem [#allocation17], %s2779
          %2781 = dma.done %s2777, 256
        $region120: #{tpu_custom_call.1} parent=115 // pred_fallthru
          _
      $region116: #{tpu_custom_call.1} parent=5 // pred_fallthru
        _
    $region6: #{tpu_custom_call.1} parent=1 // loop_footer
      %s35 = sadd.s32 1, %s31
    $region7: #{tpu_custom_call.1} parent=1 // loop_footer_branch
      %30 = sbr.rel target = $region3
    $region8: #{tpu_custom_call.1} parent=1 // loop_exit
      _
    %2782 = vsyncpa [#allocation6], 1
    %s2783 = scalar_lea.sflag [#allocation6], 1
    %2784 = vsyncpa %s2783, 1
    %2785 = vsyncpa [#allocation9], 1
    %s2786 = scalar_lea.sflag [#allocation9], 1
    %2787 = vsyncpa %s2786, 1
    %2788 = vsyncpa [#allocation12], 1
    %2789 = vsyncpa [#allocation15], 1
    %2790 = vsyncpa [#allocation7], 1
    %s2791 = scalar_lea.sflag [#allocation7], 1
    %2792 = vsyncpa %s2791, 1

</llo_original>
